<compile_context>
chip_gen: v7x
topology: tpu7x:2x2x1
jax: 0.10.0
libtpu: 0.0.40
codegen_flags: <defaults>
</compile_context>

<pallas_src>
import math

import jax
import jax.numpy as jnp
from jax.experimental import pallas as pl
from jax.experimental.pallas import tpu as pltpu


_LANE = 128
_SUB = 8


def _rup(x, m):
    return ((x + m - 1) // m) * m


def _sigmoid(x):
    # Exact logistic (keeps the 1e-4 test tolerance). exp(-x)->inf gives a benign exact 0.
    return 1.0 / (1.0 + jnp.exp(-x))


# ----------------------------------------------------------------------------
# Fused kernel: 3 encoders -> shared Linear (stacked) -> multi-layer LSTM with
# hoisted input projection -> fused decoders.  All activations stay in VMEM.
# ----------------------------------------------------------------------------
def _build_kernel(batch, n_layers, h_pad):
    def kernel(*refs):
        it = iter(refs)
        # ---- refs, in positional order: inputs, output, scratch --------------
        prop_ref, tac_ref, audio_ref, action_ref = (next(it) for _ in range(4))
        enc_w = [tuple(next(it) for _ in range(4)) for _ in range(3)]
        ws_lat_ref, ws_act_ref, bs_ref = (next(it) for _ in range(3))
        lstm_w = [tuple(next(it) for _ in range(3)) for _ in range(n_layers)]
        dw1_ref, db1_ref, dw2_ref, db2_ref = (next(it) for _ in range(4))
        out_ref = next(it)
        flat_ref = next(it)          # VMEM scratch [3B, Lp]

        states = (prop_ref[...], tac_ref[...], audio_ref[...])

        # ---- modality encoders: relu(fc2(relu(fc1(x)))) ----------------------
        enc = []
        for m in range(3):
            w1, b1, w2, b2 = (r[...] for r in enc_w[m])
            h = jnp.maximum(
                jnp.dot(states[m], w1, preferred_element_type=jnp.float32) + b1, 0.0)
            h = jnp.maximum(
                jnp.dot(h, w2, preferred_element_type=jnp.float32) + b2, 0.0)
            enc.append(h)

        # ---- shared_encoding Linear on cat([enc_m, action], dim=1), row-stacked
        # ws is split into latent / action parts so there is no concat; the single
        # [3B, Lp] matmul result IS torch.cat(dim=0)'s `flat` (modality-major rows).
        enc_all = jnp.concatenate(enc, axis=0)                                 # [3B, Lp]
        act_term = (jnp.dot(action_ref[...], ws_act_ref[...],
                            preferred_element_type=jnp.float32) + bs_ref[...])  # [B, Lp]
        flat = (jnp.dot(enc_all, ws_lat_ref[...],
                        preferred_element_type=jnp.float32)
                + jnp.concatenate([act_term, act_term, act_term], axis=0))      # [3B, Lp]

        # ---- flat.view(-1, 3, L): seq[b, t] = flat[3b + t] --------------------
        # Strided VMEM reads replace the old per-row gather: x_t = flat[t::3].
        flat_ref[...] = flat
        x_tm = jnp.concatenate(
            [flat_ref[pl.ds(t, batch, stride=3), :] for t in range(3)], axis=0)  # time-major [3B, Lp]

        # ---- multi-layer LSTM (batch_first, seq_len = 3), fully unrolled -----
        # Input projection hoisted: one matmul per layer over all 3 timesteps;
        # only h @ W_hh stays inside the serialized recurrence.
        # Padded gate lanes have zero weights/bias => padded h/c lanes stay exactly 0.
        hs = None
        for (w_ih_ref, w_hh_ref, b_ref) in lstm_w:
            w_hh = w_hh_ref[...]
            proj = (jnp.dot(x_tm, w_ih_ref[...],
                            preferred_element_type=jnp.float32) + b_ref[...])   # [3B, 4Hp]
            h = jnp.zeros((batch, h_pad), jnp.float32)
            c = jnp.zeros((batch, h_pad), jnp.float32)
            hs = []
            for t in range(3):
                g = (proj[t * batch:(t + 1) * batch, :]
                     + jnp.dot(h, w_hh, preferred_element_type=jnp.float32))
                i_g = _sigmoid(g[:, 0 * h_pad:1 * h_pad])
                f_g = _sigmoid(g[:, 1 * h_pad:2 * h_pad])
                g_g = jnp.tanh(g[:, 2 * h_pad:3 * h_pad])
                o_g = _sigmoid(g[:, 3 * h_pad:4 * h_pad])
                c = f_g * c + i_g * g_g
                h = o_g * jnp.tanh(c)
                hs.append(h)
            x_tm = jnp.concatenate(hs, axis=0)        # time-major input of next layer

        lstm_out = jnp.concatenate(hs, axis=1)        # flatten(start_dim=1) -> [B, 3Hp]

        # ---- fused decoders: fc1 lane-concatenated, fc2 block-diagonal -------
        d1 = jnp.maximum(
            jnp.dot(lstm_out, dw1_ref[...], preferred_element_type=jnp.float32)
            + db1_ref[...], 0.0)                      # [B, 3*128]
        d2 = jnp.maximum(
            jnp.dot(d1, dw2_ref[...], preferred_element_type=jnp.float32)
            + db2_ref[...], 0.0)                      # [B, 3*128]
        out_ref[...] = d2.astype(out_ref.dtype)

    return kernel


# ----------------------------------------------------------------------------
# Parameter init (PyTorch-style uniform), stored as [in, out] / 1-D biases.
# ----------------------------------------------------------------------------
def _linear_init(key, fan_in, fan_out):
    k = 1.0 / math.sqrt(fan_in)
    kw, kb = jax.random.split(key)
    w = jax.random.uniform(kw, (fan_in, fan_out), jnp.float32, -k, k)
    b = jax.random.uniform(kb, (fan_out,), jnp.float32, -k, k)
    return w, b


def _coder_init(key, in_dim, out_dim):
    k1, k2 = jax.random.split(key)
    return _linear_init(k1, in_dim, out_dim) + _linear_init(k2, out_dim, out_dim)


def _lstm_layer_init(key, in_dim, hidden):
    k = 1.0 / math.sqrt(hidden)
    k1, k2, k3, k4 = jax.random.split(key, 4)
    w_ih = jax.random.uniform(k1, (in_dim, 4 * hidden), jnp.float32, -k, k)
    w_hh = jax.random.uniform(k2, (hidden, 4 * hidden), jnp.float32, -k, k)
    b_ih = jax.random.uniform(k3, (4 * hidden,), jnp.float32, -k, k)
    b_hh = jax.random.uniform(k4, (4 * hidden,), jnp.float32, -k, k)
    return (w_ih, w_hh, b_ih + b_hh)   # fused bias: identical forward semantics


def init_params(key, cfg):
    A, P, T, AU = cfg["action_dim"], cfg["prop_dim"], cfg["tac_dim"], cfg["audio_dim"]
    L, H, NL = cfg["latent_dim"], cfg["lstm_hidden_size"], cfg["lstm_layers"]
    keys = jax.random.split(key, 7 + NL)
    return {
        "prop_encoder": _coder_init(keys[0], P, L),
        "tac_encoder": _coder_init(keys[1], T, L),
        "audio_encoder": _coder_init(keys[2], AU, L),
        "shared_encoding": _linear_init(keys[3], L + A, L),
        "lstm": [_lstm_layer_init(keys[4 + l], L if l == 0 else H, H)
                 for l in range(NL)],
        "prop_decoder": _coder_init(keys[4 + NL], 3 * H, P),
        "tac_decoder": _coder_init(keys[5 + NL], 3 * H, T),
        "audio_decoder": _coder_init(keys[6 + NL], 3 * H, AU),
    }


# ----------------------------------------------------------------------------
# Pack/pad parameters into the lane-dense kernel layout (done once, zeros pad).
# ----------------------------------------------------------------------------
def _pad2(a, rows, cols):
    return jnp.pad(a, ((0, rows - a.shape[0]), (0, cols - a.shape[1])))


def _pad_bias(b, cols):
    return jnp.pad(b, (0, cols - b.shape[0])).reshape(1, cols)


def _pack_lstm_w(w, in_pad, h_true, h_pad):
    gates = [_pad2(w[:, g * h_true:(g + 1) * h_true], in_pad, h_pad) for g in range(4)]
    return jnp.concatenate(gates, axis=1)


def _pack_lstm_b(b, h_true, h_pad):
    gates = [jnp.pad(b[g * h_true:(g + 1) * h_true], (0, h_pad - h_true))
             for g in range(4)]
    return jnp.concatenate(gates).reshape(1, 4 * h_pad)


def pack_params(params, cfg):
    A, P, T, AU = cfg["action_dim"], cfg["prop_dim"], cfg["tac_dim"], cfg["audio_dim"]
    L, H = cfg["latent_dim"], cfg["lstm_hidden_size"]
    Lp, Hp = _rup(L, _LANE), _rup(H, _LANE)
    packed = []

    # Encoders: fc1 fan-in padded to sublane multiples of 8 (activations padded in wrapper).
    for name, d in (("prop_encoder", P), ("tac_encoder", T), ("audio_encoder", AU)):
        w1, b1, w2, b2 = params[name]
        packed += [_pad2(w1, _rup(d, _SUB), Lp), _pad_bias(b1, Lp),
                   _pad2(w2, Lp, Lp), _pad_bias(b2, Lp)]

    # Shared encoding: weight split into latent / action parts (concat-free in kernel).
    ws, bs = params["shared_encoding"]                       # [L + A, L], [L]
    packed += [_pad2(ws[:L, :], Lp, Lp),
               _pad2(ws[L:, :], _rup(A, _SUB), Lp),
               _pad_bias(bs, Lp)]

    # LSTM layers: gate blocks padded to Hp; biases fused.
    for l, (w_ih, w_hh, b) in enumerate(params["lstm"]):
        in_pad = Lp if l == 0 else Hp
        packed += [_pack_lstm_w(w_ih, in_pad, H, Hp),
                   _pack_lstm_w(w_hh, Hp, H, Hp),
                   _pack_lstm_b(b, H, Hp)]

    # Decoders fused: fc1 weights concatenated along output lanes, fc2 block-diagonal.
    w1_list, b1_list, w2_list, b2_list, dps = [], [], [], [], []
    for name, d in (("prop_decoder", P), ("tac_decoder", T), ("audio_decoder", AU)):
        w1, b1, w2, b2 = params[name]
        dp = _rup(d, _LANE)
        blocks = [_pad2(w1[t * H:(t + 1) * H, :], Hp, dp) for t in range(3)]
        w1_list.append(jnp.concatenate(blocks, axis=0))      # [3Hp, dp]
        b1_list.append(_pad_bias(b1, dp))
        w2_list.append(_pad2(w2, dp, dp))
        b2_list.append(_pad_bias(b2, dp))
        dps.append(dp)
    total = sum(dps)
    w2_bd = jnp.zeros((total, total), jnp.float32)
    off = 0
    for w2p, dp in zip(w2_list, dps):
        w2_bd = w2_bd.at[off:off + dp, off:off + dp].set(w2p)
        off += dp
    packed += [jnp.concatenate(w1_list, axis=1),             # [3Hp, 384]
               jnp.concatenate(b1_list, axis=1),             # [1, 384]
               w2_bd,                                        # [384, 384]
               jnp.concatenate(b2_list, axis=1)]             # [1, 384]
    return tuple(packed)


# ----------------------------------------------------------------------------
# Forward wrapper (single pallas_call; slices padded outputs to true widths).
# ----------------------------------------------------------------------------
def make_forward(cfg):
    A, P, T, AU = cfg["action_dim"], cfg["prop_dim"], cfg["tac_dim"], cfg["audio_dim"]
    L, H, NL = cfg["latent_dim"], cfg["lstm_hidden_size"], cfg["lstm_layers"]
    Lp, Hp = _rup(L, _LANE), _rup(H, _LANE)
    in_pads = tuple(_rup(d, _SUB) for d in (P, T, AU))
    a_pad = _rup(A, _SUB)
    out_pads = tuple(_rup(d, _LANE) for d in (P, T, AU))
    out_total = sum(out_pads)
    offs = (0, out_pads[0], out_pads[0] + out_pads[1])

    @jax.jit
    def forward(packed, this_state, action):
        prop, tac, audio = (x.astype(jnp.float32) for x in this_state)
        action = action.astype(jnp.float32)             # torch.stack(action).float()
        B = prop.shape[0]

        # Sublane-align the tiny fan-ins (zero-padded; matching zero weight rows).
        prop = jnp.pad(prop, ((0, 0), (0, in_pads[0] - P)))
        tac = jnp.pad(tac, ((0, 0), (0, in_pads[1] - T)))
        audio = jnp.pad(audio, ((0, 0), (0, in_pads[2] - AU)))
        action = jnp.pad(action, ((0, 0), (0, a_pad - A)))

        kernel = _build_kernel(B, NL, Hp)
        vmem = pl.BlockSpec(memory_space=pltpu.MemorySpace.VMEM)
        n_in = 4 + len(packed)

        # Advisory cost estimate + explicit VMEM budget for the fused custom call.
        flops = 2 * B * (sum(in_pads) * Lp + 3 * Lp * Lp)           # encoders
        flops += 2 * B * a_pad * Lp + 2 * 3 * B * Lp * Lp           # shared encoding
        for l in range(NL):
            in_p = Lp if l == 0 else Hp
            flops += 2 * 3 * B * in_p * 4 * Hp                      # hoisted input proj
            flops += 2 * 3 * B * Hp * 4 * Hp                        # recurrent matmuls
        flops += 2 * B * (3 * Hp) * out_total + 2 * B * out_total * out_total
        transcendentals = B * NL * 3 * 5 * Hp
        total_bytes = 4 * (sum(int(x.size) for x in packed)
                           + B * (sum(in_pads) + a_pad)
                           + B * out_total + 3 * B * Lp)
        vmem_limit = int(min(max(2 * total_bytes + (4 << 20), 32 << 20), 100 << 20))

        out = pl.pallas_call(
            kernel,
            out_shape=jax.ShapeDtypeStruct((B, out_total), jnp.float32),
            in_specs=[vmem] * n_in,
            out_specs=vmem,
            scratch_shapes=[pltpu.VMEM((3 * B, Lp), jnp.float32)],
            compiler_params=pltpu.CompilerParams(vmem_limit_bytes=vmem_limit),
            cost_estimate=pl.CostEstimate(flops=int(flops),
                                          transcendentals=int(transcendentals),
                                          bytes_accessed=int(total_bytes)),
        )(prop, tac, audio, action, *packed)

        # Slice the fused lane-dense decoder output back to true modality widths.
        return (out[:, offs[0]:offs[0] + P],
                out[:, offs[1]:offs[1] + T],
                out[:, offs[2]:offs[2] + AU])

    return forward


# ----------------------------------------------------------------------------
# Pure-JAX reference (mirrors the PyTorch forward exactly).
# ----------------------------------------------------------------------------
def _mm(a, b):
    return jnp.dot(a, b, precision=jax.lax.Precision.HIGHEST)


def _coder_ref(x, p):
    w1, b1, w2, b2 = p
    h = jnp.maximum(_mm(x, w1) + b1, 0.0)
    return jnp.maximum(_mm(h, w2) + b2, 0.0)


def forward_ref(params, this_state, action, cfg):
    L, H = cfg["latent_dim"], cfg["lstm_hidden_size"]
    action = action.astype(jnp.float32)
    enc = [_coder_ref(this_state[0].astype(jnp.float32), params["prop_encoder"]),
           _coder_ref(this_state[1].astype(jnp.float32), params["tac_encoder"]),
           _coder_ref(this_state[2].astype(jnp.float32), params["audio_encoder"])]
    ws, bs = params["shared_encoding"]
    shared = [_mm(jnp.concatenate([e, action], axis=1), ws) + bs for e in enc]
    flat = jnp.concatenate(shared, axis=0)              # torch.cat(..., dim=0)
    seq = flat.reshape(-1, 3, L)                        # .view(-1, n_mods, latent_dim)
    B = seq.shape[0]
    for (w_ih, w_hh, b) in params["lstm"]:
        h = jnp.zeros((B, H), jnp.float32)
        c = jnp.zeros((B, H), jnp.float32)
        outs = []
        for t in range(3):
            g = _mm(seq[:, t, :], w_ih) + _mm(h, w_hh) + b
            i = 1.0 / (1.0 + jnp.exp(-g[:, 0 * H:1 * H]))
            f = 1.0 / (1.0 + jnp.exp(-g[:, 1 * H:2 * H]))
            gg = jnp.tanh(g[:, 2 * H:3 * H])
            o = 1.0 / (1.0 + jnp.exp(-g[:, 3 * H:4 * H]))
            c = f * c + i * gg
            h = o * jnp.tanh(c)
            outs.append(h)
        seq = jnp.stack(outs, axis=1)
    lstm_out = seq.reshape(B, 3 * H)                    # flatten(start_dim=1)
    return (_coder_ref(lstm_out, params["prop_decoder"]),
            _coder_ref(lstm_out, params["tac_decoder"]),
            _coder_ref(lstm_out, params["audio_decoder"]))


if __name__ == "__main__":
    # TODO(synk): compute()/Adam optimizer + backward (training step) are out of scope;
    # only the forward pass is implemented here.
    cfg = dict(action_dim=4, prop_dim=8, tac_dim=12, audio_dim=16,
               latent_dim=32, lstm_hidden_size=32, lstm_layers=2)
    B = 2

    root = jax.random.PRNGKey(0)
    kp, kt, ka, kact, kparam = jax.random.split(root, 5)
    prop = jax.random.normal(kp, (B, cfg["prop_dim"]), jnp.float32)
    tac = jax.random.normal(kt, (B, cfg["tac_dim"]), jnp.float32)
    audio = jax.random.normal(ka, (B, cfg["audio_dim"]), jnp.float32)
    # torch.stack(action) over B per-sample action vectors -> [B, action_dim]
    action = jax.random.normal(kact, (B, cfg["action_dim"]), jnp.float32)

    params = init_params(kparam, cfg)
    packed = pack_params(params, cfg)

    forward = make_forward(cfg)
    this_state = (prop, tac, audio)
    out = forward(packed, this_state, action)
    out = jax.block_until_ready(out)

    ref = forward_ref(params, this_state, action, cfg)
    for o, r in zip(out, ref):
        assert o.shape == r.shape, (o.shape, r.shape)
        err = float(jnp.max(jnp.abs(o - r)))
        assert jnp.allclose(o, r, atol=2e-4, rtol=2e-4), f"mismatch vs reference: {err}"

    print("KERNEL_OK")
</pallas_src>

<mosaic_0001>
module attributes {stable_mosaic.version = 11 : i64} {
  func.func @kernel(%arg0: memref<2x8xf32, #tpu.memory_space<vmem>>, %arg1: memref<2x16xf32, #tpu.memory_space<vmem>>, %arg2: memref<2x16xf32, #tpu.memory_space<vmem>>, %arg3: memref<2x8xf32, #tpu.memory_space<vmem>>, %arg4: memref<8x128xf32, #tpu.memory_space<vmem>>, %arg5: memref<1x128xf32, #tpu.memory_space<vmem>>, %arg6: memref<128x128xf32, #tpu.memory_space<vmem>>, %arg7: memref<1x128xf32, #tpu.memory_space<vmem>>, %arg8: memref<16x128xf32, #tpu.memory_space<vmem>>, %arg9: memref<1x128xf32, #tpu.memory_space<vmem>>, %arg10: memref<128x128xf32, #tpu.memory_space<vmem>>, %arg11: memref<1x128xf32, #tpu.memory_space<vmem>>, %arg12: memref<16x128xf32, #tpu.memory_space<vmem>>, %arg13: memref<1x128xf32, #tpu.memory_space<vmem>>, %arg14: memref<128x128xf32, #tpu.memory_space<vmem>>, %arg15: memref<1x128xf32, #tpu.memory_space<vmem>>, %arg16: memref<128x128xf32, #tpu.memory_space<vmem>>, %arg17: memref<8x128xf32, #tpu.memory_space<vmem>>, %arg18: memref<1x128xf32, #tpu.memory_space<vmem>>, %arg19: memref<128x512xf32, #tpu.memory_space<vmem>>, %arg20: memref<128x512xf32, #tpu.memory_space<vmem>>, %arg21: memref<1x512xf32, #tpu.memory_space<vmem>>, %arg22: memref<128x512xf32, #tpu.memory_space<vmem>>, %arg23: memref<128x512xf32, #tpu.memory_space<vmem>>, %arg24: memref<1x512xf32, #tpu.memory_space<vmem>>, %arg25: memref<384x384xf32, #tpu.memory_space<vmem>>, %arg26: memref<1x384xf32, #tpu.memory_space<vmem>>, %arg27: memref<384x384xf32, #tpu.memory_space<vmem>>, %arg28: memref<1x384xf32, #tpu.memory_space<vmem>>, %arg29: memref<2x384xf32, #tpu.memory_space<vmem>>, %arg30: memref<6x128xf32, #tpu.memory_space<vmem>>) attributes {dimension_semantics = [], scalar_prefetch = 0 : i64, scratch_operands = 1 : i64, tpu.core_type = #tpu.core_type<tc>} {
    %c0 = arith.constant 0 : index
    %c0_0 = arith.constant 0 : index
    %0 = vector.load %arg0[%c0, %c0_0] : memref<2x8xf32, #tpu.memory_space<vmem>>, vector<2x8xf32>
    %c0_1 = arith.constant 0 : index
    %c0_2 = arith.constant 0 : index
    %1 = vector.load %arg1[%c0_1, %c0_2] : memref<2x16xf32, #tpu.memory_space<vmem>>, vector<2x16xf32>
    %c0_3 = arith.constant 0 : index
    %c0_4 = arith.constant 0 : index
    %2 = vector.load %arg2[%c0_3, %c0_4] : memref<2x16xf32, #tpu.memory_space<vmem>>, vector<2x16xf32>
    %c0_5 = arith.constant 0 : index
    %c0_6 = arith.constant 0 : index
    %3 = vector.load %arg4[%c0_5, %c0_6] : memref<8x128xf32, #tpu.memory_space<vmem>>, vector<8x128xf32>
    %c0_7 = arith.constant 0 : index
    %c0_8 = arith.constant 0 : index
    %4 = vector.load %arg5[%c0_7, %c0_8] : memref<1x128xf32, #tpu.memory_space<vmem>>, vector<1x128xf32>
    %c0_9 = arith.constant 0 : index
    %c0_10 = arith.constant 0 : index
    %5 = vector.load %arg6[%c0_9, %c0_10] : memref<128x128xf32, #tpu.memory_space<vmem>>, vector<128x128xf32>
    %c0_11 = arith.constant 0 : index
    %c0_12 = arith.constant 0 : index
    %6 = vector.load %arg7[%c0_11, %c0_12] : memref<1x128xf32, #tpu.memory_space<vmem>>, vector<1x128xf32>
    %cst = arith.constant dense<0.000000e+00> : vector<2x128xf32>
    %7 = tpu.matmul %0, %3, %cst {dimension_numbers = #tpu.dot_dimension_numbers<[1], [0], [0], [1], [0, 0, 1, 1], [], []>} : vector<2x8xf32>, vector<8x128xf32>, vector<2x128xf32> -> vector<2x128xf32>
    %8 = vector.broadcast %4 : vector<1x128xf32> to vector<2x128xf32>
    %9 = arith.addf %7, %8 : vector<2x128xf32>
    %cst_13 = arith.constant 0.000000e+00 : f32
    %10 = vector.broadcast %cst_13 : f32 to vector<2x128xf32>
    %11 = arith.maximumf %9, %10 : vector<2x128xf32>
    %cst_14 = arith.constant dense<0.000000e+00> : vector<2x128xf32>
    %12 = tpu.matmul %11, %5, %cst_14 {dimension_numbers = #tpu.dot_dimension_numbers<[1], [0], [0], [1], [0, 0, 1, 1], [], []>} : vector<2x128xf32>, vector<128x128xf32>, vector<2x128xf32> -> vector<2x128xf32>
    %13 = vector.broadcast %6 : vector<1x128xf32> to vector<2x128xf32>
    %14 = arith.addf %12, %13 : vector<2x128xf32>
    %cst_15 = arith.constant 0.000000e+00 : f32
    %15 = vector.broadcast %cst_15 : f32 to vector<2x128xf32>
    %16 = arith.maximumf %14, %15 : vector<2x128xf32>
    %c0_16 = arith.constant 0 : index
    %c0_17 = arith.constant 0 : index
    %17 = vector.load %arg8[%c0_16, %c0_17] : memref<16x128xf32, #tpu.memory_space<vmem>>, vector<16x128xf32>
    %c0_18 = arith.constant 0 : index
    %c0_19 = arith.constant 0 : index
    %18 = vector.load %arg9[%c0_18, %c0_19] : memref<1x128xf32, #tpu.memory_space<vmem>>, vector<1x128xf32>
    %c0_20 = arith.constant 0 : index
    %c0_21 = arith.constant 0 : index
    %19 = vector.load %arg10[%c0_20, %c0_21] : memref<128x128xf32, #tpu.memory_space<vmem>>, vector<128x128xf32>
    %c0_22 = arith.constant 0 : index
    %c0_23 = arith.constant 0 : index
    %20 = vector.load %arg11[%c0_22, %c0_23] : memref<1x128xf32, #tpu.memory_space<vmem>>, vector<1x128xf32>
    %cst_24 = arith.constant dense<0.000000e+00> : vector<2x128xf32>
    %21 = tpu.matmul %1, %17, %cst_24 {dimension_numbers = #tpu.dot_dimension_numbers<[1], [0], [0], [1], [0, 0, 1, 1], [], []>} : vector<2x16xf32>, vector<16x128xf32>, vector<2x128xf32> -> vector<2x128xf32>
    %22 = vector.broadcast %18 : vector<1x128xf32> to vector<2x128xf32>
    %23 = arith.addf %21, %22 : vector<2x128xf32>
    %cst_25 = arith.constant 0.000000e+00 : f32
    %24 = vector.broadcast %cst_25 : f32 to vector<2x128xf32>
    %25 = arith.maximumf %23, %24 : vector<2x128xf32>
    %cst_26 = arith.constant dense<0.000000e+00> : vector<2x128xf32>
    %26 = tpu.matmul %25, %19, %cst_26 {dimension_numbers = #tpu.dot_dimension_numbers<[1], [0], [0], [1], [0, 0, 1, 1], [], []>} : vector<2x128xf32>, vector<128x128xf32>, vector<2x128xf32> -> vector<2x128xf32>
    %27 = vector.broadcast %20 : vector<1x128xf32> to vector<2x128xf32>
    %28 = arith.addf %26, %27 : vector<2x128xf32>
    %cst_27 = arith.constant 0.000000e+00 : f32
    %29 = vector.broadcast %cst_27 : f32 to vector<2x128xf32>
    %30 = arith.maximumf %28, %29 : vector<2x128xf32>
    %c0_28 = arith.constant 0 : index
    %c0_29 = arith.constant 0 : index
    %31 = vector.load %arg12[%c0_28, %c0_29] : memref<16x128xf32, #tpu.memory_space<vmem>>, vector<16x128xf32>
    %c0_30 = arith.constant 0 : index
    %c0_31 = arith.constant 0 : index
    %32 = vector.load %arg13[%c0_30, %c0_31] : memref<1x128xf32, #tpu.memory_space<vmem>>, vector<1x128xf32>
    %c0_32 = arith.constant 0 : index
    %c0_33 = arith.constant 0 : index
    %33 = vector.load %arg14[%c0_32, %c0_33] : memref<128x128xf32, #tpu.memory_space<vmem>>, vector<128x128xf32>
    %c0_34 = arith.constant 0 : index
    %c0_35 = arith.constant 0 : index
    %34 = vector.load %arg15[%c0_34, %c0_35] : memref<1x128xf32, #tpu.memory_space<vmem>>, vector<1x128xf32>
    %cst_36 = arith.constant dense<0.000000e+00> : vector<2x128xf32>
    %35 = tpu.matmul %2, %31, %cst_36 {dimension_numbers = #tpu.dot_dimension_numbers<[1], [0], [0], [1], [0, 0, 1, 1], [], []>} : vector<2x16xf32>, vector<16x128xf32>, vector<2x128xf32> -> vector<2x128xf32>
    %36 = vector.broadcast %32 : vector<1x128xf32> to vector<2x128xf32>
    %37 = arith.addf %35, %36 : vector<2x128xf32>
    %cst_37 = arith.constant 0.000000e+00 : f32
    %38 = vector.broadcast %cst_37 : f32 to vector<2x128xf32>
    %39 = arith.maximumf %37, %38 : vector<2x128xf32>
    %cst_38 = arith.constant dense<0.000000e+00> : vector<2x128xf32>
    %40 = tpu.matmul %39, %33, %cst_38 {dimension_numbers = #tpu.dot_dimension_numbers<[1], [0], [0], [1], [0, 0, 1, 1], [], []>} : vector<2x128xf32>, vector<128x128xf32>, vector<2x128xf32> -> vector<2x128xf32>
    %41 = vector.broadcast %34 : vector<1x128xf32> to vector<2x128xf32>
    %42 = arith.addf %40, %41 : vector<2x128xf32>
    %cst_39 = arith.constant 0.000000e+00 : f32
    %43 = vector.broadcast %cst_39 : f32 to vector<2x128xf32>
    %44 = arith.maximumf %42, %43 : vector<2x128xf32>
    %45 = tpu.concatenate %16, %30, %44 in 0 : vector<2x128xf32>, vector<2x128xf32>, vector<2x128xf32> -> vector<6x128xf32>
    %c0_40 = arith.constant 0 : index
    %c0_41 = arith.constant 0 : index
    %46 = vector.load %arg3[%c0_40, %c0_41] : memref<2x8xf32, #tpu.memory_space<vmem>>, vector<2x8xf32>
    %c0_42 = arith.constant 0 : index
    %c0_43 = arith.constant 0 : index
    %47 = vector.load %arg17[%c0_42, %c0_43] : memref<8x128xf32, #tpu.memory_space<vmem>>, vector<8x128xf32>
    %cst_44 = arith.constant dense<0.000000e+00> : vector<2x128xf32>
    %48 = tpu.matmul %46, %47, %cst_44 {dimension_numbers = #tpu.dot_dimension_numbers<[1], [0], [0], [1], [0, 0, 1, 1], [], []>} : vector<2x8xf32>, vector<8x128xf32>, vector<2x128xf32> -> vector<2x128xf32>
    %c0_45 = arith.constant 0 : index
    %c0_46 = arith.constant 0 : index
    %49 = vector.load %arg18[%c0_45, %c0_46] : memref<1x128xf32, #tpu.memory_space<vmem>>, vector<1x128xf32>
    %50 = vector.broadcast %49 : vector<1x128xf32> to vector<2x128xf32>
    %51 = arith.addf %48, %50 : vector<2x128xf32>
    %c0_47 = arith.constant 0 : index
    %c0_48 = arith.constant 0 : index
    %52 = vector.load %arg16[%c0_47, %c0_48] : memref<128x128xf32, #tpu.memory_space<vmem>>, vector<128x128xf32>
    %cst_49 = arith.constant dense<0.000000e+00> : vector<6x128xf32>
    %53 = tpu.matmul %45, %52, %cst_49 {dimension_numbers = #tpu.dot_dimension_numbers<[1], [0], [0], [1], [0, 0, 1, 1], [], []>} : vector<6x128xf32>, vector<128x128xf32>, vector<6x128xf32> -> vector<6x128xf32>
    %54 = tpu.concatenate %51, %51, %51 in 0 : vector<2x128xf32>, vector<2x128xf32>, vector<2x128xf32> -> vector<6x128xf32>
    %55 = arith.addf %53, %54 : vector<6x128xf32>
    %c0_50 = arith.constant 0 : index
    %c0_51 = arith.constant 0 : index
    %56 = vector.load %arg30[%c0_50, %c0_51] : memref<6x128xf32, #tpu.memory_space<vmem>>, vector<6x128xf32>
    tpu.vector_store %arg30[%c0_50, %c0_51], %55 {strides = array<i32>} : memref<6x128xf32, #tpu.memory_space<vmem>>, vector<6x128xf32>,
    %c0_52 = arith.constant 0 : index
    %c0_53 = arith.constant 0 : index
    %57 = tpu.strided_load %arg30[%c0_52, %c0_53] {strides = array<i32: 3, 1>} : memref<6x128xf32, #tpu.memory_space<vmem>>, vector<2x128xf32>
    %c1 = arith.constant 1 : index
    %c0_54 = arith.constant 0 : index
    %58 = tpu.strided_load %arg30[%c1, %c0_54] {strides = array<i32: 3, 1>} : memref<6x128xf32, #tpu.memory_space<vmem>>, vector<2x128xf32>
    %c2 = arith.constant 2 : index
    %c0_55 = arith.constant 0 : index
    %59 = tpu.strided_load %arg30[%c2, %c0_55] {strides = array<i32: 3, 1>} : memref<6x128xf32, #tpu.memory_space<vmem>>, vector<2x128xf32>
    %60 = tpu.concatenate %57, %58, %59 in 0 : vector<2x128xf32>, vector<2x128xf32>, vector<2x128xf32> -> vector<6x128xf32>
    %c0_56 = arith.constant 0 : index
    %c0_57 = arith.constant 0 : index
    %61 = vector.load %arg20[%c0_56, %c0_57] : memref<128x512xf32, #tpu.memory_space<vmem>>, vector<128x512xf32>
    %c0_58 = arith.constant 0 : index
    %c0_59 = arith.constant 0 : index
    %62 = vector.load %arg19[%c0_58, %c0_59] : memref<128x512xf32, #tpu.memory_space<vmem>>, vector<128x512xf32>
    %cst_60 = arith.constant dense<0.000000e+00> : vector<6x512xf32>
    %63 = tpu.matmul %60, %62, %cst_60 {dimension_numbers = #tpu.dot_dimension_numbers<[1], [0], [0], [1], [0, 0, 1, 1], [], []>} : vector<6x128xf32>, vector<128x512xf32>, vector<6x512xf32> -> vector<6x512xf32>
    %c0_61 = arith.constant 0 : index
    %c0_62 = arith.constant 0 : index
    %64 = vector.load %arg21[%c0_61, %c0_62] : memref<1x512xf32, #tpu.memory_space<vmem>>, vector<1x512xf32>
    %65 = vector.broadcast %64 : vector<1x512xf32> to vector<6x512xf32>
    %66 = arith.addf %63, %65 : vector<6x512xf32>
    %cst_63 = arith.constant 0.000000e+00 : f32
    %67 = vector.broadcast %cst_63 : f32 to vector<2x128xf32>
    %cst_64 = arith.constant 0.000000e+00 : f32
    %68 = vector.broadcast %cst_64 : f32 to vector<2x128xf32>
    %69 = vector.extract_strided_slice %66 {offsets = [0, 0], sizes = [2, 512], strides = [1, 1]} : vector<6x512xf32> to vector<2x512xf32>
    %cst_65 = arith.constant dense<0.000000e+00> : vector<2x512xf32>
    %70 = tpu.matmul %67, %61, %cst_65 {dimension_numbers = #tpu.dot_dimension_numbers<[1], [0], [0], [1], [0, 0, 1, 1], [], []>} : vector<2x128xf32>, vector<128x512xf32>, vector<2x512xf32> -> vector<2x512xf32>
    %71 = arith.addf %69, %70 : vector<2x512xf32>
    %72 = vector.extract_strided_slice %71 {offsets = [0, 0], sizes = [2, 128], strides = [1, 1]} : vector<2x512xf32> to vector<2x128xf32>
    %cst_66 = arith.constant 0.000000e+00 : f32
    %73 = vector.broadcast %cst_66 : f32 to vector<2x128xf32>
    %74 = arith.subf %73, %72 : vector<2x128xf32>
    %75 = math.exp %74 : vector<2x128xf32>
    %cst_67 = arith.constant 1.000000e+00 : f32
    %76 = vector.broadcast %cst_67 : f32 to vector<2x128xf32>
    %77 = arith.addf %76, %75 : vector<2x128xf32>
    %cst_68 = arith.constant 1.000000e+00 : f32
    %78 = vector.broadcast %cst_68 : f32 to vector<2x128xf32>
    %79 = arith.divf %78, %77 : vector<2x128xf32>
    %80 = vector.extract_strided_slice %71 {offsets = [0, 128], sizes = [2, 128], strides = [1, 1]} : vector<2x512xf32> to vector<2x128xf32>
    %cst_69 = arith.constant 0.000000e+00 : f32
    %81 = vector.broadcast %cst_69 : f32 to vector<2x128xf32>
    %82 = arith.subf %81, %80 : vector<2x128xf32>
    %83 = math.exp %82 : vector<2x128xf32>
    %cst_70 = arith.constant 1.000000e+00 : f32
    %84 = vector.broadcast %cst_70 : f32 to vector<2x128xf32>
    %85 = arith.addf %84, %83 : vector<2x128xf32>
    %cst_71 = arith.constant 1.000000e+00 : f32
    %86 = vector.broadcast %cst_71 : f32 to vector<2x128xf32>
    %87 = arith.divf %86, %85 : vector<2x128xf32>
    %88 = vector.extract_strided_slice %71 {offsets = [0, 256], sizes = [2, 128], strides = [1, 1]} : vector<2x512xf32> to vector<2x128xf32>
    %89 = math.tanh %88 : vector<2x128xf32>
    %90 = vector.extract_strided_slice %71 {offsets = [0, 384], sizes = [2, 128], strides = [1, 1]} : vector<2x512xf32> to vector<2x128xf32>
    %cst_72 = arith.constant 0.000000e+00 : f32
    %91 = vector.broadcast %cst_72 : f32 to vector<2x128xf32>
    %92 = arith.subf %91, %90 : vector<2x128xf32>
    %93 = math.exp %92 : vector<2x128xf32>
    %cst_73 = arith.constant 1.000000e+00 : f32
    %94 = vector.broadcast %cst_73 : f32 to vector<2x128xf32>
    %95 = arith.addf %94, %93 : vector<2x128xf32>
    %cst_74 = arith.constant 1.000000e+00 : f32
    %96 = vector.broadcast %cst_74 : f32 to vector<2x128xf32>
    %97 = arith.divf %96, %95 : vector<2x128xf32>
    %98 = arith.mulf %87, %68 : vector<2x128xf32>
    %99 = arith.mulf %79, %89 : vector<2x128xf32>
    %100 = arith.addf %98, %99 : vector<2x128xf32>
    %101 = math.tanh %100 : vector<2x128xf32>
    %102 = arith.mulf %97, %101 : vector<2x128xf32>
    %103 = vector.extract_strided_slice %66 {offsets = [2, 0], sizes = [2, 512], strides = [1, 1]} : vector<6x512xf32> to vector<2x512xf32>
    %cst_75 = arith.constant dense<0.000000e+00> : vector<2x512xf32>
    %104 = tpu.matmul %102, %61, %cst_75 {dimension_numbers = #tpu.dot_dimension_numbers<[1], [0], [0], [1], [0, 0, 1, 1], [], []>} : vector<2x128xf32>, vector<128x512xf32>, vector<2x512xf32> -> vector<2x512xf32>
    %105 = arith.addf %103, %104 : vector<2x512xf32>
    %106 = vector.extract_strided_slice %105 {offsets = [0, 0], sizes = [2, 128], strides = [1, 1]} : vector<2x512xf32> to vector<2x128xf32>
    %cst_76 = arith.constant 0.000000e+00 : f32
    %107 = vector.broadcast %cst_76 : f32 to vector<2x128xf32>
    %108 = arith.subf %107, %106 : vector<2x128xf32>
    %109 = math.exp %108 : vector<2x128xf32>
    %cst_77 = arith.constant 1.000000e+00 : f32
    %110 = vector.broadcast %cst_77 : f32 to vector<2x128xf32>
    %111 = arith.addf %110, %109 : vector<2x128xf32>
    %cst_78 = arith.constant 1.000000e+00 : f32
    %112 = vector.broadcast %cst_78 : f32 to vector<2x128xf32>
    %113 = arith.divf %112, %111 : vector<2x128xf32>
    %114 = vector.extract_strided_slice %105 {offsets = [0, 128], sizes = [2, 128], strides = [1, 1]} : vector<2x512xf32> to vector<2x128xf32>
    %cst_79 = arith.constant 0.000000e+00 : f32
    %115 = vector.broadcast %cst_79 : f32 to vector<2x128xf32>
    %116 = arith.subf %115, %114 : vector<2x128xf32>
    %117 = math.exp %116 : vector<2x128xf32>
    %cst_80 = arith.constant 1.000000e+00 : f32
    %118 = vector.broadcast %cst_80 : f32 to vector<2x128xf32>
    %119 = arith.addf %118, %117 : vector<2x128xf32>
    %cst_81 = arith.constant 1.000000e+00 : f32
    %120 = vector.broadcast %cst_81 : f32 to vector<2x128xf32>
    %121 = arith.divf %120, %119 : vector<2x128xf32>
    %122 = vector.extract_strided_slice %105 {offsets = [0, 256], sizes = [2, 128], strides = [1, 1]} : vector<2x512xf32> to vector<2x128xf32>
    %123 = math.tanh %122 : vector<2x128xf32>
    %124 = vector.extract_strided_slice %105 {offsets = [0, 384], sizes = [2, 128], strides = [1, 1]} : vector<2x512xf32> to vector<2x128xf32>
    %cst_82 = arith.constant 0.000000e+00 : f32
    %125 = vector.broadcast %cst_82 : f32 to vector<2x128xf32>
    %126 = arith.subf %125, %124 : vector<2x128xf32>
    %127 = math.exp %126 : vector<2x128xf32>
    %cst_83 = arith.constant 1.000000e+00 : f32
    %128 = vector.broadcast %cst_83 : f32 to vector<2x128xf32>
    %129 = arith.addf %128, %127 : vector<2x128xf32>
    %cst_84 = arith.constant 1.000000e+00 : f32
    %130 = vector.broadcast %cst_84 : f32 to vector<2x128xf32>
    %131 = arith.divf %130, %129 : vector<2x128xf32>
    %132 = arith.mulf %121, %100 : vector<2x128xf32>
    %133 = arith.mulf %113, %123 : vector<2x128xf32>
    %134 = arith.addf %132, %133 : vector<2x128xf32>
    %135 = math.tanh %134 : vector<2x128xf32>
    %136 = arith.mulf %131, %135 : vector<2x128xf32>
    %137 = vector.extract_strided_slice %66 {offsets = [4, 0], sizes = [2, 512], strides = [1, 1]} : vector<6x512xf32> to vector<2x512xf32>
    %cst_85 = arith.constant dense<0.000000e+00> : vector<2x512xf32>
    %138 = tpu.matmul %136, %61, %cst_85 {dimension_numbers = #tpu.dot_dimension_numbers<[1], [0], [0], [1], [0, 0, 1, 1], [], []>} : vector<2x128xf32>, vector<128x512xf32>, vector<2x512xf32> -> vector<2x512xf32>
    %139 = arith.addf %137, %138 : vector<2x512xf32>
    %140 = vector.extract_strided_slice %139 {offsets = [0, 0], sizes = [2, 128], strides = [1, 1]} : vector<2x512xf32> to vector<2x128xf32>
    %cst_86 = arith.constant 0.000000e+00 : f32
    %141 = vector.broadcast %cst_86 : f32 to vector<2x128xf32>
    %142 = arith.subf %141, %140 : vector<2x128xf32>
    %143 = math.exp %142 : vector<2x128xf32>
    %cst_87 = arith.constant 1.000000e+00 : f32
    %144 = vector.broadcast %cst_87 : f32 to vector<2x128xf32>
    %145 = arith.addf %144, %143 : vector<2x128xf32>
    %cst_88 = arith.constant 1.000000e+00 : f32
    %146 = vector.broadcast %cst_88 : f32 to vector<2x128xf32>
    %147 = arith.divf %146, %145 : vector<2x128xf32>
    %148 = vector.extract_strided_slice %139 {offsets = [0, 128], sizes = [2, 128], strides = [1, 1]} : vector<2x512xf32> to vector<2x128xf32>
    %cst_89 = arith.constant 0.000000e+00 : f32
    %149 = vector.broadcast %cst_89 : f32 to vector<2x128xf32>
    %150 = arith.subf %149, %148 : vector<2x128xf32>
    %151 = math.exp %150 : vector<2x128xf32>
    %cst_90 = arith.constant 1.000000e+00 : f32
    %152 = vector.broadcast %cst_90 : f32 to vector<2x128xf32>
    %153 = arith.addf %152, %151 : vector<2x128xf32>
    %cst_91 = arith.constant 1.000000e+00 : f32
    %154 = vector.broadcast %cst_91 : f32 to vector<2x128xf32>
    %155 = arith.divf %154, %153 : vector<2x128xf32>
    %156 = vector.extract_strided_slice %139 {offsets = [0, 256], sizes = [2, 128], strides = [1, 1]} : vector<2x512xf32> to vector<2x128xf32>
    %157 = math.tanh %156 : vector<2x128xf32>
    %158 = vector.extract_strided_slice %139 {offsets = [0, 384], sizes = [2, 128], strides = [1, 1]} : vector<2x512xf32> to vector<2x128xf32>
    %cst_92 = arith.constant 0.000000e+00 : f32
    %159 = vector.broadcast %cst_92 : f32 to vector<2x128xf32>
    %160 = arith.subf %159, %158 : vector<2x128xf32>
    %161 = math.exp %160 : vector<2x128xf32>
    %cst_93 = arith.constant 1.000000e+00 : f32
    %162 = vector.broadcast %cst_93 : f32 to vector<2x128xf32>
    %163 = arith.addf %162, %161 : vector<2x128xf32>
    %cst_94 = arith.constant 1.000000e+00 : f32
    %164 = vector.broadcast %cst_94 : f32 to vector<2x128xf32>
    %165 = arith.divf %164, %163 : vector<2x128xf32>
    %166 = arith.mulf %155, %134 : vector<2x128xf32>
    %167 = arith.mulf %147, %157 : vector<2x128xf32>
    %168 = arith.addf %166, %167 : vector<2x128xf32>
    %169 = math.tanh %168 : vector<2x128xf32>
    %170 = arith.mulf %165, %169 : vector<2x128xf32>
    %171 = tpu.concatenate %102, %136, %170 in 0 : vector<2x128xf32>, vector<2x128xf32>, vector<2x128xf32> -> vector<6x128xf32>
    %c0_95 = arith.constant 0 : index
    %c0_96 = arith.constant 0 : index
    %172 = vector.load %arg23[%c0_95, %c0_96] : memref<128x512xf32, #tpu.memory_space<vmem>>, vector<128x512xf32>
    %c0_97 = arith.constant 0 : index
    %c0_98 = arith.constant 0 : index
    %173 = vector.load %arg22[%c0_97, %c0_98] : memref<128x512xf32, #tpu.memory_space<vmem>>, vector<128x512xf32>
    %cst_99 = arith.constant dense<0.000000e+00> : vector<6x512xf32>
    %174 = tpu.matmul %171, %173, %cst_99 {dimension_numbers = #tpu.dot_dimension_numbers<[1], [0], [0], [1], [0, 0, 1, 1], [], []>} : vector<6x128xf32>, vector<128x512xf32>, vector<6x512xf32> -> vector<6x512xf32>
    %c0_100 = arith.constant 0 : index
    %c0_101 = arith.constant 0 : index
    %175 = vector.load %arg24[%c0_100, %c0_101] : memref<1x512xf32, #tpu.memory_space<vmem>>, vector<1x512xf32>
    %176 = vector.broadcast %175 : vector<1x512xf32> to vector<6x512xf32>
    %177 = arith.addf %174, %176 : vector<6x512xf32>
    %cst_102 = arith.constant 0.000000e+00 : f32
    %178 = vector.broadcast %cst_102 : f32 to vector<2x128xf32>
    %cst_103 = arith.constant 0.000000e+00 : f32
    %179 = vector.broadcast %cst_103 : f32 to vector<2x128xf32>
    %180 = vector.extract_strided_slice %177 {offsets = [0, 0], sizes = [2, 512], strides = [1, 1]} : vector<6x512xf32> to vector<2x512xf32>
    %cst_104 = arith.constant dense<0.000000e+00> : vector<2x512xf32>
    %181 = tpu.matmul %178, %172, %cst_104 {dimension_numbers = #tpu.dot_dimension_numbers<[1], [0], [0], [1], [0, 0, 1, 1], [], []>} : vector<2x128xf32>, vector<128x512xf32>, vector<2x512xf32> -> vector<2x512xf32>
    %182 = arith.addf %180, %181 : vector<2x512xf32>
    %183 = vector.extract_strided_slice %182 {offsets = [0, 0], sizes = [2, 128], strides = [1, 1]} : vector<2x512xf32> to vector<2x128xf32>
    %cst_105 = arith.constant 0.000000e+00 : f32
    %184 = vector.broadcast %cst_105 : f32 to vector<2x128xf32>
    %185 = arith.subf %184, %183 : vector<2x128xf32>
    %186 = math.exp %185 : vector<2x128xf32>
    %cst_106 = arith.constant 1.000000e+00 : f32
    %187 = vector.broadcast %cst_106 : f32 to vector<2x128xf32>
    %188 = arith.addf %187, %186 : vector<2x128xf32>
    %cst_107 = arith.constant 1.000000e+00 : f32
    %189 = vector.broadcast %cst_107 : f32 to vector<2x128xf32>
    %190 = arith.divf %189, %188 : vector<2x128xf32>
    %191 = vector.extract_strided_slice %182 {offsets = [0, 128], sizes = [2, 128], strides = [1, 1]} : vector<2x512xf32> to vector<2x128xf32>
    %cst_108 = arith.constant 0.000000e+00 : f32
    %192 = vector.broadcast %cst_108 : f32 to vector<2x128xf32>
    %193 = arith.subf %192, %191 : vector<2x128xf32>
    %194 = math.exp %193 : vector<2x128xf32>
    %cst_109 = arith.constant 1.000000e+00 : f32
    %195 = vector.broadcast %cst_109 : f32 to vector<2x128xf32>
    %196 = arith.addf %195, %194 : vector<2x128xf32>
    %cst_110 = arith.constant 1.000000e+00 : f32
    %197 = vector.broadcast %cst_110 : f32 to vector<2x128xf32>
    %198 = arith.divf %197, %196 : vector<2x128xf32>
    %199 = vector.extract_strided_slice %182 {offsets = [0, 256], sizes = [2, 128], strides = [1, 1]} : vector<2x512xf32> to vector<2x128xf32>
    %200 = math.tanh %199 : vector<2x128xf32>
    %201 = vector.extract_strided_slice %182 {offsets = [0, 384], sizes = [2, 128], strides = [1, 1]} : vector<2x512xf32> to vector<2x128xf32>
    %cst_111 = arith.constant 0.000000e+00 : f32
    %202 = vector.broadcast %cst_111 : f32 to vector<2x128xf32>
    %203 = arith.subf %202, %201 : vector<2x128xf32>
    %204 = math.exp %203 : vector<2x128xf32>
    %cst_112 = arith.constant 1.000000e+00 : f32
    %205 = vector.broadcast %cst_112 : f32 to vector<2x128xf32>
    %206 = arith.addf %205, %204 : vector<2x128xf32>
    %cst_113 = arith.constant 1.000000e+00 : f32
    %207 = vector.broadcast %cst_113 : f32 to vector<2x128xf32>
    %208 = arith.divf %207, %206 : vector<2x128xf32>
    %209 = arith.mulf %198, %179 : vector<2x128xf32>
    %210 = arith.mulf %190, %200 : vector<2x128xf32>
    %211 = arith.addf %209, %210 : vector<2x128xf32>
    %212 = math.tanh %211 : vector<2x128xf32>
    %213 = arith.mulf %208, %212 : vector<2x128xf32>
    %214 = vector.extract_strided_slice %177 {offsets = [2, 0], sizes = [2, 512], strides = [1, 1]} : vector<6x512xf32> to vector<2x512xf32>
    %cst_114 = arith.constant dense<0.000000e+00> : vector<2x512xf32>
    %215 = tpu.matmul %213, %172, %cst_114 {dimension_numbers = #tpu.dot_dimension_numbers<[1], [0], [0], [1], [0, 0, 1, 1], [], []>} : vector<2x128xf32>, vector<128x512xf32>, vector<2x512xf32> -> vector<2x512xf32>
    %216 = arith.addf %214, %215 : vector<2x512xf32>
    %217 = vector.extract_strided_slice %216 {offsets = [0, 0], sizes = [2, 128], strides = [1, 1]} : vector<2x512xf32> to vector<2x128xf32>
    %cst_115 = arith.constant 0.000000e+00 : f32
    %218 = vector.broadcast %cst_115 : f32 to vector<2x128xf32>
    %219 = arith.subf %218, %217 : vector<2x128xf32>
    %220 = math.exp %219 : vector<2x128xf32>
    %cst_116 = arith.constant 1.000000e+00 : f32
    %221 = vector.broadcast %cst_116 : f32 to vector<2x128xf32>
    %222 = arith.addf %221, %220 : vector<2x128xf32>
    %cst_117 = arith.constant 1.000000e+00 : f32
    %223 = vector.broadcast %cst_117 : f32 to vector<2x128xf32>
    %224 = arith.divf %223, %222 : vector<2x128xf32>
    %225 = vector.extract_strided_slice %216 {offsets = [0, 128], sizes = [2, 128], strides = [1, 1]} : vector<2x512xf32> to vector<2x128xf32>
    %cst_118 = arith.constant 0.000000e+00 : f32
    %226 = vector.broadcast %cst_118 : f32 to vector<2x128xf32>
    %227 = arith.subf %226, %225 : vector<2x128xf32>
    %228 = math.exp %227 : vector<2x128xf32>
    %cst_119 = arith.constant 1.000000e+00 : f32
    %229 = vector.broadcast %cst_119 : f32 to vector<2x128xf32>
    %230 = arith.addf %229, %228 : vector<2x128xf32>
    %cst_120 = arith.constant 1.000000e+00 : f32
    %231 = vector.broadcast %cst_120 : f32 to vector<2x128xf32>
    %232 = arith.divf %231, %230 : vector<2x128xf32>
    %233 = vector.extract_strided_slice %216 {offsets = [0, 256], sizes = [2, 128], strides = [1, 1]} : vector<2x512xf32> to vector<2x128xf32>
    %234 = math.tanh %233 : vector<2x128xf32>
    %235 = vector.extract_strided_slice %216 {offsets = [0, 384], sizes = [2, 128], strides = [1, 1]} : vector<2x512xf32> to vector<2x128xf32>
    %cst_121 = arith.constant 0.000000e+00 : f32
    %236 = vector.broadcast %cst_121 : f32 to vector<2x128xf32>
    %237 = arith.subf %236, %235 : vector<2x128xf32>
    %238 = math.exp %237 : vector<2x128xf32>
    %cst_122 = arith.constant 1.000000e+00 : f32
    %239 = vector.broadcast %cst_122 : f32 to vector<2x128xf32>
    %240 = arith.addf %239, %238 : vector<2x128xf32>
    %cst_123 = arith.constant 1.000000e+00 : f32
    %241 = vector.broadcast %cst_123 : f32 to vector<2x128xf32>
    %242 = arith.divf %241, %240 : vector<2x128xf32>
    %243 = arith.mulf %232, %211 : vector<2x128xf32>
    %244 = arith.mulf %224, %234 : vector<2x128xf32>
    %245 = arith.addf %243, %244 : vector<2x128xf32>
    %246 = math.tanh %245 : vector<2x128xf32>
    %247 = arith.mulf %242, %246 : vector<2x128xf32>
    %248 = vector.extract_strided_slice %177 {offsets = [4, 0], sizes = [2, 512], strides = [1, 1]} : vector<6x512xf32> to vector<2x512xf32>
    %cst_124 = arith.constant dense<0.000000e+00> : vector<2x512xf32>
    %249 = tpu.matmul %247, %172, %cst_124 {dimension_numbers = #tpu.dot_dimension_numbers<[1], [0], [0], [1], [0, 0, 1, 1], [], []>} : vector<2x128xf32>, vector<128x512xf32>, vector<2x512xf32> -> vector<2x512xf32>
    %250 = arith.addf %248, %249 : vector<2x512xf32>
    %251 = vector.extract_strided_slice %250 {offsets = [0, 0], sizes = [2, 128], strides = [1, 1]} : vector<2x512xf32> to vector<2x128xf32>
    %cst_125 = arith.constant 0.000000e+00 : f32
    %252 = vector.broadcast %cst_125 : f32 to vector<2x128xf32>
    %253 = arith.subf %252, %251 : vector<2x128xf32>
    %254 = math.exp %253 : vector<2x128xf32>
    %cst_126 = arith.constant 1.000000e+00 : f32
    %255 = vector.broadcast %cst_126 : f32 to vector<2x128xf32>
    %256 = arith.addf %255, %254 : vector<2x128xf32>
    %cst_127 = arith.constant 1.000000e+00 : f32
    %257 = vector.broadcast %cst_127 : f32 to vector<2x128xf32>
    %258 = arith.divf %257, %256 : vector<2x128xf32>
    %259 = vector.extract_strided_slice %250 {offsets = [0, 128], sizes = [2, 128], strides = [1, 1]} : vector<2x512xf32> to vector<2x128xf32>
    %cst_128 = arith.constant 0.000000e+00 : f32
    %260 = vector.broadcast %cst_128 : f32 to vector<2x128xf32>
    %261 = arith.subf %260, %259 : vector<2x128xf32>
    %262 = math.exp %261 : vector<2x128xf32>
    %cst_129 = arith.constant 1.000000e+00 : f32
    %263 = vector.broadcast %cst_129 : f32 to vector<2x128xf32>
    %264 = arith.addf %263, %262 : vector<2x128xf32>
    %cst_130 = arith.constant 1.000000e+00 : f32
    %265 = vector.broadcast %cst_130 : f32 to vector<2x128xf32>
    %266 = arith.divf %265, %264 : vector<2x128xf32>
    %267 = vector.extract_strided_slice %250 {offsets = [0, 256], sizes = [2, 128], strides = [1, 1]} : vector<2x512xf32> to vector<2x128xf32>
    %268 = math.tanh %267 : vector<2x128xf32>
    %269 = vector.extract_strided_slice %250 {offsets = [0, 384], sizes = [2, 128], strides = [1, 1]} : vector<2x512xf32> to vector<2x128xf32>
    %cst_131 = arith.constant 0.000000e+00 : f32
    %270 = vector.broadcast %cst_131 : f32 to vector<2x128xf32>
    %271 = arith.subf %270, %269 : vector<2x128xf32>
    %272 = math.exp %271 : vector<2x128xf32>
    %cst_132 = arith.constant 1.000000e+00 : f32
    %273 = vector.broadcast %cst_132 : f32 to vector<2x128xf32>
    %274 = arith.addf %273, %272 : vector<2x128xf32>
    %cst_133 = arith.constant 1.000000e+00 : f32
    %275 = vector.broadcast %cst_133 : f32 to vector<2x128xf32>
    %276 = arith.divf %275, %274 : vector<2x128xf32>
    %277 = arith.mulf %266, %245 : vector<2x128xf32>
    %278 = arith.mulf %258, %268 : vector<2x128xf32>
    %279 = arith.addf %277, %278 : vector<2x128xf32>
    %280 = math.tanh %279 : vector<2x128xf32>
    %281 = arith.mulf %276, %280 : vector<2x128xf32>
    %282 = tpu.concatenate %213, %247, %281 in 1 : vector<2x128xf32>, vector<2x128xf32>, vector<2x128xf32> -> vector<2x384xf32>
    %c0_134 = arith.constant 0 : index
    %c0_135 = arith.constant 0 : index
    %283 = vector.load %arg25[%c0_134, %c0_135] : memref<384x384xf32, #tpu.memory_space<vmem>>, vector<384x384xf32>
    %cst_136 = arith.constant dense<0.000000e+00> : vector<2x384xf32>
    %284 = tpu.matmul %282, %283, %cst_136 {dimension_numbers = #tpu.dot_dimension_numbers<[1], [0], [0], [1], [0, 0, 1, 1], [], []>} : vector<2x384xf32>, vector<384x384xf32>, vector<2x384xf32> -> vector<2x384xf32>
    %c0_137 = arith.constant 0 : index
    %c0_138 = arith.constant 0 : index
    %285 = vector.load %arg26[%c0_137, %c0_138] : memref<1x384xf32, #tpu.memory_space<vmem>>, vector<1x384xf32>
    %286 = vector.broadcast %285 : vector<1x384xf32> to vector<2x384xf32>
    %287 = arith.addf %284, %286 : vector<2x384xf32>
    %cst_139 = arith.constant 0.000000e+00 : f32
    %288 = vector.broadcast %cst_139 : f32 to vector<2x384xf32>
    %289 = arith.maximumf %287, %288 : vector<2x384xf32>
    %c0_140 = arith.constant 0 : index
    %c0_141 = arith.constant 0 : index
    %290 = vector.load %arg27[%c0_140, %c0_141] : memref<384x384xf32, #tpu.memory_space<vmem>>, vector<384x384xf32>
    %cst_142 = arith.constant dense<0.000000e+00> : vector<2x384xf32>
    %291 = tpu.matmul %289, %290, %cst_142 {dimension_numbers = #tpu.dot_dimension_numbers<[1], [0], [0], [1], [0, 0, 1, 1], [], []>} : vector<2x384xf32>, vector<384x384xf32>, vector<2x384xf32> -> vector<2x384xf32>
    %c0_143 = arith.constant 0 : index
    %c0_144 = arith.constant 0 : index
    %292 = vector.load %arg28[%c0_143, %c0_144] : memref<1x384xf32, #tpu.memory_space<vmem>>, vector<1x384xf32>
    %293 = vector.broadcast %292 : vector<1x384xf32> to vector<2x384xf32>
    %294 = arith.addf %291, %293 : vector<2x384xf32>
    %cst_145 = arith.constant 0.000000e+00 : f32
    %295 = vector.broadcast %cst_145 : f32 to vector<2x384xf32>
    %296 = arith.maximumf %294, %295 : vector<2x384xf32>
    %c0_146 = arith.constant 0 : index
    %c0_147 = arith.constant 0 : index
    %297 = vector.load %arg29[%c0_146, %c0_147] : memref<2x384xf32, #tpu.memory_space<vmem>>, vector<2x384xf32>
    tpu.vector_store %arg29[%c0_146, %c0_147], %296 {strides = array<i32>} : memref<2x384xf32, #tpu.memory_space<vmem>>, vector<2x384xf32>,
    return
  }
}

</mosaic_0001>

<llo_original>
// kernel: forward.1
$region0: #{forward.1}
  #allocation0 [shape = 'u32[]', space=smem, size = 0x4, offset = 0x4, fixed_abs, tag = 'smem constant byte address 0x4 - core index']
  #allocation1 [shape = 'u32[144,128]{1,0:T(1,128)}', space=vmem, size = 0x12000, scoped, tag = 'internal scratch']
  #allocation2 [shape = 'f32[6,128]{1,0:T(8,128)}', space=vmem, size = 0x1000, scoped, tag = 'scratch operand']
  %s0 = inlined_call_operand.smem [shape: u32[30], index: -1, kind: input, shape index: {}]
  %s1 = sld [smem:[%s0]]
  %s2 = scalar_lea.smem %s0, 1
  %s3 = sld [smem:[%s2]]
  %s4 = scalar_lea.smem %s0, 2
  %s5 = sld [smem:[%s4]]
  %s6 = scalar_lea.smem %s0, 3
  %s7 = sld [smem:[%s6]]
  %s8 = scalar_lea.smem %s0, 4
  %s9 = sld [smem:[%s8]]
  %s10 = scalar_lea.smem %s0, 5
  %s11 = sld [smem:[%s10]]
  %s12 = scalar_lea.smem %s0, 6
  %s13 = sld [smem:[%s12]]
  %s14 = scalar_lea.smem %s0, 7
  %s15 = sld [smem:[%s14]]
  %s16 = scalar_lea.smem %s0, 8
  %s17 = sld [smem:[%s16]]
  %s18 = scalar_lea.smem %s0, 9
  %s19 = sld [smem:[%s18]]
  %s20 = scalar_lea.smem %s0, 10
  %s21 = sld [smem:[%s20]]
  %s22 = scalar_lea.smem %s0, 11
  %s23 = sld [smem:[%s22]]
  %s24 = scalar_lea.smem %s0, 12
  %s25 = sld [smem:[%s24]]
  %s26 = scalar_lea.smem %s0, 13
  %s27 = sld [smem:[%s26]]
  %s28 = scalar_lea.smem %s0, 14
  %s29 = sld [smem:[%s28]]
  %s30 = scalar_lea.smem %s0, 15
  %s31 = sld [smem:[%s30]]
  %s32 = scalar_lea.smem %s0, 16
  %s33 = sld [smem:[%s32]]
  %s34 = scalar_lea.smem %s0, 17
  %s35 = sld [smem:[%s34]]
  %s36 = scalar_lea.smem %s0, 18
  %s37 = sld [smem:[%s36]]
  %s38 = scalar_lea.smem %s0, 19
  %s39 = sld [smem:[%s38]]
  %s40 = scalar_lea.smem %s0, 20
  %s41 = sld [smem:[%s40]]
  %s42 = scalar_lea.smem %s0, 21
  %s43 = sld [smem:[%s42]]
  %s44 = scalar_lea.smem %s0, 22
  %s45 = sld [smem:[%s44]]
  %s46 = scalar_lea.smem %s0, 23
  %s47 = sld [smem:[%s46]]
  %s48 = scalar_lea.smem %s0, 24
  %s49 = sld [smem:[%s48]]
  %s50 = scalar_lea.smem %s0, 25
  %s51 = sld [smem:[%s50]]
  %s52 = scalar_lea.smem %s0, 26
  %s53 = sld [smem:[%s52]]
  %s54 = scalar_lea.smem %s0, 27
  %s55 = sld [smem:[%s54]]
  %s56 = scalar_lea.smem %s0, 28
  %s57 = sld [smem:[%s56]]
  %s58 = scalar_lea.smem %s0, 29
  %s59 = sld [smem:[%s58]]
  %s60 = sld [smem:[#allocation0]]
  $region194: #{forward.1} parent=0
    _
  %s62 = ssub.s32 1, %s60
  %s63 = scalar_select 0, %s62, %s60
  $region1: #{forward.1} parent=0
    #allocation3 [shape = 'u8[4096]{0}', space=vmem, size = 0x1000, scoped, tag = 'input window, operand 4, single buffered']
    #allocation4 [shape = 's32[1]{0}', space=sflag, size = 0x4, scoped, tag = 'scoped memory for forward.1']
    #allocation5 [shape = 'u8[512]{0}', space=vmem, size = 0x400, scoped, tag = 'input window, operand 5, single buffered']
    #allocation6 [shape = 's32[1]{0}', space=sflag, size = 0x4, scoped, tag = 'scoped memory for forward.1']
    #allocation7 [shape = 'u8[65536]{0}', space=vmem, size = 0x10000, scoped, tag = 'input window, operand 6, single buffered']
    #allocation8 [shape = 'u8[512]{0}', space=vmem, size = 0x400, scoped, tag = 'input window, operand 7, single buffered']
    #allocation9 [shape = 's32[1]{0}', space=sflag, size = 0x4, scoped, tag = 'scoped memory for forward.1']
    #allocation10 [shape = 'u8[512]{0}', space=vmem, size = 0x400, scoped, tag = 'input window, operand 9, single buffered']
    #allocation11 [shape = 'u8[65536]{0}', space=vmem, size = 0x10000, scoped, tag = 'input window, operand 10, single buffered']
    #allocation12 [shape = 's32[1]{0}', space=sflag, size = 0x4, scoped, tag = 'scoped memory for forward.1']
    #allocation13 [shape = 'u8[512]{0}', space=vmem, size = 0x400, scoped, tag = 'input window, operand 11, single buffered']
    #allocation14 [shape = 'u8[512]{0}', space=vmem, size = 0x400, scoped, tag = 'input window, operand 13, single buffered']
    #allocation15 [shape = 's32[1]{0}', space=sflag, size = 0x4, scoped, tag = 'scoped memory for forward.1']
    #allocation16 [shape = 'u8[65536]{0}', space=vmem, size = 0x10000, scoped, tag = 'input window, operand 14, single buffered']
    #allocation17 [shape = 'u8[512]{0}', space=vmem, size = 0x400, scoped, tag = 'input window, operand 15, single buffered']
    #allocation18 [shape = 's32[1]{0}', space=sflag, size = 0x4, scoped, tag = 'scoped memory for forward.1']
    #allocation19 [shape = 'u8[65536]{0}', space=vmem, size = 0x10000, scoped, tag = 'input window, operand 16, single buffered']
    #allocation20 [shape = 'u8[262144]{0}', space=vmem, size = 0x40000, scoped, tag = 'input window, operand 19, single buffered']
    #allocation21 [shape = 's32[1]{0}', space=sflag, size = 0x4, scoped, tag = 'scoped memory for forward.1']
    #allocation22 [shape = 'u8[262144]{0}', space=vmem, size = 0x40000, scoped, tag = 'input window, operand 20, single buffered']
    #allocation23 [shape = 'u8[262144]{0}', space=vmem, size = 0x40000, scoped, tag = 'input window, operand 22, single buffered']
    #allocation24 [shape = 's32[1]{0}', space=sflag, size = 0x4, scoped, tag = 'scoped memory for forward.1']
    #allocation25 [shape = 'u8[262144]{0}', space=vmem, size = 0x40000, scoped, tag = 'input window, operand 23, single buffered']
    #allocation26 [shape = 'u8[589824]{0}', space=vmem, size = 0x90000, scoped, tag = 'input window, operand 25, single buffered']
    #allocation27 [shape = 's32[1]{0}', space=sflag, size = 0x4, scoped, tag = 'scoped memory for forward.1']
    #allocation28 [shape = 'u8[589824]{0}', space=vmem, size = 0x90000, scoped, tag = 'input window, operand 27, single buffered']
    %64 = vsyncpa [#allocation4], 0
    %65 = vsyncpa [#allocation6], 0
    %66 = vsyncpa [#allocation9], 0
    %67 = vsyncpa [#allocation12], 0
    %68 = vsyncpa [#allocation15], 0
    %69 = vsyncpa [#allocation18], 0
    %70 = vsyncpa [#allocation21], 0
    %71 = vsyncpa [#allocation24], 0
    %72 = vsyncpa [#allocation27], 0
    // Predicated region
    $region2: #{forward.1} parent=1 // pred_check
      _
    $region3: #{forward.1} parent=1 // pred_check_branch
      %74 = sbr.rel (0) target = $region5
    $region4: #{forward.1} parent=1 // pred_region
      _
    $region5: #{forward.1} parent=1 // pred_fallthru
      _
    // Predicated region
    $region6: #{forward.1} parent=1 // pred_check
      _
    $region7: #{forward.1} parent=1 // pred_check_branch
      %76 = sbr.rel (0) target = $region9
    $region8: #{forward.1} parent=1 // pred_region
      _
    $region9: #{forward.1} parent=1 // pred_fallthru
      _
    // Predicated region
    $region10: #{forward.1} parent=1 // pred_check
      _
    $region11: #{forward.1} parent=1 // pred_check_branch
      %78 = sbr.rel (0) target = $region13
    $region12: #{forward.1} parent=1 // pred_region
      _
    $region13: #{forward.1} parent=1 // pred_fallthru
      _
    // Predicated region
    $region14: #{forward.1} parent=1 // pred_check
      _
    $region15: #{forward.1} parent=1 // pred_check_branch
      %80 = sbr.rel (0) target = $region17
    $region16: #{forward.1} parent=1 // pred_region
      _
    $region17: #{forward.1} parent=1 // pred_fallthru
      _
    // Predicated region
    $region18: #{forward.1} parent=1 // pred_check
      _
    $region19: #{forward.1} parent=1 // pred_check_branch
      %82 = sbr.rel (0) target = $region21
    $region20: #{forward.1} parent=1 // pred_region
      %s84 = ssub.s32 128, 128
      %85 = vsyncadd [#allocation4], %s84
      %s87 = sshll.u32 [#allocation3], 4
      %s88 = int_to_ptr.vmem [resolvable:$true] %s87
      %90 = dma.hbm_to_vmem [thread:$0]  %s9, 128, %s88, [#allocation4]
    $region21: #{forward.1} parent=1 // pred_fallthru
      _
    // Predicated region
    $region22: #{forward.1} parent=1 // pred_check
      _
    $region23: #{forward.1} parent=1 // pred_check_branch
      %92 = sbr.rel (0) target = $region25
    $region24: #{forward.1} parent=1 // pred_region
      %s94 = ssub.s32 16, 16
      %95 = vsyncadd [#allocation6], %s94
      %s97 = sshll.u32 [#allocation5], 4
      %s98 = int_to_ptr.vmem [resolvable:$true] %s97
      %100 = dma.hbm_to_vmem [thread:$0]  %s11, 16, %s98, [#allocation6]
    $region25: #{forward.1} parent=1 // pred_fallthru
      _
    // Predicated region
    $region26: #{forward.1} parent=1 // pred_check
      _
    $region27: #{forward.1} parent=1 // pred_check_branch
      %102 = sbr.rel (0) target = $region29
    $region28: #{forward.1} parent=1 // pred_region
      %s104 = ssub.s32 2048, 2048
      %105 = vsyncadd [#allocation6], %s104
      %s106 = sshll.u32 [#allocation7], 4
      %s107 = int_to_ptr.vmem [resolvable:$true] %s106
      %112 = dma.hbm_to_vmem [thread:$0]  %s13, 2048, %s107, [#allocation6], 128, 128, 8
    $region29: #{forward.1} parent=1 // pred_fallthru
      _
    // Predicated region
    $region30: #{forward.1} parent=1 // pred_check
      _
    $region31: #{forward.1} parent=1 // pred_check_branch
      %114 = sbr.rel (0) target = $region33
    $region32: #{forward.1} parent=1 // pred_region
      %s116 = ssub.s32 16, 16
      %117 = vsyncadd [#allocation9], %s116
      %s119 = sshll.u32 [#allocation8], 4
      %s120 = int_to_ptr.vmem [resolvable:$true] %s119
      %122 = dma.hbm_to_vmem [thread:$0]  %s15, 16, %s120, [#allocation9]
    $region33: #{forward.1} parent=1 // pred_fallthru
      _
    // Predicated region
    $region34: #{forward.1} parent=1 // pred_check
      _
    $region35: #{forward.1} parent=1 // pred_check_branch
      %124 = sbr.rel (0) target = $region37
    $region36: #{forward.1} parent=1 // pred_region
      _
    $region37: #{forward.1} parent=1 // pred_fallthru
      _
    // Predicated region
    $region38: #{forward.1} parent=1 // pred_check
      _
    $region39: #{forward.1} parent=1 // pred_check_branch
      %126 = sbr.rel (0) target = $region41
    $region40: #{forward.1} parent=1 // pred_region
      %s128 = ssub.s32 16, 16
      %129 = vsyncadd [#allocation9], %s128
      %s131 = sshll.u32 [#allocation10], 4
      %s132 = int_to_ptr.vmem [resolvable:$true] %s131
      %134 = dma.hbm_to_vmem [thread:$0]  %s19, 16, %s132, [#allocation9]
    $region41: #{forward.1} parent=1 // pred_fallthru
      _
    // Predicated region
    $region42: #{forward.1} parent=1 // pred_check
      _
    $region43: #{forward.1} parent=1 // pred_check_branch
      %136 = sbr.rel (0) target = $region45
    $region44: #{forward.1} parent=1 // pred_region
      %s138 = ssub.s32 2048, 2048
      %139 = vsyncadd [#allocation12], %s138
      %s140 = sshll.u32 [#allocation11], 4
      %s141 = int_to_ptr.vmem [resolvable:$true] %s140
      %146 = dma.hbm_to_vmem [thread:$0]  %s21, 2048, %s141, [#allocation12], 128, 128, 8
    $region45: #{forward.1} parent=1 // pred_fallthru
      _
    // Predicated region
    $region46: #{forward.1} parent=1 // pred_check
      _
    $region47: #{forward.1} parent=1 // pred_check_branch
      %148 = sbr.rel (0) target = $region49
    $region48: #{forward.1} parent=1 // pred_region
      %s150 = ssub.s32 16, 16
      %151 = vsyncadd [#allocation12], %s150
      %s153 = sshll.u32 [#allocation13], 4
      %s154 = int_to_ptr.vmem [resolvable:$true] %s153
      %156 = dma.hbm_to_vmem [thread:$0]  %s23, 16, %s154, [#allocation12]
    $region49: #{forward.1} parent=1 // pred_fallthru
      _
    // Predicated region
    $region50: #{forward.1} parent=1 // pred_check
      _
    $region51: #{forward.1} parent=1 // pred_check_branch
      %158 = sbr.rel (0) target = $region53
    $region52: #{forward.1} parent=1 // pred_region
      _
    $region53: #{forward.1} parent=1 // pred_fallthru
      _
    // Predicated region
    $region54: #{forward.1} parent=1 // pred_check
      _
    $region55: #{forward.1} parent=1 // pred_check_branch
      %160 = sbr.rel (0) target = $region57
    $region56: #{forward.1} parent=1 // pred_region
      %s162 = ssub.s32 16, 16
      %163 = vsyncadd [#allocation15], %s162
      %s165 = sshll.u32 [#allocation14], 4
      %s166 = int_to_ptr.vmem [resolvable:$true] %s165
      %168 = dma.hbm_to_vmem [thread:$0]  %s27, 16, %s166, [#allocation15]
    $region57: #{forward.1} parent=1 // pred_fallthru
      _
    // Predicated region
    $region58: #{forward.1} parent=1 // pred_check
      _
    $region59: #{forward.1} parent=1 // pred_check_branch
      %170 = sbr.rel (0) target = $region61
    $region60: #{forward.1} parent=1 // pred_region
      %s172 = ssub.s32 2048, 2048
      %173 = vsyncadd [#allocation15], %s172
      %s174 = sshll.u32 [#allocation16], 4
      %s175 = int_to_ptr.vmem [resolvable:$true] %s174
      %180 = dma.hbm_to_vmem [thread:$0]  %s29, 2048, %s175, [#allocation15], 128, 128, 8
    $region61: #{forward.1} parent=1 // pred_fallthru
      _
    // Predicated region
    $region62: #{forward.1} parent=1 // pred_check
      _
    $region63: #{forward.1} parent=1 // pred_check_branch
      %182 = sbr.rel (0) target = $region65
    $region64: #{forward.1} parent=1 // pred_region
      %s184 = ssub.s32 16, 16
      %185 = vsyncadd [#allocation18], %s184
      %s187 = sshll.u32 [#allocation17], 4
      %s188 = int_to_ptr.vmem [resolvable:$true] %s187
      %190 = dma.hbm_to_vmem [thread:$0]  %s31, 16, %s188, [#allocation18]
    $region65: #{forward.1} parent=1 // pred_fallthru
      _
    // Predicated region
    $region66: #{forward.1} parent=1 // pred_check
      _
    $region67: #{forward.1} parent=1 // pred_check_branch
      %192 = sbr.rel (0) target = $region69
    $region68: #{forward.1} parent=1 // pred_region
      %s194 = ssub.s32 2048, 2048
      %195 = vsyncadd [#allocation18], %s194
      %s196 = sshll.u32 [#allocation19], 4
      %s197 = int_to_ptr.vmem [resolvable:$true] %s196
      %202 = dma.hbm_to_vmem [thread:$0]  %s33, 2048, %s197, [#allocation18], 128, 128, 8
    $region69: #{forward.1} parent=1 // pred_fallthru
      _
    // Predicated region
    $region70: #{forward.1} parent=1 // pred_check
      _
    $region71: #{forward.1} parent=1 // pred_check_branch
      %204 = sbr.rel (0) target = $region73
    $region72: #{forward.1} parent=1 // pred_region
      _
    $region73: #{forward.1} parent=1 // pred_fallthru
      _
    // Predicated region
    $region74: #{forward.1} parent=1 // pred_check
      _
    $region75: #{forward.1} parent=1 // pred_check_branch
      %206 = sbr.rel (0) target = $region77
    $region76: #{forward.1} parent=1 // pred_region
      _
    $region77: #{forward.1} parent=1 // pred_fallthru
      _
    // Predicated region
    $region78: #{forward.1} parent=1 // pred_check
      _
    $region79: #{forward.1} parent=1 // pred_check_branch
      %208 = sbr.rel (0) target = $region81
    $region80: #{forward.1} parent=1 // pred_region
      %s210 = ssub.s32 8192, 8192
      %211 = vsyncadd [#allocation21], %s210
      %s212 = sshll.u32 [#allocation20], 4
      %s213 = int_to_ptr.vmem [resolvable:$true] %s212
      %218 = dma.hbm_to_vmem [thread:$0]  %s39, 8192, %s213, [#allocation21], 512, 512, 32
    $region81: #{forward.1} parent=1 // pred_fallthru
      _
    // Predicated region
    $region82: #{forward.1} parent=1 // pred_check
      _
    $region83: #{forward.1} parent=1 // pred_check_branch
      %220 = sbr.rel (0) target = $region85
    $region84: #{forward.1} parent=1 // pred_region
      %s222 = ssub.s32 8192, 8192
      %223 = vsyncadd [#allocation21], %s222
      %s224 = sshll.u32 [#allocation22], 4
      %s225 = int_to_ptr.vmem [resolvable:$true] %s224
      %230 = dma.hbm_to_vmem [thread:$0]  %s41, 8192, %s225, [#allocation21], 512, 512, 32
    $region85: #{forward.1} parent=1 // pred_fallthru
      _
    // Predicated region
    $region86: #{forward.1} parent=1 // pred_check
      _
    $region87: #{forward.1} parent=1 // pred_check_branch
      %232 = sbr.rel (0) target = $region89
    $region88: #{forward.1} parent=1 // pred_region
      _
    $region89: #{forward.1} parent=1 // pred_fallthru
      _
    // Predicated region
    $region90: #{forward.1} parent=1 // pred_check
      _
    $region91: #{forward.1} parent=1 // pred_check_branch
      %234 = sbr.rel (0) target = $region93
    $region92: #{forward.1} parent=1 // pred_region
      %s236 = ssub.s32 8192, 8192
      %237 = vsyncadd [#allocation24], %s236
      %s238 = sshll.u32 [#allocation23], 4
      %s239 = int_to_ptr.vmem [resolvable:$true] %s238
      %244 = dma.hbm_to_vmem [thread:$0]  %s45, 8192, %s239, [#allocation24], 512, 512, 32
    $region93: #{forward.1} parent=1 // pred_fallthru
      _
    // Predicated region
    $region94: #{forward.1} parent=1 // pred_check
      _
    $region95: #{forward.1} parent=1 // pred_check_branch
      %246 = sbr.rel (0) target = $region97
    $region96: #{forward.1} parent=1 // pred_region
      %s248 = ssub.s32 8192, 8192
      %249 = vsyncadd [#allocation24], %s248
      %s250 = sshll.u32 [#allocation25], 4
      %s251 = int_to_ptr.vmem [resolvable:$true] %s250
      %256 = dma.hbm_to_vmem [thread:$0]  %s47, 8192, %s251, [#allocation24], 512, 512, 32
    $region97: #{forward.1} parent=1 // pred_fallthru
      _
    // Predicated region
    $region98: #{forward.1} parent=1 // pred_check
      _
    $region99: #{forward.1} parent=1 // pred_check_branch
      %258 = sbr.rel (0) target = $region101
    $region100: #{forward.1} parent=1 // pred_region
      _
    $region101: #{forward.1} parent=1 // pred_fallthru
      _
    // Predicated region
    $region102: #{forward.1} parent=1 // pred_check
      _
    $region103: #{forward.1} parent=1 // pred_check_branch
      %260 = sbr.rel (0) target = $region105
    $region104: #{forward.1} parent=1 // pred_region
      %s262 = ssub.s32 18432, 18432
      %263 = vsyncadd [#allocation27], %s262
      %s264 = sshll.u32 [#allocation26], 4
      %s265 = int_to_ptr.vmem [resolvable:$true] %s264
      %270 = dma.hbm_to_vmem [thread:$0]  %s51, 18432, %s265, [#allocation27], 384, 384, 24
    $region105: #{forward.1} parent=1 // pred_fallthru
      _
    // Predicated region
    $region106: #{forward.1} parent=1 // pred_check
      _
    $region107: #{forward.1} parent=1 // pred_check_branch
      %272 = sbr.rel (0) target = $region109
    $region108: #{forward.1} parent=1 // pred_region
      _
    $region109: #{forward.1} parent=1 // pred_fallthru
      _
    // Predicated region
    $region110: #{forward.1} parent=1 // pred_check
      _
    $region111: #{forward.1} parent=1 // pred_check_branch
      %274 = sbr.rel (0) target = $region113
    $region112: #{forward.1} parent=1 // pred_region
      %s276 = ssub.s32 18432, 18432
      %277 = vsyncadd [#allocation27], %s276
      %s278 = sshll.u32 [#allocation28], 4
      %s279 = int_to_ptr.vmem [resolvable:$true] %s278
      %284 = dma.hbm_to_vmem [thread:$0]  %s55, 18432, %s279, [#allocation27], 384, 384, 24
    $region113: #{forward.1} parent=1 // pred_fallthru
      _
    // Predicated region
    $region114: #{forward.1} parent=1 // pred_check
      _
    $region115: #{forward.1} parent=1 // pred_check_branch
      %286 = sbr.rel (0) target = $region117
    $region116: #{forward.1} parent=1 // pred_region
      _
    $region117: #{forward.1} parent=1 // pred_fallthru
      _
    // Predicated region
    $region118: #{forward.1} parent=1 // pred_check
      _
    $region119: #{forward.1} parent=1 // pred_check_branch
      %288 = sbr.rel (0) target = $region121
    $region120: #{forward.1} parent=1 // pred_region
      %289 = dma.done [#allocation4], 128
    $region121: #{forward.1} parent=1 // pred_fallthru
      _
    // Predicated region
    $region122: #{forward.1} parent=1 // pred_check
      _
    $region123: #{forward.1} parent=1 // pred_check_branch
      %291 = sbr.rel (0) target = $region125
    $region124: #{forward.1} parent=1 // pred_region
      %292 = dma.done [#allocation6], 16
    $region125: #{forward.1} parent=1 // pred_fallthru
      _
    // Predicated region
    $region126: #{forward.1} parent=1 // pred_check
      _
    $region127: #{forward.1} parent=1 // pred_check_branch
      %294 = sbr.rel (0) target = $region129
    $region128: #{forward.1} parent=1 // pred_region
      %295 = dma.done [#allocation6], 2048
    $region129: #{forward.1} parent=1 // pred_fallthru
      _
    // Predicated region
    $region130: #{forward.1} parent=1 // pred_check
      _
    $region131: #{forward.1} parent=1 // pred_check_branch
      %297 = sbr.rel (0) target = $region133
    $region132: #{forward.1} parent=1 // pred_region
      %298 = dma.done [#allocation9], 16
    $region133: #{forward.1} parent=1 // pred_fallthru
      _
    // Predicated region
    $region134: #{forward.1} parent=1 // pred_check
      _
    $region135: #{forward.1} parent=1 // pred_check_branch
      %300 = sbr.rel (0) target = $region137
    $region136: #{forward.1} parent=1 // pred_region
      %301 = dma.done [#allocation9], 16
    $region137: #{forward.1} parent=1 // pred_fallthru
      _
    // Predicated region
    $region138: #{forward.1} parent=1 // pred_check
      _
    $region139: #{forward.1} parent=1 // pred_check_branch
      %303 = sbr.rel (0) target = $region141
    $region140: #{forward.1} parent=1 // pred_region
      %304 = dma.done [#allocation12], 2048
    $region141: #{forward.1} parent=1 // pred_fallthru
      _
    // Predicated region
    $region142: #{forward.1} parent=1 // pred_check
      _
    $region143: #{forward.1} parent=1 // pred_check_branch
      %306 = sbr.rel (0) target = $region145
    $region144: #{forward.1} parent=1 // pred_region
      %307 = dma.done [#allocation12], 16
    $region145: #{forward.1} parent=1 // pred_fallthru
      _
    // Predicated region
    $region146: #{forward.1} parent=1 // pred_check
      _
    $region147: #{forward.1} parent=1 // pred_check_branch
      %309 = sbr.rel (0) target = $region149
    $region148: #{forward.1} parent=1 // pred_region
      %310 = dma.done [#allocation15], 16
    $region149: #{forward.1} parent=1 // pred_fallthru
      _
    // Predicated region
    $region150: #{forward.1} parent=1 // pred_check
      _
    $region151: #{forward.1} parent=1 // pred_check_branch
      %312 = sbr.rel (0) target = $region153
    $region152: #{forward.1} parent=1 // pred_region
      %313 = dma.done [#allocation15], 2048
    $region153: #{forward.1} parent=1 // pred_fallthru
      _
    // Predicated region
    $region154: #{forward.1} parent=1 // pred_check
      _
    $region155: #{forward.1} parent=1 // pred_check_branch
      %315 = sbr.rel (0) target = $region157
    $region156: #{forward.1} parent=1 // pred_region
      %316 = dma.done [#allocation18], 16
    $region157: #{forward.1} parent=1 // pred_fallthru
      _
    // Predicated region
    $region158: #{forward.1} parent=1 // pred_check
      _
    $region159: #{forward.1} parent=1 // pred_check_branch
      %318 = sbr.rel (0) target = $region161
    $region160: #{forward.1} parent=1 // pred_region
      %319 = dma.done [#allocation18], 2048
    $region161: #{forward.1} parent=1 // pred_fallthru
      _
    // Predicated region
    $region162: #{forward.1} parent=1 // pred_check
      _
    $region163: #{forward.1} parent=1 // pred_check_branch
      %321 = sbr.rel (0) target = $region165
    $region164: #{forward.1} parent=1 // pred_region
      %322 = dma.done [#allocation21], 8192
    $region165: #{forward.1} parent=1 // pred_fallthru
      _
    // Predicated region
    $region166: #{forward.1} parent=1 // pred_check
      _
    $region167: #{forward.1} parent=1 // pred_check_branch
      %324 = sbr.rel (0) target = $region169
    $region168: #{forward.1} parent=1 // pred_region
      %325 = dma.done [#allocation21], 8192
    $region169: #{forward.1} parent=1 // pred_fallthru
      _
    // Predicated region
    $region170: #{forward.1} parent=1 // pred_check
      _
    $region171: #{forward.1} parent=1 // pred_check_branch
      %327 = sbr.rel (0) target = $region173
    $region172: #{forward.1} parent=1 // pred_region
      %328 = dma.done [#allocation24], 8192
    $region173: #{forward.1} parent=1 // pred_fallthru
      _
    // Predicated region
    $region174: #{forward.1} parent=1 // pred_check
      _
    $region175: #{forward.1} parent=1 // pred_check_branch
      %330 = sbr.rel (0) target = $region177
    $region176: #{forward.1} parent=1 // pred_region
      %331 = dma.done [#allocation24], 8192
    $region177: #{forward.1} parent=1 // pred_fallthru
      _
    // Predicated region
    $region178: #{forward.1} parent=1 // pred_check
      _
    $region179: #{forward.1} parent=1 // pred_check_branch
      %333 = sbr.rel (0) target = $region181
    $region180: #{forward.1} parent=1 // pred_region
      %334 = dma.done [#allocation27], 18432
    $region181: #{forward.1} parent=1 // pred_fallthru
      _
    // Predicated region
    $region182: #{forward.1} parent=1 // pred_check
      _
    $region183: #{forward.1} parent=1 // pred_check_branch
      %336 = sbr.rel (0) target = $region185
    $region184: #{forward.1} parent=1 // pred_region
      %337 = dma.done [#allocation27], 18432
    $region185: #{forward.1} parent=1 // pred_fallthru
      _
    %v338 = vld [vmem:[%s1] sm:$0x3]
    %v339 = vld [vmem:[%s3] sm:$0x3]
    %v340 = vld [vmem:[%s5] sm:$0x3]
    %v341 = vld [vmem:[#allocation3] sm:$0xff]
    %v342 = vld [vmem:[#allocation5] sm:$0x1]
    %v343 = vld [vmem:[#allocation7] sm:$0xff]
    %v344 = vld [vmem:[#allocation7 + $0x8] sm:$0xff]
    %v345 = vld [vmem:[#allocation7 + $0x10] sm:$0xff]
    %v346 = vld [vmem:[#allocation7 + $0x18] sm:$0xff]
    %v347 = vld [vmem:[#allocation7 + $0x20] sm:$0xff]
    %v348 = vld [vmem:[#allocation7 + $0x28] sm:$0xff]
    %v349 = vld [vmem:[#allocation7 + $0x30] sm:$0xff]
    %v350 = vld [vmem:[#allocation7 + $0x38] sm:$0xff]
    %v351 = vld [vmem:[#allocation7 + $0x40] sm:$0xff]
    %v352 = vld [vmem:[#allocation7 + $0x48] sm:$0xff]
    %v353 = vld [vmem:[#allocation7 + $0x50] sm:$0xff]
    %v354 = vld [vmem:[#allocation7 + $0x58] sm:$0xff]
    %v355 = vld [vmem:[#allocation7 + $0x60] sm:$0xff]
    %v356 = vld [vmem:[#allocation7 + $0x68] sm:$0xff]
    %v357 = vld [vmem:[#allocation7 + $0x70] sm:$0xff]
    %v358 = vld [vmem:[#allocation7 + $0x78] sm:$0xff]
    %v359 = vld [vmem:[#allocation8] sm:$0x1]
    %v361 = vlaneseq
    %v362 = vshrl.u32 %v361, 7
    %v363 = vsub.s32 0, %v362
    %v364 = vrot.slane %v342, %v363
    %vm366 = vcmask 64512
    %v368 = vsel %vm366, %v338, 0
    %370 = vmatprep.subr.mxu0 0.0
    %371 = vmatpush1.msra.mxu0 %v341
    %372 = vmatprep.subr.mxu0 0.0
    %373 = vmatpush1.msra.mxu0 0.0
    %374 = vmatprep.subr.mxu0 0.0
    %375 = vmatpush1.msra.mxu0 0.0
    %376 = vmatprep.subr.mxu0 0.0
    %377 = vmatpush1.msra.mxu0 0.0
    %378 = vmatprep.subr.mxu0 0.0
    %379 = vmatpush1.msra.mxu0 0.0
    %380 = vmatprep.subr.mxu0 0.0
    %381 = vmatpush1.msra.mxu0 0.0
    %382 = vmatprep.subr.mxu0 0.0
    %383 = vmatpush1.msra.mxu0 0.0
    %384 = vmatprep.subr.mxu0 0.0
    %385 = vmatpush1.msra.mxu0 0.0
    %386 = vmatprep.subr.mxu0 0.0
    %387 = vmatpush1.msra.mxu0 0.0
    %388 = vmatprep.subr.mxu0 0.0
    %389 = vmatpush1.msra.mxu0 0.0
    %390 = vmatprep.subr.mxu0 0.0
    %391 = vmatpush1.msra.mxu0 0.0
    %392 = vmatprep.subr.mxu0 0.0
    %393 = vmatpush1.msra.mxu0 0.0
    %394 = vmatprep.subr.mxu0 0.0
    %395 = vmatpush1.msra.mxu0 0.0
    %396 = vmatprep.subr.mxu0 0.0
    %397 = vmatpush1.msra.mxu0 0.0
    %398 = vmatprep.subr.mxu0 0.0
    %399 = vmatpush1.msra.mxu0 0.0
    %400 = vmatprep.subr.mxu0 0.0
    %401 = vmatpush1.msra.mxu0 0.0
    %402 = vmatprep.subr.mxu0 0.0
    %403 = vmatpush1.msra.mxu0 0.0
    %404 = vmatprep.subr.mxu0 0.0
    %405 = vmatpush1.msra.mxu0 0.0
    %406 = vmatprep.subr.mxu0 0.0
    %407 = vmatpush1.msra.mxu0 0.0
    %408 = vmatprep.subr.mxu0 0.0
    %409 = vmatpush1.msra.mxu0 0.0
    %410 = vmatprep.subr.mxu0 0.0
    %411 = vmatpush1.msra.mxu0 0.0
    %412 = vmatprep.subr.mxu0 0.0
    %413 = vmatpush1.msra.mxu0 0.0
    %414 = vmatprep.subr.mxu0 0.0
    %415 = vmatpush1.msra.mxu0 0.0
    %416 = vmatprep.subr.mxu0 0.0
    %417 = vmatpush1.msra.mxu0 0.0
    %418 = vmatprep.subr.mxu0 0.0
    %419 = vmatpush1.msra.mxu0 0.0
    %420 = vmatprep.subr.mxu0 0.0
    %421 = vmatpush1.msra.mxu0 0.0
    %422 = vmatprep.subr.mxu0 0.0
    %423 = vmatpush1.msra.mxu0 0.0
    %424 = vmatprep.subr.mxu0 0.0
    %425 = vmatpush1.msra.mxu0 0.0
    %426 = vmatprep.subr.mxu0 0.0
    %427 = vmatpush1.msra.mxu0 0.0
    %428 = vmatprep.subr.mxu0 0.0
    %429 = vmatpush1.msra.mxu0 0.0
    %430 = vmatprep.subr.mxu0 0.0
    %431 = vmatpush1.msra.mxu0 0.0
    %432 = vmatprep.subr.mxu0 0.0
    %433 = vmatpush1.msra.mxu0 0.0
    %434 = vmatprep.mubr.f32.mxu0 0.0
    %435 = vmatmul.mubr.f32.gmra.mrb[0].mxu0 %v368
    %v436 = vpop.f32.mrb[0].mxu0
    %v437 = vadd.f32 %v364, %v436
    %v438 = vpop.f32.mrb[0].mxu0
    %439 = vdwg.mxu0
    %v440 = vmax.f32 %v437, 0.0
    %v442 = vlaneseq
    %v443 = vshrl.u32 %v442, 7
    %v444 = vsub.s32 0, %v443
    %v445 = vrot.slane %v359, %v444
    %447 = vmatprep.subr.mxu0 0.0
    %448 = vmatpush1.msra.mxu0 %v343
    %449 = vmatprep.subr.mxu0 0.0
    %450 = vmatpush1.msra.mxu0 %v344
    %451 = vmatprep.subr.mxu0 0.0
    %452 = vmatpush1.msra.mxu0 %v345
    %453 = vmatprep.subr.mxu0 0.0
    %454 = vmatpush1.msra.mxu0 %v346
    %455 = vmatprep.subr.mxu0 0.0
    %456 = vmatpush1.msra.mxu0 %v347
    %457 = vmatprep.subr.mxu0 0.0
    %458 = vmatpush1.msra.mxu0 %v348
    %459 = vmatprep.subr.mxu0 0.0
    %460 = vmatpush1.msra.mxu0 %v349
    %461 = vmatprep.subr.mxu0 0.0
    %462 = vmatpush1.msra.mxu0 %v350
    %463 = vmatprep.subr.mxu0 0.0
    %464 = vmatpush1.msra.mxu0 %v351
    %465 = vmatprep.subr.mxu0 0.0
    %466 = vmatpush1.msra.mxu0 %v352
    %467 = vmatprep.subr.mxu0 0.0
    %468 = vmatpush1.msra.mxu0 %v353
    %469 = vmatprep.subr.mxu0 0.0
    %470 = vmatpush1.msra.mxu0 %v354
    %471 = vmatprep.subr.mxu0 0.0
    %472 = vmatpush1.msra.mxu0 %v355
    %473 = vmatprep.subr.mxu0 0.0
    %474 = vmatpush1.msra.mxu0 %v356
    %475 = vmatprep.subr.mxu0 0.0
    %476 = vmatpush1.msra.mxu0 %v357
    %477 = vmatprep.subr.mxu0 0.0
    %478 = vmatpush1.msra.mxu0 %v358
    %479 = vmatprep.subr.mxu0 0.0
    %480 = vmatpush1.msra.mxu0 0.0
    %481 = vmatprep.subr.mxu0 0.0
    %482 = vmatpush1.msra.mxu0 0.0
    %483 = vmatprep.subr.mxu0 0.0
    %484 = vmatpush1.msra.mxu0 0.0
    %485 = vmatprep.subr.mxu0 0.0
    %486 = vmatpush1.msra.mxu0 0.0
    %487 = vmatprep.subr.mxu0 0.0
    %488 = vmatpush1.msra.mxu0 0.0
    %489 = vmatprep.subr.mxu0 0.0
    %490 = vmatpush1.msra.mxu0 0.0
    %491 = vmatprep.subr.mxu0 0.0
    %492 = vmatpush1.msra.mxu0 0.0
    %493 = vmatprep.subr.mxu0 0.0
    %494 = vmatpush1.msra.mxu0 0.0
    %495 = vmatprep.subr.mxu0 0.0
    %496 = vmatpush1.msra.mxu0 0.0
    %497 = vmatprep.subr.mxu0 0.0
    %498 = vmatpush1.msra.mxu0 0.0
    %499 = vmatprep.subr.mxu0 0.0
    %500 = vmatpush1.msra.mxu0 0.0
    %501 = vmatprep.subr.mxu0 0.0
    %502 = vmatpush1.msra.mxu0 0.0
    %503 = vmatprep.subr.mxu0 0.0
    %504 = vmatpush1.msra.mxu0 0.0
    %505 = vmatprep.subr.mxu0 0.0
    %506 = vmatpush1.msra.mxu0 0.0
    %507 = vmatprep.subr.mxu0 0.0
    %508 = vmatpush1.msra.mxu0 0.0
    %509 = vmatprep.subr.mxu0 0.0
    %510 = vmatpush1.msra.mxu0 0.0
    %511 = vmatprep.mubr.f32.mxu0 0.0
    %512 = vmatmul.mubr.f32.gmra.mrb[0].mxu0 %v440
    %v513 = vpop.f32.mrb[0].mxu0
    %v514 = vadd.f32 %v445, %v513
    %v515 = vpop.f32.mrb[0].mxu0
    %516 = vdwg.mxu0
    %v517 = vmax.f32 %v514, 0.0
    %v518 = vld [vmem:[%s17] sm:$0xff]
    %v519 = vld [vmem:[%s17 + $0x8] sm:$0xff]
    %v520 = vld [vmem:[#allocation10] sm:$0x1]
    %v521 = vld [vmem:[#allocation11] sm:$0xff]
    %v522 = vld [vmem:[#allocation11 + $0x8] sm:$0xff]
    %v523 = vld [vmem:[#allocation11 + $0x10] sm:$0xff]
    %v524 = vld [vmem:[#allocation11 + $0x18] sm:$0xff]
    %v525 = vld [vmem:[#allocation11 + $0x20] sm:$0xff]
    %v526 = vld [vmem:[#allocation11 + $0x28] sm:$0xff]
    %v527 = vld [vmem:[#allocation11 + $0x30] sm:$0xff]
    %v528 = vld [vmem:[#allocation11 + $0x38] sm:$0xff]
    %v529 = vld [vmem:[#allocation11 + $0x40] sm:$0xff]
    %v530 = vld [vmem:[#allocation11 + $0x48] sm:$0xff]
    %v531 = vld [vmem:[#allocation11 + $0x50] sm:$0xff]
    %v532 = vld [vmem:[#allocation11 + $0x58] sm:$0xff]
    %v533 = vld [vmem:[#allocation11 + $0x60] sm:$0xff]
    %v534 = vld [vmem:[#allocation11 + $0x68] sm:$0xff]
    %v535 = vld [vmem:[#allocation11 + $0x70] sm:$0xff]
    %v536 = vld [vmem:[#allocation11 + $0x78] sm:$0xff]
    %v537 = vld [vmem:[#allocation13] sm:$0x1]
    %v539 = vlaneseq
    %v540 = vshrl.u32 %v539, 7
    %v541 = vsub.s32 0, %v540
    %v542 = vrot.slane %v520, %v541
    %vm544 = vcmask 130048
    %v546 = vsel %vm544, %v339, 0
    %548 = vmatprep.subr.mxu0 0.0
    %549 = vmatpush1.msra.mxu0 %v518
    %550 = vmatprep.subr.mxu0 0.0
    %551 = vmatpush1.msra.mxu0 %v519
    %552 = vmatprep.subr.mxu0 0.0
    %553 = vmatpush1.msra.mxu0 0.0
    %554 = vmatprep.subr.mxu0 0.0
    %555 = vmatpush1.msra.mxu0 0.0
    %556 = vmatprep.subr.mxu0 0.0
    %557 = vmatpush1.msra.mxu0 0.0
    %558 = vmatprep.subr.mxu0 0.0
    %559 = vmatpush1.msra.mxu0 0.0
    %560 = vmatprep.subr.mxu0 0.0
    %561 = vmatpush1.msra.mxu0 0.0
    %562 = vmatprep.subr.mxu0 0.0
    %563 = vmatpush1.msra.mxu0 0.0
    %564 = vmatprep.subr.mxu0 0.0
    %565 = vmatpush1.msra.mxu0 0.0
    %566 = vmatprep.subr.mxu0 0.0
    %567 = vmatpush1.msra.mxu0 0.0
    %568 = vmatprep.subr.mxu0 0.0
    %569 = vmatpush1.msra.mxu0 0.0
    %570 = vmatprep.subr.mxu0 0.0
    %571 = vmatpush1.msra.mxu0 0.0
    %572 = vmatprep.subr.mxu0 0.0
    %573 = vmatpush1.msra.mxu0 0.0
    %574 = vmatprep.subr.mxu0 0.0
    %575 = vmatpush1.msra.mxu0 0.0
    %576 = vmatprep.subr.mxu0 0.0
    %577 = vmatpush1.msra.mxu0 0.0
    %578 = vmatprep.subr.mxu0 0.0
    %579 = vmatpush1.msra.mxu0 0.0
    %580 = vmatprep.subr.mxu0 0.0
    %581 = vmatpush1.msra.mxu0 0.0
    %582 = vmatprep.subr.mxu0 0.0
    %583 = vmatpush1.msra.mxu0 0.0
    %584 = vmatprep.subr.mxu0 0.0
    %585 = vmatpush1.msra.mxu0 0.0
    %586 = vmatprep.subr.mxu0 0.0
    %587 = vmatpush1.msra.mxu0 0.0
    %588 = vmatprep.subr.mxu0 0.0
    %589 = vmatpush1.msra.mxu0 0.0
    %590 = vmatprep.subr.mxu0 0.0
    %591 = vmatpush1.msra.mxu0 0.0
    %592 = vmatprep.subr.mxu0 0.0
    %593 = vmatpush1.msra.mxu0 0.0
    %594 = vmatprep.subr.mxu0 0.0
    %595 = vmatpush1.msra.mxu0 0.0
    %596 = vmatprep.subr.mxu0 0.0
    %597 = vmatpush1.msra.mxu0 0.0
    %598 = vmatprep.subr.mxu0 0.0
    %599 = vmatpush1.msra.mxu0 0.0
    %600 = vmatprep.subr.mxu0 0.0
    %601 = vmatpush1.msra.mxu0 0.0
    %602 = vmatprep.subr.mxu0 0.0
    %603 = vmatpush1.msra.mxu0 0.0
    %604 = vmatprep.subr.mxu0 0.0
    %605 = vmatpush1.msra.mxu0 0.0
    %606 = vmatprep.subr.mxu0 0.0
    %607 = vmatpush1.msra.mxu0 0.0
    %608 = vmatprep.subr.mxu0 0.0
    %609 = vmatpush1.msra.mxu0 0.0
    %610 = vmatprep.subr.mxu0 0.0
    %611 = vmatpush1.msra.mxu0 0.0
    %612 = vmatprep.mubr.f32.mxu0 0.0
    %613 = vmatmul.mubr.f32.gmra.mrb[0].mxu0 %v546
    %v614 = vpop.f32.mrb[0].mxu0
    %v615 = vadd.f32 %v542, %v614
    %v616 = vpop.f32.mrb[0].mxu0
    %617 = vdwg.mxu0
    %v618 = vmax.f32 %v615, 0.0
    %v620 = vlaneseq
    %v621 = vshrl.u32 %v620, 7
    %v622 = vsub.s32 0, %v621
    %v623 = vrot.slane %v537, %v622
    %625 = vmatprep.subr.mxu0 0.0
    %626 = vmatpush1.msra.mxu0 %v521
    %627 = vmatprep.subr.mxu0 0.0
    %628 = vmatpush1.msra.mxu0 %v522
    %629 = vmatprep.subr.mxu0 0.0
    %630 = vmatpush1.msra.mxu0 %v523
    %631 = vmatprep.subr.mxu0 0.0
    %632 = vmatpush1.msra.mxu0 %v524
    %633 = vmatprep.subr.mxu0 0.0
    %634 = vmatpush1.msra.mxu0 %v525
    %635 = vmatprep.subr.mxu0 0.0
    %636 = vmatpush1.msra.mxu0 %v526
    %637 = vmatprep.subr.mxu0 0.0
    %638 = vmatpush1.msra.mxu0 %v527
    %639 = vmatprep.subr.mxu0 0.0
    %640 = vmatpush1.msra.mxu0 %v528
    %641 = vmatprep.subr.mxu0 0.0
    %642 = vmatpush1.msra.mxu0 %v529
    %643 = vmatprep.subr.mxu0 0.0
    %644 = vmatpush1.msra.mxu0 %v530
    %645 = vmatprep.subr.mxu0 0.0
    %646 = vmatpush1.msra.mxu0 %v531
    %647 = vmatprep.subr.mxu0 0.0
    %648 = vmatpush1.msra.mxu0 %v532
    %649 = vmatprep.subr.mxu0 0.0
    %650 = vmatpush1.msra.mxu0 %v533
    %651 = vmatprep.subr.mxu0 0.0
    %652 = vmatpush1.msra.mxu0 %v534
    %653 = vmatprep.subr.mxu0 0.0
    %654 = vmatpush1.msra.mxu0 %v535
    %655 = vmatprep.subr.mxu0 0.0
    %656 = vmatpush1.msra.mxu0 %v536
    %657 = vmatprep.subr.mxu0 0.0
    %658 = vmatpush1.msra.mxu0 0.0
    %659 = vmatprep.subr.mxu0 0.0
    %660 = vmatpush1.msra.mxu0 0.0
    %661 = vmatprep.subr.mxu0 0.0
    %662 = vmatpush1.msra.mxu0 0.0
    %663 = vmatprep.subr.mxu0 0.0
    %664 = vmatpush1.msra.mxu0 0.0
    %665 = vmatprep.subr.mxu0 0.0
    %666 = vmatpush1.msra.mxu0 0.0
    %667 = vmatprep.subr.mxu0 0.0
    %668 = vmatpush1.msra.mxu0 0.0
    %669 = vmatprep.subr.mxu0 0.0
    %670 = vmatpush1.msra.mxu0 0.0
    %671 = vmatprep.subr.mxu0 0.0
    %672 = vmatpush1.msra.mxu0 0.0
    %673 = vmatprep.subr.mxu0 0.0
    %674 = vmatpush1.msra.mxu0 0.0
    %675 = vmatprep.subr.mxu0 0.0
    %676 = vmatpush1.msra.mxu0 0.0
    %677 = vmatprep.subr.mxu0 0.0
    %678 = vmatpush1.msra.mxu0 0.0
    %679 = vmatprep.subr.mxu0 0.0
    %680 = vmatpush1.msra.mxu0 0.0
    %681 = vmatprep.subr.mxu0 0.0
    %682 = vmatpush1.msra.mxu0 0.0
    %683 = vmatprep.subr.mxu0 0.0
    %684 = vmatpush1.msra.mxu0 0.0
    %685 = vmatprep.subr.mxu0 0.0
    %686 = vmatpush1.msra.mxu0 0.0
    %687 = vmatprep.subr.mxu0 0.0
    %688 = vmatpush1.msra.mxu0 0.0
    %689 = vmatprep.mubr.f32.mxu0 0.0
    %690 = vmatmul.mubr.f32.gmra.mrb[0].mxu0 %v618
    %v691 = vpop.f32.mrb[0].mxu0
    %v692 = vadd.f32 %v623, %v691
    %v693 = vpop.f32.mrb[0].mxu0
    %694 = vdwg.mxu0
    %v695 = vmax.f32 %v692, 0.0
    %v696 = vld [vmem:[%s25] sm:$0xff]
    %v697 = vld [vmem:[%s25 + $0x8] sm:$0xff]
    %v698 = vld [vmem:[#allocation14] sm:$0x1]
    %v699 = vld [vmem:[#allocation16] sm:$0xff]
    %v700 = vld [vmem:[#allocation16 + $0x8] sm:$0xff]
    %v701 = vld [vmem:[#allocation16 + $0x10] sm:$0xff]
    %v702 = vld [vmem:[#allocation16 + $0x18] sm:$0xff]
    %v703 = vld [vmem:[#allocation16 + $0x20] sm:$0xff]
    %v704 = vld [vmem:[#allocation16 + $0x28] sm:$0xff]
    %v705 = vld [vmem:[#allocation16 + $0x30] sm:$0xff]
    %v706 = vld [vmem:[#allocation16 + $0x38] sm:$0xff]
    %v707 = vld [vmem:[#allocation16 + $0x40] sm:$0xff]
    %v708 = vld [vmem:[#allocation16 + $0x48] sm:$0xff]
    %v709 = vld [vmem:[#allocation16 + $0x50] sm:$0xff]
    %v710 = vld [vmem:[#allocation16 + $0x58] sm:$0xff]
    %v711 = vld [vmem:[#allocation16 + $0x60] sm:$0xff]
    %v712 = vld [vmem:[#allocation16 + $0x68] sm:$0xff]
    %v713 = vld [vmem:[#allocation16 + $0x70] sm:$0xff]
    %v714 = vld [vmem:[#allocation16 + $0x78] sm:$0xff]
    %v715 = vld [vmem:[#allocation17] sm:$0x1]
    %v717 = vlaneseq
    %v718 = vshrl.u32 %v717, 7
    %v719 = vsub.s32 0, %v718
    %v720 = vrot.slane %v698, %v719
    %v723 = vsel %vm544, %v340, 0
    %725 = vmatprep.subr.mxu0 0.0
    %726 = vmatpush1.msra.mxu0 %v696
    %727 = vmatprep.subr.mxu0 0.0
    %728 = vmatpush1.msra.mxu0 %v697
    %729 = vmatprep.subr.mxu0 0.0
    %730 = vmatpush1.msra.mxu0 0.0
    %731 = vmatprep.subr.mxu0 0.0
    %732 = vmatpush1.msra.mxu0 0.0
    %733 = vmatprep.subr.mxu0 0.0
    %734 = vmatpush1.msra.mxu0 0.0
    %735 = vmatprep.subr.mxu0 0.0
    %736 = vmatpush1.msra.mxu0 0.0
    %737 = vmatprep.subr.mxu0 0.0
    %738 = vmatpush1.msra.mxu0 0.0
    %739 = vmatprep.subr.mxu0 0.0
    %740 = vmatpush1.msra.mxu0 0.0
    %741 = vmatprep.subr.mxu0 0.0
    %742 = vmatpush1.msra.mxu0 0.0
    %743 = vmatprep.subr.mxu0 0.0
    %744 = vmatpush1.msra.mxu0 0.0
    %745 = vmatprep.subr.mxu0 0.0
    %746 = vmatpush1.msra.mxu0 0.0
    %747 = vmatprep.subr.mxu0 0.0
    %748 = vmatpush1.msra.mxu0 0.0
    %749 = vmatprep.subr.mxu0 0.0
    %750 = vmatpush1.msra.mxu0 0.0
    %751 = vmatprep.subr.mxu0 0.0
    %752 = vmatpush1.msra.mxu0 0.0
    %753 = vmatprep.subr.mxu0 0.0
    %754 = vmatpush1.msra.mxu0 0.0
    %755 = vmatprep.subr.mxu0 0.0
    %756 = vmatpush1.msra.mxu0 0.0
    %757 = vmatprep.subr.mxu0 0.0
    %758 = vmatpush1.msra.mxu0 0.0
    %759 = vmatprep.subr.mxu0 0.0
    %760 = vmatpush1.msra.mxu0 0.0
    %761 = vmatprep.subr.mxu0 0.0
    %762 = vmatpush1.msra.mxu0 0.0
    %763 = vmatprep.subr.mxu0 0.0
    %764 = vmatpush1.msra.mxu0 0.0
    %765 = vmatprep.subr.mxu0 0.0
    %766 = vmatpush1.msra.mxu0 0.0
    %767 = vmatprep.subr.mxu0 0.0
    %768 = vmatpush1.msra.mxu0 0.0
    %769 = vmatprep.subr.mxu0 0.0
    %770 = vmatpush1.msra.mxu0 0.0
    %771 = vmatprep.subr.mxu0 0.0
    %772 = vmatpush1.msra.mxu0 0.0
    %773 = vmatprep.subr.mxu0 0.0
    %774 = vmatpush1.msra.mxu0 0.0
    %775 = vmatprep.subr.mxu0 0.0
    %776 = vmatpush1.msra.mxu0 0.0
    %777 = vmatprep.subr.mxu0 0.0
    %778 = vmatpush1.msra.mxu0 0.0
    %779 = vmatprep.subr.mxu0 0.0
    %780 = vmatpush1.msra.mxu0 0.0
    %781 = vmatprep.subr.mxu0 0.0
    %782 = vmatpush1.msra.mxu0 0.0
    %783 = vmatprep.subr.mxu0 0.0
    %784 = vmatpush1.msra.mxu0 0.0
    %785 = vmatprep.subr.mxu0 0.0
    %786 = vmatpush1.msra.mxu0 0.0
    %787 = vmatprep.subr.mxu0 0.0
    %788 = vmatpush1.msra.mxu0 0.0
    %789 = vmatprep.mubr.f32.mxu0 0.0
    %790 = vmatmul.mubr.f32.gmra.mrb[0].mxu0 %v723
    %v791 = vpop.f32.mrb[0].mxu0
    %v792 = vadd.f32 %v720, %v791
    %v793 = vpop.f32.mrb[0].mxu0
    %794 = vdwg.mxu0
    %v795 = vmax.f32 %v792, 0.0
    %v797 = vlaneseq
    %v798 = vshrl.u32 %v797, 7
    %v799 = vsub.s32 0, %v798
    %v800 = vrot.slane %v715, %v799
    %802 = vmatprep.subr.mxu0 0.0
    %803 = vmatpush1.msra.mxu0 %v699
    %804 = vmatprep.subr.mxu0 0.0
    %805 = vmatpush1.msra.mxu0 %v700
    %806 = vmatprep.subr.mxu0 0.0
    %807 = vmatpush1.msra.mxu0 %v701
    %808 = vmatprep.subr.mxu0 0.0
    %809 = vmatpush1.msra.mxu0 %v702
    %810 = vmatprep.subr.mxu0 0.0
    %811 = vmatpush1.msra.mxu0 %v703
    %812 = vmatprep.subr.mxu0 0.0
    %813 = vmatpush1.msra.mxu0 %v704
    %814 = vmatprep.subr.mxu0 0.0
    %815 = vmatpush1.msra.mxu0 %v705
    %816 = vmatprep.subr.mxu0 0.0
    %817 = vmatpush1.msra.mxu0 %v706
    %818 = vmatprep.subr.mxu0 0.0
    %819 = vmatpush1.msra.mxu0 %v707
    %820 = vmatprep.subr.mxu0 0.0
    %821 = vmatpush1.msra.mxu0 %v708
    %822 = vmatprep.subr.mxu0 0.0
    %823 = vmatpush1.msra.mxu0 %v709
    %824 = vmatprep.subr.mxu0 0.0
    %825 = vmatpush1.msra.mxu0 %v710
    %826 = vmatprep.subr.mxu0 0.0
    %827 = vmatpush1.msra.mxu0 %v711
    %828 = vmatprep.subr.mxu0 0.0
    %829 = vmatpush1.msra.mxu0 %v712
    %830 = vmatprep.subr.mxu0 0.0
    %831 = vmatpush1.msra.mxu0 %v713
    %832 = vmatprep.subr.mxu0 0.0
    %833 = vmatpush1.msra.mxu0 %v714
    %834 = vmatprep.subr.mxu0 0.0
    %835 = vmatpush1.msra.mxu0 0.0
    %836 = vmatprep.subr.mxu0 0.0
    %837 = vmatpush1.msra.mxu0 0.0
    %838 = vmatprep.subr.mxu0 0.0
    %839 = vmatpush1.msra.mxu0 0.0
    %840 = vmatprep.subr.mxu0 0.0
    %841 = vmatpush1.msra.mxu0 0.0
    %842 = vmatprep.subr.mxu0 0.0
    %843 = vmatpush1.msra.mxu0 0.0
    %844 = vmatprep.subr.mxu0 0.0
    %845 = vmatpush1.msra.mxu0 0.0
    %846 = vmatprep.subr.mxu0 0.0
    %847 = vmatpush1.msra.mxu0 0.0
    %848 = vmatprep.subr.mxu0 0.0
    %849 = vmatpush1.msra.mxu0 0.0
    %850 = vmatprep.subr.mxu0 0.0
    %851 = vmatpush1.msra.mxu0 0.0
    %852 = vmatprep.subr.mxu0 0.0
    %853 = vmatpush1.msra.mxu0 0.0
    %854 = vmatprep.subr.mxu0 0.0
    %855 = vmatpush1.msra.mxu0 0.0
    %856 = vmatprep.subr.mxu0 0.0
    %857 = vmatpush1.msra.mxu0 0.0
    %858 = vmatprep.subr.mxu0 0.0
    %859 = vmatpush1.msra.mxu0 0.0
    %860 = vmatprep.subr.mxu0 0.0
    %861 = vmatpush1.msra.mxu0 0.0
    %862 = vmatprep.subr.mxu0 0.0
    %863 = vmatpush1.msra.mxu0 0.0
    %864 = vmatprep.subr.mxu0 0.0
    %865 = vmatpush1.msra.mxu0 0.0
    %866 = vmatprep.mubr.f32.mxu0 0.0
    %867 = vmatmul.mubr.f32.gmra.mrb[0].mxu0 %v795
    %v868 = vpop.f32.mrb[0].mxu0
    %v869 = vadd.f32 %v800, %v868
    %v870 = vpop.f32.mrb[0].mxu0
    %871 = vdwg.mxu0
    %v872 = vmax.f32 %v869, 0.0
    %v874 = vrot.slane %v695, 6
    %v877 = vrot.slane %v872, 4
    %vm879 = vcmask 1041408
    %v880 = vsel %vm879, %v517, %v874
    %vm881 = vcmask 1043456
    %v882 = vsel %vm881, %v880, %v877
    %v883 = vld [vmem:[%s7] sm:$0x3]
    %v884 = vld [vmem:[%s35] sm:$0xff]
    %v885 = vld [vmem:[%s37] sm:$0x1]
    %v887 = vlaneseq
    %v888 = vshrl.u32 %v887, 7
    %v889 = vsub.s32 0, %v888
    %v890 = vrot.slane %v885, %v889
    %v893 = vsel %vm366, %v883, 0
    %895 = vmatprep.subr.mxu0 0.0
    %896 = vmatpush1.msra.mxu0 %v884
    %897 = vmatprep.subr.mxu0 0.0
    %898 = vmatpush1.msra.mxu0 0.0
    %899 = vmatprep.subr.mxu0 0.0
    %900 = vmatpush1.msra.mxu0 0.0
    %901 = vmatprep.subr.mxu0 0.0
    %902 = vmatpush1.msra.mxu0 0.0
    %903 = vmatprep.subr.mxu0 0.0
    %904 = vmatpush1.msra.mxu0 0.0
    %905 = vmatprep.subr.mxu0 0.0
    %906 = vmatpush1.msra.mxu0 0.0
    %907 = vmatprep.subr.mxu0 0.0
    %908 = vmatpush1.msra.mxu0 0.0
    %909 = vmatprep.subr.mxu0 0.0
    %910 = vmatpush1.msra.mxu0 0.0
    %911 = vmatprep.subr.mxu0 0.0
    %912 = vmatpush1.msra.mxu0 0.0
    %913 = vmatprep.subr.mxu0 0.0
    %914 = vmatpush1.msra.mxu0 0.0
    %915 = vmatprep.subr.mxu0 0.0
    %916 = vmatpush1.msra.mxu0 0.0
    %917 = vmatprep.subr.mxu0 0.0
    %918 = vmatpush1.msra.mxu0 0.0
    %919 = vmatprep.subr.mxu0 0.0
    %920 = vmatpush1.msra.mxu0 0.0
    %921 = vmatprep.subr.mxu0 0.0
    %922 = vmatpush1.msra.mxu0 0.0
    %923 = vmatprep.subr.mxu0 0.0
    %924 = vmatpush1.msra.mxu0 0.0
    %925 = vmatprep.subr.mxu0 0.0
    %926 = vmatpush1.msra.mxu0 0.0
    %927 = vmatprep.subr.mxu0 0.0
    %928 = vmatpush1.msra.mxu0 0.0
    %929 = vmatprep.subr.mxu0 0.0
    %930 = vmatpush1.msra.mxu0 0.0
    %931 = vmatprep.subr.mxu0 0.0
    %932 = vmatpush1.msra.mxu0 0.0
    %933 = vmatprep.subr.mxu0 0.0
    %934 = vmatpush1.msra.mxu0 0.0
    %935 = vmatprep.subr.mxu0 0.0
    %936 = vmatpush1.msra.mxu0 0.0
    %937 = vmatprep.subr.mxu0 0.0
    %938 = vmatpush1.msra.mxu0 0.0
    %939 = vmatprep.subr.mxu0 0.0
    %940 = vmatpush1.msra.mxu0 0.0
    %941 = vmatprep.subr.mxu0 0.0
    %942 = vmatpush1.msra.mxu0 0.0
    %943 = vmatprep.subr.mxu0 0.0
    %944 = vmatpush1.msra.mxu0 0.0
    %945 = vmatprep.subr.mxu0 0.0
    %946 = vmatpush1.msra.mxu0 0.0
    %947 = vmatprep.subr.mxu0 0.0
    %948 = vmatpush1.msra.mxu0 0.0
    %949 = vmatprep.subr.mxu0 0.0
    %950 = vmatpush1.msra.mxu0 0.0
    %951 = vmatprep.subr.mxu0 0.0
    %952 = vmatpush1.msra.mxu0 0.0
    %953 = vmatprep.subr.mxu0 0.0
    %954 = vmatpush1.msra.mxu0 0.0
    %955 = vmatprep.subr.mxu0 0.0
    %956 = vmatpush1.msra.mxu0 0.0
    %957 = vmatprep.subr.mxu0 0.0
    %958 = vmatpush1.msra.mxu0 0.0
    %959 = vmatprep.mubr.f32.mxu0 0.0
    %960 = vmatmul.mubr.f32.gmra.mrb[0].mxu0 %v893
    %v961 = vpop.f32.mrb[0].mxu0
    %v962 = vadd.f32 %v890, %v961
    %v963 = vpop.f32.mrb[0].mxu0
    %964 = vdwg.mxu0
    %v965 = vld [vmem:[#allocation19] sm:$0xff]
    %v966 = vld [vmem:[#allocation19 + $0x8] sm:$0xff]
    %v967 = vld [vmem:[#allocation19 + $0x10] sm:$0xff]
    %v968 = vld [vmem:[#allocation19 + $0x18] sm:$0xff]
    %v969 = vld [vmem:[#allocation19 + $0x20] sm:$0xff]
    %v970 = vld [vmem:[#allocation19 + $0x28] sm:$0xff]
    %v971 = vld [vmem:[#allocation19 + $0x30] sm:$0xff]
    %v972 = vld [vmem:[#allocation19 + $0x38] sm:$0xff]
    %v973 = vld [vmem:[#allocation19 + $0x40] sm:$0xff]
    %v974 = vld [vmem:[#allocation19 + $0x48] sm:$0xff]
    %v975 = vld [vmem:[#allocation19 + $0x50] sm:$0xff]
    %v976 = vld [vmem:[#allocation19 + $0x58] sm:$0xff]
    %v977 = vld [vmem:[#allocation19 + $0x60] sm:$0xff]
    %v978 = vld [vmem:[#allocation19 + $0x68] sm:$0xff]
    %v979 = vld [vmem:[#allocation19 + $0x70] sm:$0xff]
    %v980 = vld [vmem:[#allocation19 + $0x78] sm:$0xff]
    %v982 = vrot.slane %v962, 6
    %v984 = vrot.slane %v962, 4
    %v986 = vsel %vm879, %v962, %v982
    %v987 = vsel %vm881, %v986, %v984
    %988 = vmatprep.subr.mxu0 0.0
    %989 = vmatpush1.msra.mxu0 %v965
    %990 = vmatprep.subr.mxu0 0.0
    %991 = vmatpush1.msra.mxu0 %v966
    %992 = vmatprep.subr.mxu0 0.0
    %993 = vmatpush1.msra.mxu0 %v967
    %994 = vmatprep.subr.mxu0 0.0
    %995 = vmatpush1.msra.mxu0 %v968
    %996 = vmatprep.subr.mxu0 0.0
    %997 = vmatpush1.msra.mxu0 %v969
    %998 = vmatprep.subr.mxu0 0.0
    %999 = vmatpush1.msra.mxu0 %v970
    %1000 = vmatprep.subr.mxu0 0.0
    %1001 = vmatpush1.msra.mxu0 %v971
    %1002 = vmatprep.subr.mxu0 0.0
    %1003 = vmatpush1.msra.mxu0 %v972
    %1004 = vmatprep.subr.mxu0 0.0
    %1005 = vmatpush1.msra.mxu0 %v973
    %1006 = vmatprep.subr.mxu0 0.0
    %1007 = vmatpush1.msra.mxu0 %v974
    %1008 = vmatprep.subr.mxu0 0.0
    %1009 = vmatpush1.msra.mxu0 %v975
    %1010 = vmatprep.subr.mxu0 0.0
    %1011 = vmatpush1.msra.mxu0 %v976
    %1012 = vmatprep.subr.mxu0 0.0
    %1013 = vmatpush1.msra.mxu0 %v977
    %1014 = vmatprep.subr.mxu0 0.0
    %1015 = vmatpush1.msra.mxu0 %v978
    %1016 = vmatprep.subr.mxu0 0.0
    %1017 = vmatpush1.msra.mxu0 %v979
    %1018 = vmatprep.subr.mxu0 0.0
    %1019 = vmatpush1.msra.mxu0 %v980
    %1020 = vmatprep.subr.mxu0 0.0
    %1021 = vmatpush1.msra.mxu0 0.0
    %1022 = vmatprep.subr.mxu0 0.0
    %1023 = vmatpush1.msra.mxu0 0.0
    %1024 = vmatprep.subr.mxu0 0.0
    %1025 = vmatpush1.msra.mxu0 0.0
    %1026 = vmatprep.subr.mxu0 0.0
    %1027 = vmatpush1.msra.mxu0 0.0
    %1028 = vmatprep.subr.mxu0 0.0
    %1029 = vmatpush1.msra.mxu0 0.0
    %1030 = vmatprep.subr.mxu0 0.0
    %1031 = vmatpush1.msra.mxu0 0.0
    %1032 = vmatprep.subr.mxu0 0.0
    %1033 = vmatpush1.msra.mxu0 0.0
    %1034 = vmatprep.subr.mxu0 0.0
    %1035 = vmatpush1.msra.mxu0 0.0
    %1036 = vmatprep.subr.mxu0 0.0
    %1037 = vmatpush1.msra.mxu0 0.0
    %1038 = vmatprep.subr.mxu0 0.0
    %1039 = vmatpush1.msra.mxu0 0.0
    %1040 = vmatprep.subr.mxu0 0.0
    %1041 = vmatpush1.msra.mxu0 0.0
    %1042 = vmatprep.subr.mxu0 0.0
    %1043 = vmatpush1.msra.mxu0 0.0
    %1044 = vmatprep.subr.mxu0 0.0
    %1045 = vmatpush1.msra.mxu0 0.0
    %1046 = vmatprep.subr.mxu0 0.0
    %1047 = vmatpush1.msra.mxu0 0.0
    %1048 = vmatprep.subr.mxu0 0.0
    %1049 = vmatpush1.msra.mxu0 0.0
    %1050 = vmatprep.subr.mxu0 0.0
    %1051 = vmatpush1.msra.mxu0 0.0
    %1052 = vmatprep.mubr.f32.mxu0 0.0
    %1053 = vmatmul.mubr.f32.gmra.mrb[0].mxu0 %v882
    %v1054 = vpop.f32.mrb[0].mxu0
    %v1055 = vadd.f32 %v987, %v1054
    %v1056 = vpop.f32.mrb[0].mxu0
    %1057 = vdwg.mxu0
    %1058 = vst [vmem:[#allocation2] sm:$0x3f] %v1055
    %v1059 = vld [vmem:[#allocation2] ss:$3 sm:$0x3]
    %s1060 = scalar_lea.vmem [#allocation2], 1
    %v1061 = vld [vmem:[%s1060] ss:$3 sm:$0x3]
    %s1062 = scalar_lea.vmem [#allocation2], 2
    %v1063 = vld [vmem:[%s1062] ss:$3 sm:$0x3]
    %v1065 = vrot.slane %v1061, 6
    %v1068 = vrot.slane %v1063, 4
    %v1070 = vsel %vm879, %v1059, %v1065
    %v1071 = vsel %vm881, %v1070, %v1068
    %v1072 = vld [vmem:[#allocation22] sm:$0xff]
    %v1073 = vld [vmem:[#allocation22 + $0x8] sm:$0xff]
    %v1074 = vld [vmem:[#allocation22 + $0x10] sm:$0xff]
    %v1075 = vld [vmem:[#allocation22 + $0x18] sm:$0xff]
    %v1076 = vld [vmem:[#allocation22 + $0x20] sm:$0xff]
    %v1077 = vld [vmem:[#allocation22 + $0x28] sm:$0xff]
    %v1078 = vld [vmem:[#allocation22 + $0x30] sm:$0xff]
    %v1079 = vld [vmem:[#allocation22 + $0x38] sm:$0xff]
    %v1080 = vld [vmem:[#allocation22 + $0x40] sm:$0xff]
    %v1081 = vld [vmem:[#allocation22 + $0x48] sm:$0xff]
    %v1082 = vld [vmem:[#allocation22 + $0x50] sm:$0xff]
    %v1083 = vld [vmem:[#allocation22 + $0x58] sm:$0xff]
    %v1084 = vld [vmem:[#allocation22 + $0x60] sm:$0xff]
    %v1085 = vld [vmem:[#allocation22 + $0x68] sm:$0xff]
    %v1086 = vld [vmem:[#allocation22 + $0x70] sm:$0xff]
    %v1087 = vld [vmem:[#allocation22 + $0x78] sm:$0xff]
    %v1088 = vld [vmem:[#allocation22 + $0x80] sm:$0xff]
    %v1089 = vld [vmem:[#allocation22 + $0x88] sm:$0xff]
    %v1090 = vld [vmem:[#allocation22 + $0x90] sm:$0xff]
    %v1091 = vld [vmem:[#allocation22 + $0x98] sm:$0xff]
    %v1092 = vld [vmem:[#allocation22 + $0xa0] sm:$0xff]
    %v1093 = vld [vmem:[#allocation22 + $0xa8] sm:$0xff]
    %v1094 = vld [vmem:[#allocation22 + $0xb0] sm:$0xff]
    %v1095 = vld [vmem:[#allocation22 + $0xb8] sm:$0xff]
    %v1096 = vld [vmem:[#allocation22 + $0xc0] sm:$0xff]
    %v1097 = vld [vmem:[#allocation22 + $0xc8] sm:$0xff]
    %v1098 = vld [vmem:[#allocation22 + $0xd0] sm:$0xff]
    %v1099 = vld [vmem:[#allocation22 + $0xd8] sm:$0xff]
    %v1100 = vld [vmem:[#allocation22 + $0xe0] sm:$0xff]
    %v1101 = vld [vmem:[#allocation22 + $0xe8] sm:$0xff]
    %v1102 = vld [vmem:[#allocation22 + $0xf0] sm:$0xff]
    %v1103 = vld [vmem:[#allocation22 + $0xf8] sm:$0xff]
    %v1104 = vld [vmem:[#allocation22 + $0x100] sm:$0xff]
    %v1105 = vld [vmem:[#allocation22 + $0x108] sm:$0xff]
    %v1106 = vld [vmem:[#allocation22 + $0x110] sm:$0xff]
    %v1107 = vld [vmem:[#allocation22 + $0x118] sm:$0xff]
    %v1108 = vld [vmem:[#allocation22 + $0x120] sm:$0xff]
    %v1109 = vld [vmem:[#allocation22 + $0x128] sm:$0xff]
    %v1110 = vld [vmem:[#allocation22 + $0x130] sm:$0xff]
    %v1111 = vld [vmem:[#allocation22 + $0x138] sm:$0xff]
    %v1112 = vld [vmem:[#allocation22 + $0x140] sm:$0xff]
    %v1113 = vld [vmem:[#allocation22 + $0x148] sm:$0xff]
    %v1114 = vld [vmem:[#allocation22 + $0x150] sm:$0xff]
    %v1115 = vld [vmem:[#allocation22 + $0x158] sm:$0xff]
    %v1116 = vld [vmem:[#allocation22 + $0x160] sm:$0xff]
    %v1117 = vld [vmem:[#allocation22 + $0x168] sm:$0xff]
    %v1118 = vld [vmem:[#allocation22 + $0x170] sm:$0xff]
    %v1119 = vld [vmem:[#allocation22 + $0x178] sm:$0xff]
    %v1120 = vld [vmem:[#allocation22 + $0x180] sm:$0xff]
    %v1121 = vld [vmem:[#allocation22 + $0x188] sm:$0xff]
    %v1122 = vld [vmem:[#allocation22 + $0x190] sm:$0xff]
    %v1123 = vld [vmem:[#allocation22 + $0x198] sm:$0xff]
    %v1124 = vld [vmem:[#allocation22 + $0x1a0] sm:$0xff]
    %v1125 = vld [vmem:[#allocation22 + $0x1a8] sm:$0xff]
    %v1126 = vld [vmem:[#allocation22 + $0x1b0] sm:$0xff]
    %v1127 = vld [vmem:[#allocation22 + $0x1b8] sm:$0xff]
    %v1128 = vld [vmem:[#allocation22 + $0x1c0] sm:$0xff]
    %v1129 = vld [vmem:[#allocation22 + $0x1c8] sm:$0xff]
    %v1130 = vld [vmem:[#allocation22 + $0x1d0] sm:$0xff]
    %v1131 = vld [vmem:[#allocation22 + $0x1d8] sm:$0xff]
    %v1132 = vld [vmem:[#allocation22 + $0x1e0] sm:$0xff]
    %v1133 = vld [vmem:[#allocation22 + $0x1e8] sm:$0xff]
    %v1134 = vld [vmem:[#allocation22 + $0x1f0] sm:$0xff]
    %v1135 = vld [vmem:[#allocation22 + $0x1f8] sm:$0xff]
    %v1136 = vld [vmem:[#allocation20] sm:$0xff]
    %v1137 = vld [vmem:[#allocation20 + $0x8] sm:$0xff]
    %v1138 = vld [vmem:[#allocation20 + $0x10] sm:$0xff]
    %v1139 = vld [vmem:[#allocation20 + $0x18] sm:$0xff]
    %v1140 = vld [vmem:[#allocation20 + $0x20] sm:$0xff]
    %v1141 = vld [vmem:[#allocation20 + $0x28] sm:$0xff]
    %v1142 = vld [vmem:[#allocation20 + $0x30] sm:$0xff]
    %v1143 = vld [vmem:[#allocation20 + $0x38] sm:$0xff]
    %v1144 = vld [vmem:[#allocation20 + $0x40] sm:$0xff]
    %v1145 = vld [vmem:[#allocation20 + $0x48] sm:$0xff]
    %v1146 = vld [vmem:[#allocation20 + $0x50] sm:$0xff]
    %v1147 = vld [vmem:[#allocation20 + $0x58] sm:$0xff]
    %v1148 = vld [vmem:[#allocation20 + $0x60] sm:$0xff]
    %v1149 = vld [vmem:[#allocation20 + $0x68] sm:$0xff]
    %v1150 = vld [vmem:[#allocation20 + $0x70] sm:$0xff]
    %v1151 = vld [vmem:[#allocation20 + $0x78] sm:$0xff]
    %v1152 = vld [vmem:[#allocation20 + $0x80] sm:$0xff]
    %v1153 = vld [vmem:[#allocation20 + $0x88] sm:$0xff]
    %v1154 = vld [vmem:[#allocation20 + $0x90] sm:$0xff]
    %v1155 = vld [vmem:[#allocation20 + $0x98] sm:$0xff]
    %v1156 = vld [vmem:[#allocation20 + $0xa0] sm:$0xff]
    %v1157 = vld [vmem:[#allocation20 + $0xa8] sm:$0xff]
    %v1158 = vld [vmem:[#allocation20 + $0xb0] sm:$0xff]
    %v1159 = vld [vmem:[#allocation20 + $0xb8] sm:$0xff]
    %v1160 = vld [vmem:[#allocation20 + $0xc0] sm:$0xff]
    %v1161 = vld [vmem:[#allocation20 + $0xc8] sm:$0xff]
    %v1162 = vld [vmem:[#allocation20 + $0xd0] sm:$0xff]
    %v1163 = vld [vmem:[#allocation20 + $0xd8] sm:$0xff]
    %v1164 = vld [vmem:[#allocation20 + $0xe0] sm:$0xff]
    %v1165 = vld [vmem:[#allocation20 + $0xe8] sm:$0xff]
    %v1166 = vld [vmem:[#allocation20 + $0xf0] sm:$0xff]
    %v1167 = vld [vmem:[#allocation20 + $0xf8] sm:$0xff]
    %v1168 = vld [vmem:[#allocation20 + $0x100] sm:$0xff]
    %v1169 = vld [vmem:[#allocation20 + $0x108] sm:$0xff]
    %v1170 = vld [vmem:[#allocation20 + $0x110] sm:$0xff]
    %v1171 = vld [vmem:[#allocation20 + $0x118] sm:$0xff]
    %v1172 = vld [vmem:[#allocation20 + $0x120] sm:$0xff]
    %v1173 = vld [vmem:[#allocation20 + $0x128] sm:$0xff]
    %v1174 = vld [vmem:[#allocation20 + $0x130] sm:$0xff]
    %v1175 = vld [vmem:[#allocation20 + $0x138] sm:$0xff]
    %v1176 = vld [vmem:[#allocation20 + $0x140] sm:$0xff]
    %v1177 = vld [vmem:[#allocation20 + $0x148] sm:$0xff]
    %v1178 = vld [vmem:[#allocation20 + $0x150] sm:$0xff]
    %v1179 = vld [vmem:[#allocation20 + $0x158] sm:$0xff]
    %v1180 = vld [vmem:[#allocation20 + $0x160] sm:$0xff]
    %v1181 = vld [vmem:[#allocation20 + $0x168] sm:$0xff]
    %v1182 = vld [vmem:[#allocation20 + $0x170] sm:$0xff]
    %v1183 = vld [vmem:[#allocation20 + $0x178] sm:$0xff]
    %v1184 = vld [vmem:[#allocation20 + $0x180] sm:$0xff]
    %v1185 = vld [vmem:[#allocation20 + $0x188] sm:$0xff]
    %v1186 = vld [vmem:[#allocation20 + $0x190] sm:$0xff]
    %v1187 = vld [vmem:[#allocation20 + $0x198] sm:$0xff]
    %v1188 = vld [vmem:[#allocation20 + $0x1a0] sm:$0xff]
    %v1189 = vld [vmem:[#allocation20 + $0x1a8] sm:$0xff]
    %v1190 = vld [vmem:[#allocation20 + $0x1b0] sm:$0xff]
    %v1191 = vld [vmem:[#allocation20 + $0x1b8] sm:$0xff]
    %v1192 = vld [vmem:[#allocation20 + $0x1c0] sm:$0xff]
    %v1193 = vld [vmem:[#allocation20 + $0x1c8] sm:$0xff]
    %v1194 = vld [vmem:[#allocation20 + $0x1d0] sm:$0xff]
    %v1195 = vld [vmem:[#allocation20 + $0x1d8] sm:$0xff]
    %v1196 = vld [vmem:[#allocation20 + $0x1e0] sm:$0xff]
    %v1197 = vld [vmem:[#allocation20 + $0x1e8] sm:$0xff]
    %v1198 = vld [vmem:[#allocation20 + $0x1f0] sm:$0xff]
    %v1199 = vld [vmem:[#allocation20 + $0x1f8] sm:$0xff]
    %v1200 = vld [vmem:[%s43] sm:$0xf]
    %v1202 = vlaneseq
    %v1203 = vshrl.u32 %v1202, 7
    %v1204 = vsub.s32 0, %v1203
    %v1205 = vrot.slane %v1200, %v1204
    %v1206 = vlaneseq
    %v1207 = vshrl.u32 %v1206, 7
    %v1208 = vsub.s32 1, %v1207
    %v1209 = vrot.slane %v1200, %v1208
    %v1210 = vlaneseq
    %v1211 = vshrl.u32 %v1210, 7
    %v1212 = vsub.s32 2, %v1211
    %v1213 = vrot.slane %v1200, %v1212
    %v1214 = vlaneseq
    %v1215 = vshrl.u32 %v1214, 7
    %v1216 = vsub.s32 3, %v1215
    %v1217 = vrot.slane %v1200, %v1216
    %1222 = vmatprep.subr.mxu0 %v1137
    %1223 = vmatpush1.msra.mxu0 %v1136
    %1224 = vmatprep.subr.mxu0 %v1141
    %1225 = vmatpush1.msra.mxu0 %v1140
    %1226 = vmatprep.subr.mxu0 %v1145
    %1227 = vmatpush1.msra.mxu0 %v1144
    %1228 = vmatprep.subr.mxu0 %v1149
    %1229 = vmatpush1.msra.mxu0 %v1148
    %1230 = vmatprep.subr.mxu0 %v1153
    %1231 = vmatpush1.msra.mxu0 %v1152
    %1232 = vmatprep.subr.mxu0 %v1157
    %1233 = vmatpush1.msra.mxu0 %v1156
    %1234 = vmatprep.subr.mxu0 %v1161
    %1235 = vmatpush1.msra.mxu0 %v1160
    %1236 = vmatprep.subr.mxu0 %v1165
    %1237 = vmatpush1.msra.mxu0 %v1164
    %1238 = vmatprep.subr.mxu0 %v1169
    %1239 = vmatpush1.msra.mxu0 %v1168
    %1240 = vmatprep.subr.mxu0 %v1173
    %1241 = vmatpush1.msra.mxu0 %v1172
    %1242 = vmatprep.subr.mxu0 %v1177
    %1243 = vmatpush1.msra.mxu0 %v1176
    %1244 = vmatprep.subr.mxu0 %v1181
    %1245 = vmatpush1.msra.mxu0 %v1180
    %1246 = vmatprep.subr.mxu0 %v1185
    %1247 = vmatpush1.msra.mxu0 %v1184
    %1248 = vmatprep.subr.mxu0 %v1189
    %1249 = vmatpush1.msra.mxu0 %v1188
    %1250 = vmatprep.subr.mxu0 %v1193
    %1251 = vmatpush1.msra.mxu0 %v1192
    %1252 = vmatprep.subr.mxu0 %v1197
    %1253 = vmatpush1.msra.mxu0 %v1196
    %1254 = vmatprep.subr.mxu0 0.0
    %1255 = vmatpush1.msra.mxu0 0.0
    %1256 = vmatprep.subr.mxu0 0.0
    %1257 = vmatpush1.msra.mxu0 0.0
    %1258 = vmatprep.subr.mxu0 0.0
    %1259 = vmatpush1.msra.mxu0 0.0
    %1260 = vmatprep.subr.mxu0 0.0
    %1261 = vmatpush1.msra.mxu0 0.0
    %1262 = vmatprep.subr.mxu0 0.0
    %1263 = vmatpush1.msra.mxu0 0.0
    %1264 = vmatprep.subr.mxu0 0.0
    %1265 = vmatpush1.msra.mxu0 0.0
    %1266 = vmatprep.subr.mxu0 0.0
    %1267 = vmatpush1.msra.mxu0 0.0
    %1268 = vmatprep.subr.mxu0 0.0
    %1269 = vmatpush1.msra.mxu0 0.0
    %1270 = vmatprep.subr.mxu0 0.0
    %1271 = vmatpush1.msra.mxu0 0.0
    %1272 = vmatprep.subr.mxu0 0.0
    %1273 = vmatpush1.msra.mxu0 0.0
    %1274 = vmatprep.subr.mxu0 0.0
    %1275 = vmatpush1.msra.mxu0 0.0
    %1276 = vmatprep.subr.mxu0 0.0
    %1277 = vmatpush1.msra.mxu0 0.0
    %1278 = vmatprep.subr.mxu0 0.0
    %1279 = vmatpush1.msra.mxu0 0.0
    %1280 = vmatprep.subr.mxu0 0.0
    %1281 = vmatpush1.msra.mxu0 0.0
    %1282 = vmatprep.subr.mxu0 0.0
    %1283 = vmatpush1.msra.mxu0 0.0
    %1284 = vmatprep.subr.mxu0 0.0
    %1285 = vmatpush1.msra.mxu0 0.0
    %1286 = vmatprep.mubr.f32.mxu0 0.0
    %1287 = vmatmul.mubr.f32.gmra.mrb[0].mxu0 %v1071
    %v1288 = vpop.f32.mrb[0].mxu0
    %v1289 = vadd.f32 %v1205, %v1288
    %v1290 = vpop.f32.mrb[0].mxu0
    %v1291 = vadd.f32 %v1209, %v1290
    %1292 = vdwg.mxu0
    %1293 = vmatprep.subr.mxu0 %v1139
    %1294 = vmatpush1.msra.mxu0 %v1138
    %1295 = vmatprep.subr.mxu0 %v1143
    %1296 = vmatpush1.msra.mxu0 %v1142
    %1297 = vmatprep.subr.mxu0 %v1147
    %1298 = vmatpush1.msra.mxu0 %v1146
    %1299 = vmatprep.subr.mxu0 %v1151
    %1300 = vmatpush1.msra.mxu0 %v1150
    %1301 = vmatprep.subr.mxu0 %v1155
    %1302 = vmatpush1.msra.mxu0 %v1154
    %1303 = vmatprep.subr.mxu0 %v1159
    %1304 = vmatpush1.msra.mxu0 %v1158
    %1305 = vmatprep.subr.mxu0 %v1163
    %1306 = vmatpush1.msra.mxu0 %v1162
    %1307 = vmatprep.subr.mxu0 %v1167
    %1308 = vmatpush1.msra.mxu0 %v1166
    %1309 = vmatprep.subr.mxu0 %v1171
    %1310 = vmatpush1.msra.mxu0 %v1170
    %1311 = vmatprep.subr.mxu0 %v1175
    %1312 = vmatpush1.msra.mxu0 %v1174
    %1313 = vmatprep.subr.mxu0 %v1179
    %1314 = vmatpush1.msra.mxu0 %v1178
    %1315 = vmatprep.subr.mxu0 %v1183
    %1316 = vmatpush1.msra.mxu0 %v1182
    %1317 = vmatprep.subr.mxu0 %v1187
    %1318 = vmatpush1.msra.mxu0 %v1186
    %1319 = vmatprep.subr.mxu0 %v1191
    %1320 = vmatpush1.msra.mxu0 %v1190
    %1321 = vmatprep.subr.mxu0 %v1195
    %1322 = vmatpush1.msra.mxu0 %v1194
    %1323 = vmatprep.subr.mxu0 %v1199
    %1324 = vmatpush1.msra.mxu0 %v1198
    %1325 = vmatprep.subr.mxu0 0.0
    %1326 = vmatpush1.msra.mxu0 0.0
    %1327 = vmatprep.subr.mxu0 0.0
    %1328 = vmatpush1.msra.mxu0 0.0
    %1329 = vmatprep.subr.mxu0 0.0
    %1330 = vmatpush1.msra.mxu0 0.0
    %1331 = vmatprep.subr.mxu0 0.0
    %1332 = vmatpush1.msra.mxu0 0.0
    %1333 = vmatprep.subr.mxu0 0.0
    %1334 = vmatpush1.msra.mxu0 0.0
    %1335 = vmatprep.subr.mxu0 0.0
    %1336 = vmatpush1.msra.mxu0 0.0
    %1337 = vmatprep.subr.mxu0 0.0
    %1338 = vmatpush1.msra.mxu0 0.0
    %1339 = vmatprep.subr.mxu0 0.0
    %1340 = vmatpush1.msra.mxu0 0.0
    %1341 = vmatprep.subr.mxu0 0.0
    %1342 = vmatpush1.msra.mxu0 0.0
    %1343 = vmatprep.subr.mxu0 0.0
    %1344 = vmatpush1.msra.mxu0 0.0
    %1345 = vmatprep.subr.mxu0 0.0
    %1346 = vmatpush1.msra.mxu0 0.0
    %1347 = vmatprep.subr.mxu0 0.0
    %1348 = vmatpush1.msra.mxu0 0.0
    %1349 = vmatprep.subr.mxu0 0.0
    %1350 = vmatpush1.msra.mxu0 0.0
    %1351 = vmatprep.subr.mxu0 0.0
    %1352 = vmatpush1.msra.mxu0 0.0
    %1353 = vmatprep.subr.mxu0 0.0
    %1354 = vmatpush1.msra.mxu0 0.0
    %1355 = vmatprep.subr.mxu0 0.0
    %1356 = vmatpush1.msra.mxu0 0.0
    %1357 = vmatprep.mubr.f32.mxu0 0.0
    %1358 = vmatmul.mubr.f32.gmra.mrb[0].mxu0 %v1071
    %v1359 = vpop.f32.mrb[0].mxu0
    %v1360 = vadd.f32 %v1213, %v1359
    %v1361 = vpop.f32.mrb[0].mxu0
    %v1362 = vadd.f32 %v1217, %v1361
    %1363 = vdwg.mxu0
    %1364 = vmatprep.subr.mxu0 %v1073
    %1365 = vmatpush1.msra.mxu0 %v1072
    %1366 = vmatprep.subr.mxu0 %v1077
    %1367 = vmatpush1.msra.mxu0 %v1076
    %1368 = vmatprep.subr.mxu0 %v1081
    %1369 = vmatpush1.msra.mxu0 %v1080
    %1370 = vmatprep.subr.mxu0 %v1085
    %1371 = vmatpush1.msra.mxu0 %v1084
    %1372 = vmatprep.subr.mxu0 %v1089
    %1373 = vmatpush1.msra.mxu0 %v1088
    %1374 = vmatprep.subr.mxu0 %v1093
    %1375 = vmatpush1.msra.mxu0 %v1092
    %1376 = vmatprep.subr.mxu0 %v1097
    %1377 = vmatpush1.msra.mxu0 %v1096
    %1378 = vmatprep.subr.mxu0 %v1101
    %1379 = vmatpush1.msra.mxu0 %v1100
    %1380 = vmatprep.subr.mxu0 %v1105
    %1381 = vmatpush1.msra.mxu0 %v1104
    %1382 = vmatprep.subr.mxu0 %v1109
    %1383 = vmatpush1.msra.mxu0 %v1108
    %1384 = vmatprep.subr.mxu0 %v1113
    %1385 = vmatpush1.msra.mxu0 %v1112
    %1386 = vmatprep.subr.mxu0 %v1117
    %1387 = vmatpush1.msra.mxu0 %v1116
    %1388 = vmatprep.subr.mxu0 %v1121
    %1389 = vmatpush1.msra.mxu0 %v1120
    %1390 = vmatprep.subr.mxu0 %v1125
    %1391 = vmatpush1.msra.mxu0 %v1124
    %1392 = vmatprep.subr.mxu0 %v1129
    %1393 = vmatpush1.msra.mxu0 %v1128
    %1394 = vmatprep.subr.mxu0 %v1133
    %1395 = vmatpush1.msra.mxu0 %v1132
    %1396 = vmatprep.subr.mxu0 0.0
    %1397 = vmatpush1.msra.mxu0 0.0
    %1398 = vmatprep.subr.mxu0 0.0
    %1399 = vmatpush1.msra.mxu0 0.0
    %1400 = vmatprep.subr.mxu0 0.0
    %1401 = vmatpush1.msra.mxu0 0.0
    %1402 = vmatprep.subr.mxu0 0.0
    %1403 = vmatpush1.msra.mxu0 0.0
    %1404 = vmatprep.subr.mxu0 0.0
    %1405 = vmatpush1.msra.mxu0 0.0
    %1406 = vmatprep.subr.mxu0 0.0
    %1407 = vmatpush1.msra.mxu0 0.0
    %1408 = vmatprep.subr.mxu0 0.0
    %1409 = vmatpush1.msra.mxu0 0.0
    %1410 = vmatprep.subr.mxu0 0.0
    %1411 = vmatpush1.msra.mxu0 0.0
    %1412 = vmatprep.subr.mxu0 0.0
    %1413 = vmatpush1.msra.mxu0 0.0
    %1414 = vmatprep.subr.mxu0 0.0
    %1415 = vmatpush1.msra.mxu0 0.0
    %1416 = vmatprep.subr.mxu0 0.0
    %1417 = vmatpush1.msra.mxu0 0.0
    %1418 = vmatprep.subr.mxu0 0.0
    %1419 = vmatpush1.msra.mxu0 0.0
    %1420 = vmatprep.subr.mxu0 0.0
    %1421 = vmatpush1.msra.mxu0 0.0
    %1422 = vmatprep.subr.mxu0 0.0
    %1423 = vmatpush1.msra.mxu0 0.0
    %1424 = vmatprep.subr.mxu0 0.0
    %1425 = vmatpush1.msra.mxu0 0.0
    %1426 = vmatprep.subr.mxu0 0.0
    %1427 = vmatpush1.msra.mxu0 0.0
    %1428 = vmatprep.mubr.f32.mxu0 0.0
    %1429 = vmatmul.mubr.f32.gmra.mrb[0].mxu0 0.0
    %v1430 = vpop.f32.mrb[0].mxu0
    %v1431 = vadd.f32 0.0, %v1430
    %v1432 = vpop.f32.mrb[0].mxu0
    %v1433 = vadd.f32 0.0, %v1432
    %1434 = vdwg.mxu0
    %1435 = vmatprep.subr.mxu0 %v1075
    %1436 = vmatpush1.msra.mxu0 %v1074
    %1437 = vmatprep.subr.mxu0 %v1079
    %1438 = vmatpush1.msra.mxu0 %v1078
    %1439 = vmatprep.subr.mxu0 %v1083
    %1440 = vmatpush1.msra.mxu0 %v1082
    %1441 = vmatprep.subr.mxu0 %v1087
    %1442 = vmatpush1.msra.mxu0 %v1086
    %1443 = vmatprep.subr.mxu0 %v1091
    %1444 = vmatpush1.msra.mxu0 %v1090
    %1445 = vmatprep.subr.mxu0 %v1095
    %1446 = vmatpush1.msra.mxu0 %v1094
    %1447 = vmatprep.subr.mxu0 %v1099
    %1448 = vmatpush1.msra.mxu0 %v1098
    %1449 = vmatprep.subr.mxu0 %v1103
    %1450 = vmatpush1.msra.mxu0 %v1102
    %1451 = vmatprep.subr.mxu0 %v1107
    %1452 = vmatpush1.msra.mxu0 %v1106
    %1453 = vmatprep.subr.mxu0 %v1111
    %1454 = vmatpush1.msra.mxu0 %v1110
    %1455 = vmatprep.subr.mxu0 %v1115
    %1456 = vmatpush1.msra.mxu0 %v1114
    %1457 = vmatprep.subr.mxu0 %v1119
    %1458 = vmatpush1.msra.mxu0 %v1118
    %1459 = vmatprep.subr.mxu0 %v1123
    %1460 = vmatpush1.msra.mxu0 %v1122
    %1461 = vmatprep.subr.mxu0 %v1127
    %1462 = vmatpush1.msra.mxu0 %v1126
    %1463 = vmatprep.subr.mxu0 %v1131
    %1464 = vmatpush1.msra.mxu0 %v1130
    %1465 = vmatprep.subr.mxu0 %v1135
    %1466 = vmatpush1.msra.mxu0 %v1134
    %1467 = vmatprep.subr.mxu0 0.0
    %1468 = vmatpush1.msra.mxu0 0.0
    %1469 = vmatprep.subr.mxu0 0.0
    %1470 = vmatpush1.msra.mxu0 0.0
    %1471 = vmatprep.subr.mxu0 0.0
    %1472 = vmatpush1.msra.mxu0 0.0
    %1473 = vmatprep.subr.mxu0 0.0
    %1474 = vmatpush1.msra.mxu0 0.0
    %1475 = vmatprep.subr.mxu0 0.0
    %1476 = vmatpush1.msra.mxu0 0.0
    %1477 = vmatprep.subr.mxu0 0.0
    %1478 = vmatpush1.msra.mxu0 0.0
    %1479 = vmatprep.subr.mxu0 0.0
    %1480 = vmatpush1.msra.mxu0 0.0
    %1481 = vmatprep.subr.mxu0 0.0
    %1482 = vmatpush1.msra.mxu0 0.0
    %1483 = vmatprep.subr.mxu0 0.0
    %1484 = vmatpush1.msra.mxu0 0.0
    %1485 = vmatprep.subr.mxu0 0.0
    %1486 = vmatpush1.msra.mxu0 0.0
    %1487 = vmatprep.subr.mxu0 0.0
    %1488 = vmatpush1.msra.mxu0 0.0
    %1489 = vmatprep.subr.mxu0 0.0
    %1490 = vmatpush1.msra.mxu0 0.0
    %1491 = vmatprep.subr.mxu0 0.0
    %1492 = vmatpush1.msra.mxu0 0.0
    %1493 = vmatprep.subr.mxu0 0.0
    %1494 = vmatpush1.msra.mxu0 0.0
    %1495 = vmatprep.subr.mxu0 0.0
    %1496 = vmatpush1.msra.mxu0 0.0
    %1497 = vmatprep.subr.mxu0 0.0
    %1498 = vmatpush1.msra.mxu0 0.0
    %1499 = vmatprep.mubr.f32.mxu0 0.0
    %1500 = vmatmul.mubr.f32.gmra.mrb[0].mxu0 0.0
    %v1501 = vpop.f32.mrb[0].mxu0
    %v1502 = vadd.f32 0.0, %v1501
    %v1503 = vpop.f32.mrb[0].mxu0
    %v1504 = vadd.f32 0.0, %v1503
    %1505 = vdwg.mxu0
    %v1506 = vadd.f32 %v1289, %v1431
    %v1507 = vadd.f32 %v1291, %v1433
    %v1508 = vadd.f32 %v1360, %v1502
    %v1509 = vadd.f32 %v1362, %v1504
    %v1510 = vsub.f32 0.0, %v1506
    %v1511 = vmul.f32 %v1510, 1.442695
    %v1512 = vpow.pop %v1511
    %v1513 = vadd.f32 %v1512, 1.0
    %v1514 = vrcp.pop %v1513
    %v1515 = vmul.f32 1.0, %v1514
    %v1516 = vsub.f32 0.0, %v1507
    %v1517 = vmul.f32 %v1516, 1.442695
    %v1518 = vpow.pop %v1517
    %v1519 = vadd.f32 %v1518, 1.0
    %v1520 = vrcp.pop %v1519
    %v1521 = vmul.f32 1.0, %v1520
    %v1522 = vtanh.pop %v1508
    %v1523 = vsub.f32 0.0, %v1509
    %v1524 = vmul.f32 %v1523, 1.442695
    %v1525 = vpow.pop %v1524
    %v1526 = vadd.f32 %v1525, 1.0
    %v1527 = vrcp.pop %v1526
    %v1528 = vmul.f32 1.0, %v1527
    %v1529 = vmul.f32 %v1521, 0.0
    %v1530 = vmul.f32 %v1515, %v1522
    %v1531 = vadd.f32 %v1529, %v1530
    %v1532 = vtanh.pop %v1531
    %v1533 = vmul.f32 %v1528, %v1532
    %1534 = vmatprep.subr.mxu0 %v1073
    %1535 = vmatpush1.msra.mxu0 %v1072
    %1536 = vmatprep.subr.mxu0 %v1077
    %1537 = vmatpush1.msra.mxu0 %v1076
    %1538 = vmatprep.subr.mxu0 %v1081
    %1539 = vmatpush1.msra.mxu0 %v1080
    %1540 = vmatprep.subr.mxu0 %v1085
    %1541 = vmatpush1.msra.mxu0 %v1084
    %1542 = vmatprep.subr.mxu0 %v1089
    %1543 = vmatpush1.msra.mxu0 %v1088
    %1544 = vmatprep.subr.mxu0 %v1093
    %1545 = vmatpush1.msra.mxu0 %v1092
    %1546 = vmatprep.subr.mxu0 %v1097
    %1547 = vmatpush1.msra.mxu0 %v1096
    %1548 = vmatprep.subr.mxu0 %v1101
    %1549 = vmatpush1.msra.mxu0 %v1100
    %1550 = vmatprep.subr.mxu0 %v1105
    %1551 = vmatpush1.msra.mxu0 %v1104
    %1552 = vmatprep.subr.mxu0 %v1109
    %1553 = vmatpush1.msra.mxu0 %v1108
    %1554 = vmatprep.subr.mxu0 %v1113
    %1555 = vmatpush1.msra.mxu0 %v1112
    %1556 = vmatprep.subr.mxu0 %v1117
    %1557 = vmatpush1.msra.mxu0 %v1116
    %1558 = vmatprep.subr.mxu0 %v1121
    %1559 = vmatpush1.msra.mxu0 %v1120
    %1560 = vmatprep.subr.mxu0 %v1125
    %1561 = vmatpush1.msra.mxu0 %v1124
    %1562 = vmatprep.subr.mxu0 %v1129
    %1563 = vmatpush1.msra.mxu0 %v1128
    %1564 = vmatprep.subr.mxu0 %v1133
    %1565 = vmatpush1.msra.mxu0 %v1132
    %1566 = vmatprep.subr.mxu0 0.0
    %1567 = vmatpush1.msra.mxu0 0.0
    %1568 = vmatprep.subr.mxu0 0.0
    %1569 = vmatpush1.msra.mxu0 0.0
    %1570 = vmatprep.subr.mxu0 0.0
    %1571 = vmatpush1.msra.mxu0 0.0
    %1572 = vmatprep.subr.mxu0 0.0
    %1573 = vmatpush1.msra.mxu0 0.0
    %1574 = vmatprep.subr.mxu0 0.0
    %1575 = vmatpush1.msra.mxu0 0.0
    %1576 = vmatprep.subr.mxu0 0.0
    %1577 = vmatpush1.msra.mxu0 0.0
    %1578 = vmatprep.subr.mxu0 0.0
    %1579 = vmatpush1.msra.mxu0 0.0
    %1580 = vmatprep.subr.mxu0 0.0
    %1581 = vmatpush1.msra.mxu0 0.0
    %1582 = vmatprep.subr.mxu0 0.0
    %1583 = vmatpush1.msra.mxu0 0.0
    %1584 = vmatprep.subr.mxu0 0.0
    %1585 = vmatpush1.msra.mxu0 0.0
    %1586 = vmatprep.subr.mxu0 0.0
    %1587 = vmatpush1.msra.mxu0 0.0
    %1588 = vmatprep.subr.mxu0 0.0
    %1589 = vmatpush1.msra.mxu0 0.0
    %1590 = vmatprep.subr.mxu0 0.0
    %1591 = vmatpush1.msra.mxu0 0.0
    %1592 = vmatprep.subr.mxu0 0.0
    %1593 = vmatpush1.msra.mxu0 0.0
    %1594 = vmatprep.subr.mxu0 0.0
    %1595 = vmatpush1.msra.mxu0 0.0
    %1596 = vmatprep.subr.mxu0 0.0
    %1597 = vmatpush1.msra.mxu0 0.0
    %1598 = vmatprep.mubr.f32.mxu0 0.0
    %1599 = vmatmul.mubr.f32.gmra.mrb[0].mxu0 %v1533
    %v1600 = vpop.f32.mrb[0].mxu0
    %v1601 = vadd.f32 0.0, %v1600
    %v1602 = vpop.f32.mrb[0].mxu0
    %v1603 = vadd.f32 0.0, %v1602
    %1604 = vdwg.mxu0
    %1605 = vmatprep.subr.mxu0 %v1075
    %1606 = vmatpush1.msra.mxu0 %v1074
    %1607 = vmatprep.subr.mxu0 %v1079
    %1608 = vmatpush1.msra.mxu0 %v1078
    %1609 = vmatprep.subr.mxu0 %v1083
    %1610 = vmatpush1.msra.mxu0 %v1082
    %1611 = vmatprep.subr.mxu0 %v1087
    %1612 = vmatpush1.msra.mxu0 %v1086
    %1613 = vmatprep.subr.mxu0 %v1091
    %1614 = vmatpush1.msra.mxu0 %v1090
    %1615 = vmatprep.subr.mxu0 %v1095
    %1616 = vmatpush1.msra.mxu0 %v1094
    %1617 = vmatprep.subr.mxu0 %v1099
    %1618 = vmatpush1.msra.mxu0 %v1098
    %1619 = vmatprep.subr.mxu0 %v1103
    %1620 = vmatpush1.msra.mxu0 %v1102
    %1621 = vmatprep.subr.mxu0 %v1107
    %1622 = vmatpush1.msra.mxu0 %v1106
    %1623 = vmatprep.subr.mxu0 %v1111
    %1624 = vmatpush1.msra.mxu0 %v1110
    %1625 = vmatprep.subr.mxu0 %v1115
    %1626 = vmatpush1.msra.mxu0 %v1114
    %1627 = vmatprep.subr.mxu0 %v1119
    %1628 = vmatpush1.msra.mxu0 %v1118
    %1629 = vmatprep.subr.mxu0 %v1123
    %1630 = vmatpush1.msra.mxu0 %v1122
    %1631 = vmatprep.subr.mxu0 %v1127
    %1632 = vmatpush1.msra.mxu0 %v1126
    %1633 = vmatprep.subr.mxu0 %v1131
    %1634 = vmatpush1.msra.mxu0 %v1130
    %1635 = vmatprep.subr.mxu0 %v1135
    %1636 = vmatpush1.msra.mxu0 %v1134
    %1637 = vmatprep.subr.mxu0 0.0
    %1638 = vmatpush1.msra.mxu0 0.0
    %1639 = vmatprep.subr.mxu0 0.0
    %1640 = vmatpush1.msra.mxu0 0.0
    %1641 = vmatprep.subr.mxu0 0.0
    %1642 = vmatpush1.msra.mxu0 0.0
    %1643 = vmatprep.subr.mxu0 0.0
    %1644 = vmatpush1.msra.mxu0 0.0
    %1645 = vmatprep.subr.mxu0 0.0
    %1646 = vmatpush1.msra.mxu0 0.0
    %1647 = vmatprep.subr.mxu0 0.0
    %1648 = vmatpush1.msra.mxu0 0.0
    %1649 = vmatprep.subr.mxu0 0.0
    %1650 = vmatpush1.msra.mxu0 0.0
    %1651 = vmatprep.subr.mxu0 0.0
    %1652 = vmatpush1.msra.mxu0 0.0
    %1653 = vmatprep.subr.mxu0 0.0
    %1654 = vmatpush1.msra.mxu0 0.0
    %1655 = vmatprep.subr.mxu0 0.0
    %1656 = vmatpush1.msra.mxu0 0.0
    %1657 = vmatprep.subr.mxu0 0.0
    %1658 = vmatpush1.msra.mxu0 0.0
    %1659 = vmatprep.subr.mxu0 0.0
    %1660 = vmatpush1.msra.mxu0 0.0
    %1661 = vmatprep.subr.mxu0 0.0
    %1662 = vmatpush1.msra.mxu0 0.0
    %1663 = vmatprep.subr.mxu0 0.0
    %1664 = vmatpush1.msra.mxu0 0.0
    %1665 = vmatprep.subr.mxu0 0.0
    %1666 = vmatpush1.msra.mxu0 0.0
    %1667 = vmatprep.subr.mxu0 0.0
    %1668 = vmatpush1.msra.mxu0 0.0
    %1669 = vmatprep.mubr.f32.mxu0 0.0
    %1670 = vmatmul.mubr.f32.gmra.mrb[0].mxu0 %v1533
    %v1671 = vpop.f32.mrb[0].mxu0
    %v1672 = vadd.f32 0.0, %v1671
    %v1673 = vpop.f32.mrb[0].mxu0
    %v1674 = vadd.f32 0.0, %v1673
    %1675 = vdwg.mxu0
    %v1680 = vrot.slane %v1601, 6
    %v1681 = vrot.slane %v1603, 6
    %v1682 = vrot.slane %v1672, 6
    %v1683 = vrot.slane %v1674, 6
    %v1688 = vadd.f32 %v1289, %v1680
    %v1689 = vadd.f32 %v1291, %v1681
    %v1690 = vadd.f32 %v1360, %v1682
    %v1691 = vadd.f32 %v1362, %v1683
    %v1692 = vsub.f32 0.0, %v1688
    %v1693 = vmul.f32 %v1692, 1.442695
    %v1694 = vpow.pop %v1693
    %v1695 = vadd.f32 %v1694, 1.0
    %v1696 = vrcp.pop %v1695
    %v1697 = vmul.f32 1.0, %v1696
    %v1698 = vsub.f32 0.0, %v1689
    %v1699 = vmul.f32 %v1698, 1.442695
    %v1700 = vpow.pop %v1699
    %v1701 = vadd.f32 %v1700, 1.0
    %v1702 = vrcp.pop %v1701
    %v1703 = vmul.f32 1.0, %v1702
    %v1704 = vtanh.pop %v1690
    %v1705 = vsub.f32 0.0, %v1691
    %v1706 = vmul.f32 %v1705, 1.442695
    %v1707 = vpow.pop %v1706
    %v1708 = vadd.f32 %v1707, 1.0
    %v1709 = vrcp.pop %v1708
    %v1710 = vmul.f32 1.0, %v1709
    %v1712 = vrot.slane %v1531, 6
    %v1714 = vmul.f32 %v1703, %v1712
    %v1715 = vmul.f32 %v1697, %v1704
    %v1716 = vadd.f32 %v1714, %v1715
    %v1717 = vtanh.pop %v1716
    %v1718 = vmul.f32 %v1710, %v1717
    %v1720 = vrot.slane %v1718, 2
    %1722 = vmatprep.subr.mxu0 %v1073
    %1723 = vmatpush1.msra.mxu0 %v1072
    %1724 = vmatprep.subr.mxu0 %v1077
    %1725 = vmatpush1.msra.mxu0 %v1076
    %1726 = vmatprep.subr.mxu0 %v1081
    %1727 = vmatpush1.msra.mxu0 %v1080
    %1728 = vmatprep.subr.mxu0 %v1085
    %1729 = vmatpush1.msra.mxu0 %v1084
    %1730 = vmatprep.subr.mxu0 %v1089
    %1731 = vmatpush1.msra.mxu0 %v1088
    %1732 = vmatprep.subr.mxu0 %v1093
    %1733 = vmatpush1.msra.mxu0 %v1092
    %1734 = vmatprep.subr.mxu0 %v1097
    %1735 = vmatpush1.msra.mxu0 %v1096
    %1736 = vmatprep.subr.mxu0 %v1101
    %1737 = vmatpush1.msra.mxu0 %v1100
    %1738 = vmatprep.subr.mxu0 %v1105
    %1739 = vmatpush1.msra.mxu0 %v1104
    %1740 = vmatprep.subr.mxu0 %v1109
    %1741 = vmatpush1.msra.mxu0 %v1108
    %1742 = vmatprep.subr.mxu0 %v1113
    %1743 = vmatpush1.msra.mxu0 %v1112
    %1744 = vmatprep.subr.mxu0 %v1117
    %1745 = vmatpush1.msra.mxu0 %v1116
    %1746 = vmatprep.subr.mxu0 %v1121
    %1747 = vmatpush1.msra.mxu0 %v1120
    %1748 = vmatprep.subr.mxu0 %v1125
    %1749 = vmatpush1.msra.mxu0 %v1124
    %1750 = vmatprep.subr.mxu0 %v1129
    %1751 = vmatpush1.msra.mxu0 %v1128
    %1752 = vmatprep.subr.mxu0 %v1133
    %1753 = vmatpush1.msra.mxu0 %v1132
    %1754 = vmatprep.subr.mxu0 0.0
    %1755 = vmatpush1.msra.mxu0 0.0
    %1756 = vmatprep.subr.mxu0 0.0
    %1757 = vmatpush1.msra.mxu0 0.0
    %1758 = vmatprep.subr.mxu0 0.0
    %1759 = vmatpush1.msra.mxu0 0.0
    %1760 = vmatprep.subr.mxu0 0.0
    %1761 = vmatpush1.msra.mxu0 0.0
    %1762 = vmatprep.subr.mxu0 0.0
    %1763 = vmatpush1.msra.mxu0 0.0
    %1764 = vmatprep.subr.mxu0 0.0
    %1765 = vmatpush1.msra.mxu0 0.0
    %1766 = vmatprep.subr.mxu0 0.0
    %1767 = vmatpush1.msra.mxu0 0.0
    %1768 = vmatprep.subr.mxu0 0.0
    %1769 = vmatpush1.msra.mxu0 0.0
    %1770 = vmatprep.subr.mxu0 0.0
    %1771 = vmatpush1.msra.mxu0 0.0
    %1772 = vmatprep.subr.mxu0 0.0
    %1773 = vmatpush1.msra.mxu0 0.0
    %1774 = vmatprep.subr.mxu0 0.0
    %1775 = vmatpush1.msra.mxu0 0.0
    %1776 = vmatprep.subr.mxu0 0.0
    %1777 = vmatpush1.msra.mxu0 0.0
    %1778 = vmatprep.subr.mxu0 0.0
    %1779 = vmatpush1.msra.mxu0 0.0
    %1780 = vmatprep.subr.mxu0 0.0
    %1781 = vmatpush1.msra.mxu0 0.0
    %1782 = vmatprep.subr.mxu0 0.0
    %1783 = vmatpush1.msra.mxu0 0.0
    %1784 = vmatprep.subr.mxu0 0.0
    %1785 = vmatpush1.msra.mxu0 0.0
    %1786 = vmatprep.mubr.f32.mxu0 0.0
    %1787 = vmatmul.mubr.f32.gmra.mrb[0].mxu0 %v1720
    %v1788 = vpop.f32.mrb[0].mxu0
    %v1789 = vadd.f32 0.0, %v1788
    %v1790 = vpop.f32.mrb[0].mxu0
    %v1791 = vadd.f32 0.0, %v1790
    %1792 = vdwg.mxu0
    %1793 = vmatprep.subr.mxu0 %v1075
    %1794 = vmatpush1.msra.mxu0 %v1074
    %1795 = vmatprep.subr.mxu0 %v1079
    %1796 = vmatpush1.msra.mxu0 %v1078
    %1797 = vmatprep.subr.mxu0 %v1083
    %1798 = vmatpush1.msra.mxu0 %v1082
    %1799 = vmatprep.subr.mxu0 %v1087
    %1800 = vmatpush1.msra.mxu0 %v1086
    %1801 = vmatprep.subr.mxu0 %v1091
    %1802 = vmatpush1.msra.mxu0 %v1090
    %1803 = vmatprep.subr.mxu0 %v1095
    %1804 = vmatpush1.msra.mxu0 %v1094
    %1805 = vmatprep.subr.mxu0 %v1099
    %1806 = vmatpush1.msra.mxu0 %v1098
    %1807 = vmatprep.subr.mxu0 %v1103
    %1808 = vmatpush1.msra.mxu0 %v1102
    %1809 = vmatprep.subr.mxu0 %v1107
    %1810 = vmatpush1.msra.mxu0 %v1106
    %1811 = vmatprep.subr.mxu0 %v1111
    %1812 = vmatpush1.msra.mxu0 %v1110
    %1813 = vmatprep.subr.mxu0 %v1115
    %1814 = vmatpush1.msra.mxu0 %v1114
    %1815 = vmatprep.subr.mxu0 %v1119
    %1816 = vmatpush1.msra.mxu0 %v1118
    %1817 = vmatprep.subr.mxu0 %v1123
    %1818 = vmatpush1.msra.mxu0 %v1122
    %1819 = vmatprep.subr.mxu0 %v1127
    %1820 = vmatpush1.msra.mxu0 %v1126
    %1821 = vmatprep.subr.mxu0 %v1131
    %1822 = vmatpush1.msra.mxu0 %v1130
    %1823 = vmatprep.subr.mxu0 %v1135
    %1824 = vmatpush1.msra.mxu0 %v1134
    %1825 = vmatprep.subr.mxu0 0.0
    %1826 = vmatpush1.msra.mxu0 0.0
    %1827 = vmatprep.subr.mxu0 0.0
    %1828 = vmatpush1.msra.mxu0 0.0
    %1829 = vmatprep.subr.mxu0 0.0
    %1830 = vmatpush1.msra.mxu0 0.0
    %1831 = vmatprep.subr.mxu0 0.0
    %1832 = vmatpush1.msra.mxu0 0.0
    %1833 = vmatprep.subr.mxu0 0.0
    %1834 = vmatpush1.msra.mxu0 0.0
    %1835 = vmatprep.subr.mxu0 0.0
    %1836 = vmatpush1.msra.mxu0 0.0
    %1837 = vmatprep.subr.mxu0 0.0
    %1838 = vmatpush1.msra.mxu0 0.0
    %1839 = vmatprep.subr.mxu0 0.0
    %1840 = vmatpush1.msra.mxu0 0.0
    %1841 = vmatprep.subr.mxu0 0.0
    %1842 = vmatpush1.msra.mxu0 0.0
    %1843 = vmatprep.subr.mxu0 0.0
    %1844 = vmatpush1.msra.mxu0 0.0
    %1845 = vmatprep.subr.mxu0 0.0
    %1846 = vmatpush1.msra.mxu0 0.0
    %1847 = vmatprep.subr.mxu0 0.0
    %1848 = vmatpush1.msra.mxu0 0.0
    %1849 = vmatprep.subr.mxu0 0.0
    %1850 = vmatpush1.msra.mxu0 0.0
    %1851 = vmatprep.subr.mxu0 0.0
    %1852 = vmatpush1.msra.mxu0 0.0
    %1853 = vmatprep.subr.mxu0 0.0
    %1854 = vmatpush1.msra.mxu0 0.0
    %1855 = vmatprep.subr.mxu0 0.0
    %1856 = vmatpush1.msra.mxu0 0.0
    %1857 = vmatprep.mubr.f32.mxu0 0.0
    %1858 = vmatmul.mubr.f32.gmra.mrb[0].mxu0 %v1720
    %v1859 = vpop.f32.mrb[0].mxu0
    %v1860 = vadd.f32 0.0, %v1859
    %v1861 = vpop.f32.mrb[0].mxu0
    %v1862 = vadd.f32 0.0, %v1861
    %1863 = vdwg.mxu0
    %v1868 = vrot.slane %v1789, 4
    %v1869 = vrot.slane %v1791, 4
    %v1870 = vrot.slane %v1860, 4
    %v1871 = vrot.slane %v1862, 4
    %v1876 = vadd.f32 %v1289, %v1868
    %v1877 = vadd.f32 %v1291, %v1869
    %v1878 = vadd.f32 %v1360, %v1870
    %v1879 = vadd.f32 %v1362, %v1871
    %v1880 = vsub.f32 0.0, %v1876
    %v1881 = vmul.f32 %v1880, 1.442695
    %v1882 = vpow.pop %v1881
    %v1883 = vadd.f32 %v1882, 1.0
    %v1884 = vrcp.pop %v1883
    %v1885 = vmul.f32 1.0, %v1884
    %v1886 = vsub.f32 0.0, %v1877
    %v1887 = vmul.f32 %v1886, 1.442695
    %v1888 = vpow.pop %v1887
    %v1889 = vadd.f32 %v1888, 1.0
    %v1890 = vrcp.pop %v1889
    %v1891 = vmul.f32 1.0, %v1890
    %v1892 = vtanh.pop %v1878
    %v1893 = vsub.f32 0.0, %v1879
    %v1894 = vmul.f32 %v1893, 1.442695
    %v1895 = vpow.pop %v1894
    %v1896 = vadd.f32 %v1895, 1.0
    %v1897 = vrcp.pop %v1896
    %v1898 = vmul.f32 1.0, %v1897
    %v1900 = vrot.slane %v1716, 6
    %v1902 = vmul.f32 %v1891, %v1900
    %v1903 = vmul.f32 %v1885, %v1892
    %v1904 = vadd.f32 %v1902, %v1903
    %v1905 = vtanh.pop %v1904
    %v1906 = vmul.f32 %v1898, %v1905
    %v1907 = vsel %vm879, %v1533, %v1718
    %v1908 = vsel %vm881, %v1907, %v1906
    %v1909 = vld [vmem:[#allocation25] sm:$0xff]
    %v1910 = vld [vmem:[#allocation25 + $0x8] sm:$0xff]
    %v1911 = vld [vmem:[#allocation25 + $0x10] sm:$0xff]
    %v1912 = vld [vmem:[#allocation25 + $0x18] sm:$0xff]
    %v1913 = vld [vmem:[#allocation25 + $0x20] sm:$0xff]
    %v1914 = vld [vmem:[#allocation25 + $0x28] sm:$0xff]
    %v1915 = vld [vmem:[#allocation25 + $0x30] sm:$0xff]
    %v1916 = vld [vmem:[#allocation25 + $0x38] sm:$0xff]
    %v1917 = vld [vmem:[#allocation25 + $0x40] sm:$0xff]
    %v1918 = vld [vmem:[#allocation25 + $0x48] sm:$0xff]
    %v1919 = vld [vmem:[#allocation25 + $0x50] sm:$0xff]
    %v1920 = vld [vmem:[#allocation25 + $0x58] sm:$0xff]
    %v1921 = vld [vmem:[#allocation25 + $0x60] sm:$0xff]
    %v1922 = vld [vmem:[#allocation25 + $0x68] sm:$0xff]
    %v1923 = vld [vmem:[#allocation25 + $0x70] sm:$0xff]
    %v1924 = vld [vmem:[#allocation25 + $0x78] sm:$0xff]
    %v1925 = vld [vmem:[#allocation25 + $0x80] sm:$0xff]
    %v1926 = vld [vmem:[#allocation25 + $0x88] sm:$0xff]
    %v1927 = vld [vmem:[#allocation25 + $0x90] sm:$0xff]
    %v1928 = vld [vmem:[#allocation25 + $0x98] sm:$0xff]
    %v1929 = vld [vmem:[#allocation25 + $0xa0] sm:$0xff]
    %v1930 = vld [vmem:[#allocation25 + $0xa8] sm:$0xff]
    %v1931 = vld [vmem:[#allocation25 + $0xb0] sm:$0xff]
    %v1932 = vld [vmem:[#allocation25 + $0xb8] sm:$0xff]
    %v1933 = vld [vmem:[#allocation25 + $0xc0] sm:$0xff]
    %v1934 = vld [vmem:[#allocation25 + $0xc8] sm:$0xff]
    %v1935 = vld [vmem:[#allocation25 + $0xd0] sm:$0xff]
    %v1936 = vld [vmem:[#allocation25 + $0xd8] sm:$0xff]
    %v1937 = vld [vmem:[#allocation25 + $0xe0] sm:$0xff]
    %v1938 = vld [vmem:[#allocation25 + $0xe8] sm:$0xff]
    %v1939 = vld [vmem:[#allocation25 + $0xf0] sm:$0xff]
    %v1940 = vld [vmem:[#allocation25 + $0xf8] sm:$0xff]
    %v1941 = vld [vmem:[#allocation25 + $0x100] sm:$0xff]
    %v1942 = vld [vmem:[#allocation25 + $0x108] sm:$0xff]
    %v1943 = vld [vmem:[#allocation25 + $0x110] sm:$0xff]
    %v1944 = vld [vmem:[#allocation25 + $0x118] sm:$0xff]
    %v1945 = vld [vmem:[#allocation25 + $0x120] sm:$0xff]
    %v1946 = vld [vmem:[#allocation25 + $0x128] sm:$0xff]
    %v1947 = vld [vmem:[#allocation25 + $0x130] sm:$0xff]
    %v1948 = vld [vmem:[#allocation25 + $0x138] sm:$0xff]
    %v1949 = vld [vmem:[#allocation25 + $0x140] sm:$0xff]
    %v1950 = vld [vmem:[#allocation25 + $0x148] sm:$0xff]
    %v1951 = vld [vmem:[#allocation25 + $0x150] sm:$0xff]
    %v1952 = vld [vmem:[#allocation25 + $0x158] sm:$0xff]
    %v1953 = vld [vmem:[#allocation25 + $0x160] sm:$0xff]
    %v1954 = vld [vmem:[#allocation25 + $0x168] sm:$0xff]
    %v1955 = vld [vmem:[#allocation25 + $0x170] sm:$0xff]
    %v1956 = vld [vmem:[#allocation25 + $0x178] sm:$0xff]
    %v1957 = vld [vmem:[#allocation25 + $0x180] sm:$0xff]
    %v1958 = vld [vmem:[#allocation25 + $0x188] sm:$0xff]
    %v1959 = vld [vmem:[#allocation25 + $0x190] sm:$0xff]
    %v1960 = vld [vmem:[#allocation25 + $0x198] sm:$0xff]
    %v1961 = vld [vmem:[#allocation25 + $0x1a0] sm:$0xff]
    %v1962 = vld [vmem:[#allocation25 + $0x1a8] sm:$0xff]
    %v1963 = vld [vmem:[#allocation25 + $0x1b0] sm:$0xff]
    %v1964 = vld [vmem:[#allocation25 + $0x1b8] sm:$0xff]
    %v1965 = vld [vmem:[#allocation25 + $0x1c0] sm:$0xff]
    %v1966 = vld [vmem:[#allocation25 + $0x1c8] sm:$0xff]
    %v1967 = vld [vmem:[#allocation25 + $0x1d0] sm:$0xff]
    %v1968 = vld [vmem:[#allocation25 + $0x1d8] sm:$0xff]
    %v1969 = vld [vmem:[#allocation25 + $0x1e0] sm:$0xff]
    %v1970 = vld [vmem:[#allocation25 + $0x1e8] sm:$0xff]
    %v1971 = vld [vmem:[#allocation25 + $0x1f0] sm:$0xff]
    %v1972 = vld [vmem:[#allocation25 + $0x1f8] sm:$0xff]
    %v1973 = vld [vmem:[#allocation23] sm:$0xff]
    %v1974 = vld [vmem:[#allocation23 + $0x8] sm:$0xff]
    %v1975 = vld [vmem:[#allocation23 + $0x10] sm:$0xff]
    %v1976 = vld [vmem:[#allocation23 + $0x18] sm:$0xff]
    %v1977 = vld [vmem:[#allocation23 + $0x20] sm:$0xff]
    %v1978 = vld [vmem:[#allocation23 + $0x28] sm:$0xff]
    %v1979 = vld [vmem:[#allocation23 + $0x30] sm:$0xff]
    %v1980 = vld [vmem:[#allocation23 + $0x38] sm:$0xff]
    %v1981 = vld [vmem:[#allocation23 + $0x40] sm:$0xff]
    %v1982 = vld [vmem:[#allocation23 + $0x48] sm:$0xff]
    %v1983 = vld [vmem:[#allocation23 + $0x50] sm:$0xff]
    %v1984 = vld [vmem:[#allocation23 + $0x58] sm:$0xff]
    %v1985 = vld [vmem:[#allocation23 + $0x60] sm:$0xff]
    %v1986 = vld [vmem:[#allocation23 + $0x68] sm:$0xff]
    %v1987 = vld [vmem:[#allocation23 + $0x70] sm:$0xff]
    %v1988 = vld [vmem:[#allocation23 + $0x78] sm:$0xff]
    %v1989 = vld [vmem:[#allocation23 + $0x80] sm:$0xff]
    %v1990 = vld [vmem:[#allocation23 + $0x88] sm:$0xff]
    %v1991 = vld [vmem:[#allocation23 + $0x90] sm:$0xff]
    %v1992 = vld [vmem:[#allocation23 + $0x98] sm:$0xff]
    %v1993 = vld [vmem:[#allocation23 + $0xa0] sm:$0xff]
    %v1994 = vld [vmem:[#allocation23 + $0xa8] sm:$0xff]
    %v1995 = vld [vmem:[#allocation23 + $0xb0] sm:$0xff]
    %v1996 = vld [vmem:[#allocation23 + $0xb8] sm:$0xff]
    %v1997 = vld [vmem:[#allocation23 + $0xc0] sm:$0xff]
    %v1998 = vld [vmem:[#allocation23 + $0xc8] sm:$0xff]
    %v1999 = vld [vmem:[#allocation23 + $0xd0] sm:$0xff]
    %v2000 = vld [vmem:[#allocation23 + $0xd8] sm:$0xff]
    %v2001 = vld [vmem:[#allocation23 + $0xe0] sm:$0xff]
    %v2002 = vld [vmem:[#allocation23 + $0xe8] sm:$0xff]
    %v2003 = vld [vmem:[#allocation23 + $0xf0] sm:$0xff]
    %v2004 = vld [vmem:[#allocation23 + $0xf8] sm:$0xff]
    %v2005 = vld [vmem:[#allocation23 + $0x100] sm:$0xff]
    %v2006 = vld [vmem:[#allocation23 + $0x108] sm:$0xff]
    %v2007 = vld [vmem:[#allocation23 + $0x110] sm:$0xff]
    %v2008 = vld [vmem:[#allocation23 + $0x118] sm:$0xff]
    %v2009 = vld [vmem:[#allocation23 + $0x120] sm:$0xff]
    %v2010 = vld [vmem:[#allocation23 + $0x128] sm:$0xff]
    %v2011 = vld [vmem:[#allocation23 + $0x130] sm:$0xff]
    %v2012 = vld [vmem:[#allocation23 + $0x138] sm:$0xff]
    %v2013 = vld [vmem:[#allocation23 + $0x140] sm:$0xff]
    %v2014 = vld [vmem:[#allocation23 + $0x148] sm:$0xff]
    %v2015 = vld [vmem:[#allocation23 + $0x150] sm:$0xff]
    %v2016 = vld [vmem:[#allocation23 + $0x158] sm:$0xff]
    %v2017 = vld [vmem:[#allocation23 + $0x160] sm:$0xff]
    %v2018 = vld [vmem:[#allocation23 + $0x168] sm:$0xff]
    %v2019 = vld [vmem:[#allocation23 + $0x170] sm:$0xff]
    %v2020 = vld [vmem:[#allocation23 + $0x178] sm:$0xff]
    %v2021 = vld [vmem:[#allocation23 + $0x180] sm:$0xff]
    %v2022 = vld [vmem:[#allocation23 + $0x188] sm:$0xff]
    %v2023 = vld [vmem:[#allocation23 + $0x190] sm:$0xff]
    %v2024 = vld [vmem:[#allocation23 + $0x198] sm:$0xff]
    %v2025 = vld [vmem:[#allocation23 + $0x1a0] sm:$0xff]
    %v2026 = vld [vmem:[#allocation23 + $0x1a8] sm:$0xff]
    %v2027 = vld [vmem:[#allocation23 + $0x1b0] sm:$0xff]
    %v2028 = vld [vmem:[#allocation23 + $0x1b8] sm:$0xff]
    %v2029 = vld [vmem:[#allocation23 + $0x1c0] sm:$0xff]
    %v2030 = vld [vmem:[#allocation23 + $0x1c8] sm:$0xff]
    %v2031 = vld [vmem:[#allocation23 + $0x1d0] sm:$0xff]
    %v2032 = vld [vmem:[#allocation23 + $0x1d8] sm:$0xff]
    %v2033 = vld [vmem:[#allocation23 + $0x1e0] sm:$0xff]
    %v2034 = vld [vmem:[#allocation23 + $0x1e8] sm:$0xff]
    %v2035 = vld [vmem:[#allocation23 + $0x1f0] sm:$0xff]
    %v2036 = vld [vmem:[#allocation23 + $0x1f8] sm:$0xff]
    %v2037 = vld [vmem:[%s49] sm:$0xf]
    %v2039 = vlaneseq
    %v2040 = vshrl.u32 %v2039, 7
    %v2041 = vsub.s32 0, %v2040
    %v2042 = vrot.slane %v2037, %v2041
    %v2043 = vlaneseq
    %v2044 = vshrl.u32 %v2043, 7
    %v2045 = vsub.s32 1, %v2044
    %v2046 = vrot.slane %v2037, %v2045
    %v2047 = vlaneseq
    %v2048 = vshrl.u32 %v2047, 7
    %v2049 = vsub.s32 2, %v2048
    %v2050 = vrot.slane %v2037, %v2049
    %v2051 = vlaneseq
    %v2052 = vshrl.u32 %v2051, 7
    %v2053 = vsub.s32 3, %v2052
    %v2054 = vrot.slane %v2037, %v2053
    %2059 = vmatprep.subr.mxu0 %v1974
    %2060 = vmatpush1.msra.mxu0 %v1973
    %2061 = vmatprep.subr.mxu0 %v1978
    %2062 = vmatpush1.msra.mxu0 %v1977
    %2063 = vmatprep.subr.mxu0 %v1982
    %2064 = vmatpush1.msra.mxu0 %v1981
    %2065 = vmatprep.subr.mxu0 %v1986
    %2066 = vmatpush1.msra.mxu0 %v1985
    %2067 = vmatprep.subr.mxu0 %v1990
    %2068 = vmatpush1.msra.mxu0 %v1989
    %2069 = vmatprep.subr.mxu0 %v1994
    %2070 = vmatpush1.msra.mxu0 %v1993
    %2071 = vmatprep.subr.mxu0 %v1998
    %2072 = vmatpush1.msra.mxu0 %v1997
    %2073 = vmatprep.subr.mxu0 %v2002
    %2074 = vmatpush1.msra.mxu0 %v2001
    %2075 = vmatprep.subr.mxu0 %v2006
    %2076 = vmatpush1.msra.mxu0 %v2005
    %2077 = vmatprep.subr.mxu0 %v2010
    %2078 = vmatpush1.msra.mxu0 %v2009
    %2079 = vmatprep.subr.mxu0 %v2014
    %2080 = vmatpush1.msra.mxu0 %v2013
    %2081 = vmatprep.subr.mxu0 %v2018
    %2082 = vmatpush1.msra.mxu0 %v2017
    %2083 = vmatprep.subr.mxu0 %v2022
    %2084 = vmatpush1.msra.mxu0 %v2021
    %2085 = vmatprep.subr.mxu0 %v2026
    %2086 = vmatpush1.msra.mxu0 %v2025
    %2087 = vmatprep.subr.mxu0 %v2030
    %2088 = vmatpush1.msra.mxu0 %v2029
    %2089 = vmatprep.subr.mxu0 %v2034
    %2090 = vmatpush1.msra.mxu0 %v2033
    %2091 = vmatprep.subr.mxu0 0.0
    %2092 = vmatpush1.msra.mxu0 0.0
    %2093 = vmatprep.subr.mxu0 0.0
    %2094 = vmatpush1.msra.mxu0 0.0
    %2095 = vmatprep.subr.mxu0 0.0
    %2096 = vmatpush1.msra.mxu0 0.0
    %2097 = vmatprep.subr.mxu0 0.0
    %2098 = vmatpush1.msra.mxu0 0.0
    %2099 = vmatprep.subr.mxu0 0.0
    %2100 = vmatpush1.msra.mxu0 0.0
    %2101 = vmatprep.subr.mxu0 0.0
    %2102 = vmatpush1.msra.mxu0 0.0
    %2103 = vmatprep.subr.mxu0 0.0
    %2104 = vmatpush1.msra.mxu0 0.0
    %2105 = vmatprep.subr.mxu0 0.0
    %2106 = vmatpush1.msra.mxu0 0.0
    %2107 = vmatprep.subr.mxu0 0.0
    %2108 = vmatpush1.msra.mxu0 0.0
    %2109 = vmatprep.subr.mxu0 0.0
    %2110 = vmatpush1.msra.mxu0 0.0
    %2111 = vmatprep.subr.mxu0 0.0
    %2112 = vmatpush1.msra.mxu0 0.0
    %2113 = vmatprep.subr.mxu0 0.0
    %2114 = vmatpush1.msra.mxu0 0.0
    %2115 = vmatprep.subr.mxu0 0.0
    %2116 = vmatpush1.msra.mxu0 0.0
    %2117 = vmatprep.subr.mxu0 0.0
    %2118 = vmatpush1.msra.mxu0 0.0
    %2119 = vmatprep.subr.mxu0 0.0
    %2120 = vmatpush1.msra.mxu0 0.0
    %2121 = vmatprep.subr.mxu0 0.0
    %2122 = vmatpush1.msra.mxu0 0.0
    %2123 = vmatprep.mubr.f32.mxu0 0.0
    %2124 = vmatmul.mubr.f32.gmra.mrb[0].mxu0 %v1908
    %v2125 = vpop.f32.mrb[0].mxu0
    %v2126 = vadd.f32 %v2042, %v2125
    %v2127 = vpop.f32.mrb[0].mxu0
    %v2128 = vadd.f32 %v2046, %v2127
    %2129 = vdwg.mxu0
    %2130 = vmatprep.subr.mxu0 %v1976
    %2131 = vmatpush1.msra.mxu0 %v1975
    %2132 = vmatprep.subr.mxu0 %v1980
    %2133 = vmatpush1.msra.mxu0 %v1979
    %2134 = vmatprep.subr.mxu0 %v1984
    %2135 = vmatpush1.msra.mxu0 %v1983
    %2136 = vmatprep.subr.mxu0 %v1988
    %2137 = vmatpush1.msra.mxu0 %v1987
    %2138 = vmatprep.subr.mxu0 %v1992
    %2139 = vmatpush1.msra.mxu0 %v1991
    %2140 = vmatprep.subr.mxu0 %v1996
    %2141 = vmatpush1.msra.mxu0 %v1995
    %2142 = vmatprep.subr.mxu0 %v2000
    %2143 = vmatpush1.msra.mxu0 %v1999
    %2144 = vmatprep.subr.mxu0 %v2004
    %2145 = vmatpush1.msra.mxu0 %v2003
    %2146 = vmatprep.subr.mxu0 %v2008
    %2147 = vmatpush1.msra.mxu0 %v2007
    %2148 = vmatprep.subr.mxu0 %v2012
    %2149 = vmatpush1.msra.mxu0 %v2011
    %2150 = vmatprep.subr.mxu0 %v2016
    %2151 = vmatpush1.msra.mxu0 %v2015
    %2152 = vmatprep.subr.mxu0 %v2020
    %2153 = vmatpush1.msra.mxu0 %v2019
    %2154 = vmatprep.subr.mxu0 %v2024
    %2155 = vmatpush1.msra.mxu0 %v2023
    %2156 = vmatprep.subr.mxu0 %v2028
    %2157 = vmatpush1.msra.mxu0 %v2027
    %2158 = vmatprep.subr.mxu0 %v2032
    %2159 = vmatpush1.msra.mxu0 %v2031
    %2160 = vmatprep.subr.mxu0 %v2036
    %2161 = vmatpush1.msra.mxu0 %v2035
    %2162 = vmatprep.subr.mxu0 0.0
    %2163 = vmatpush1.msra.mxu0 0.0
    %2164 = vmatprep.subr.mxu0 0.0
    %2165 = vmatpush1.msra.mxu0 0.0
    %2166 = vmatprep.subr.mxu0 0.0
    %2167 = vmatpush1.msra.mxu0 0.0
    %2168 = vmatprep.subr.mxu0 0.0
    %2169 = vmatpush1.msra.mxu0 0.0
    %2170 = vmatprep.subr.mxu0 0.0
    %2171 = vmatpush1.msra.mxu0 0.0
    %2172 = vmatprep.subr.mxu0 0.0
    %2173 = vmatpush1.msra.mxu0 0.0
    %2174 = vmatprep.subr.mxu0 0.0
    %2175 = vmatpush1.msra.mxu0 0.0
    %2176 = vmatprep.subr.mxu0 0.0
    %2177 = vmatpush1.msra.mxu0 0.0
    %2178 = vmatprep.subr.mxu0 0.0
    %2179 = vmatpush1.msra.mxu0 0.0
    %2180 = vmatprep.subr.mxu0 0.0
    %2181 = vmatpush1.msra.mxu0 0.0
    %2182 = vmatprep.subr.mxu0 0.0
    %2183 = vmatpush1.msra.mxu0 0.0
    %2184 = vmatprep.subr.mxu0 0.0
    %2185 = vmatpush1.msra.mxu0 0.0
    %2186 = vmatprep.subr.mxu0 0.0
    %2187 = vmatpush1.msra.mxu0 0.0
    %2188 = vmatprep.subr.mxu0 0.0
    %2189 = vmatpush1.msra.mxu0 0.0
    %2190 = vmatprep.subr.mxu0 0.0
    %2191 = vmatpush1.msra.mxu0 0.0
    %2192 = vmatprep.subr.mxu0 0.0
    %2193 = vmatpush1.msra.mxu0 0.0
    %2194 = vmatprep.mubr.f32.mxu0 0.0
    %2195 = vmatmul.mubr.f32.gmra.mrb[0].mxu0 %v1908
    %v2196 = vpop.f32.mrb[0].mxu0
    %v2197 = vadd.f32 %v2050, %v2196
    %v2198 = vpop.f32.mrb[0].mxu0
    %v2199 = vadd.f32 %v2054, %v2198
    %2200 = vdwg.mxu0
    %2201 = vmatprep.subr.mxu0 %v1910
    %2202 = vmatpush1.msra.mxu0 %v1909
    %2203 = vmatprep.subr.mxu0 %v1914
    %2204 = vmatpush1.msra.mxu0 %v1913
    %2205 = vmatprep.subr.mxu0 %v1918
    %2206 = vmatpush1.msra.mxu0 %v1917
    %2207 = vmatprep.subr.mxu0 %v1922
    %2208 = vmatpush1.msra.mxu0 %v1921
    %2209 = vmatprep.subr.mxu0 %v1926
    %2210 = vmatpush1.msra.mxu0 %v1925
    %2211 = vmatprep.subr.mxu0 %v1930
    %2212 = vmatpush1.msra.mxu0 %v1929
    %2213 = vmatprep.subr.mxu0 %v1934
    %2214 = vmatpush1.msra.mxu0 %v1933
    %2215 = vmatprep.subr.mxu0 %v1938
    %2216 = vmatpush1.msra.mxu0 %v1937
    %2217 = vmatprep.subr.mxu0 %v1942
    %2218 = vmatpush1.msra.mxu0 %v1941
    %2219 = vmatprep.subr.mxu0 %v1946
    %2220 = vmatpush1.msra.mxu0 %v1945
    %2221 = vmatprep.subr.mxu0 %v1950
    %2222 = vmatpush1.msra.mxu0 %v1949
    %2223 = vmatprep.subr.mxu0 %v1954
    %2224 = vmatpush1.msra.mxu0 %v1953
    %2225 = vmatprep.subr.mxu0 %v1958
    %2226 = vmatpush1.msra.mxu0 %v1957
    %2227 = vmatprep.subr.mxu0 %v1962
    %2228 = vmatpush1.msra.mxu0 %v1961
    %2229 = vmatprep.subr.mxu0 %v1966
    %2230 = vmatpush1.msra.mxu0 %v1965
    %2231 = vmatprep.subr.mxu0 %v1970
    %2232 = vmatpush1.msra.mxu0 %v1969
    %2233 = vmatprep.subr.mxu0 0.0
    %2234 = vmatpush1.msra.mxu0 0.0
    %2235 = vmatprep.subr.mxu0 0.0
    %2236 = vmatpush1.msra.mxu0 0.0
    %2237 = vmatprep.subr.mxu0 0.0
    %2238 = vmatpush1.msra.mxu0 0.0
    %2239 = vmatprep.subr.mxu0 0.0
    %2240 = vmatpush1.msra.mxu0 0.0
    %2241 = vmatprep.subr.mxu0 0.0
    %2242 = vmatpush1.msra.mxu0 0.0
    %2243 = vmatprep.subr.mxu0 0.0
    %2244 = vmatpush1.msra.mxu0 0.0
    %2245 = vmatprep.subr.mxu0 0.0
    %2246 = vmatpush1.msra.mxu0 0.0
    %2247 = vmatprep.subr.mxu0 0.0
    %2248 = vmatpush1.msra.mxu0 0.0
    %2249 = vmatprep.subr.mxu0 0.0
    %2250 = vmatpush1.msra.mxu0 0.0
    %2251 = vmatprep.subr.mxu0 0.0
    %2252 = vmatpush1.msra.mxu0 0.0
    %2253 = vmatprep.subr.mxu0 0.0
    %2254 = vmatpush1.msra.mxu0 0.0
    %2255 = vmatprep.subr.mxu0 0.0
    %2256 = vmatpush1.msra.mxu0 0.0
    %2257 = vmatprep.subr.mxu0 0.0
    %2258 = vmatpush1.msra.mxu0 0.0
    %2259 = vmatprep.subr.mxu0 0.0
    %2260 = vmatpush1.msra.mxu0 0.0
    %2261 = vmatprep.subr.mxu0 0.0
    %2262 = vmatpush1.msra.mxu0 0.0
    %2263 = vmatprep.subr.mxu0 0.0
    %2264 = vmatpush1.msra.mxu0 0.0
    %2265 = vmatprep.mubr.f32.mxu0 0.0
    %2266 = vmatmul.mubr.f32.gmra.mrb[0].mxu0 0.0
    %v2267 = vpop.f32.mrb[0].mxu0
    %v2268 = vadd.f32 0.0, %v2267
    %v2269 = vpop.f32.mrb[0].mxu0
    %v2270 = vadd.f32 0.0, %v2269
    %2271 = vdwg.mxu0
    %2272 = vmatprep.subr.mxu0 %v1912
    %2273 = vmatpush1.msra.mxu0 %v1911
    %2274 = vmatprep.subr.mxu0 %v1916
    %2275 = vmatpush1.msra.mxu0 %v1915
    %2276 = vmatprep.subr.mxu0 %v1920
    %2277 = vmatpush1.msra.mxu0 %v1919
    %2278 = vmatprep.subr.mxu0 %v1924
    %2279 = vmatpush1.msra.mxu0 %v1923
    %2280 = vmatprep.subr.mxu0 %v1928
    %2281 = vmatpush1.msra.mxu0 %v1927
    %2282 = vmatprep.subr.mxu0 %v1932
    %2283 = vmatpush1.msra.mxu0 %v1931
    %2284 = vmatprep.subr.mxu0 %v1936
    %2285 = vmatpush1.msra.mxu0 %v1935
    %2286 = vmatprep.subr.mxu0 %v1940
    %2287 = vmatpush1.msra.mxu0 %v1939
    %2288 = vmatprep.subr.mxu0 %v1944
    %2289 = vmatpush1.msra.mxu0 %v1943
    %2290 = vmatprep.subr.mxu0 %v1948
    %2291 = vmatpush1.msra.mxu0 %v1947
    %2292 = vmatprep.subr.mxu0 %v1952
    %2293 = vmatpush1.msra.mxu0 %v1951
    %2294 = vmatprep.subr.mxu0 %v1956
    %2295 = vmatpush1.msra.mxu0 %v1955
    %2296 = vmatprep.subr.mxu0 %v1960
    %2297 = vmatpush1.msra.mxu0 %v1959
    %2298 = vmatprep.subr.mxu0 %v1964
    %2299 = vmatpush1.msra.mxu0 %v1963
    %2300 = vmatprep.subr.mxu0 %v1968
    %2301 = vmatpush1.msra.mxu0 %v1967
    %2302 = vmatprep.subr.mxu0 %v1972
    %2303 = vmatpush1.msra.mxu0 %v1971
    %2304 = vmatprep.subr.mxu0 0.0
    %2305 = vmatpush1.msra.mxu0 0.0
    %2306 = vmatprep.subr.mxu0 0.0
    %2307 = vmatpush1.msra.mxu0 0.0
    %2308 = vmatprep.subr.mxu0 0.0
    %2309 = vmatpush1.msra.mxu0 0.0
    %2310 = vmatprep.subr.mxu0 0.0
    %2311 = vmatpush1.msra.mxu0 0.0
    %2312 = vmatprep.subr.mxu0 0.0
    %2313 = vmatpush1.msra.mxu0 0.0
    %2314 = vmatprep.subr.mxu0 0.0
    %2315 = vmatpush1.msra.mxu0 0.0
    %2316 = vmatprep.subr.mxu0 0.0
    %2317 = vmatpush1.msra.mxu0 0.0
    %2318 = vmatprep.subr.mxu0 0.0
    %2319 = vmatpush1.msra.mxu0 0.0
    %2320 = vmatprep.subr.mxu0 0.0
    %2321 = vmatpush1.msra.mxu0 0.0
    %2322 = vmatprep.subr.mxu0 0.0
    %2323 = vmatpush1.msra.mxu0 0.0
    %2324 = vmatprep.subr.mxu0 0.0
    %2325 = vmatpush1.msra.mxu0 0.0
    %2326 = vmatprep.subr.mxu0 0.0
    %2327 = vmatpush1.msra.mxu0 0.0
    %2328 = vmatprep.subr.mxu0 0.0
    %2329 = vmatpush1.msra.mxu0 0.0
    %2330 = vmatprep.subr.mxu0 0.0
    %2331 = vmatpush1.msra.mxu0 0.0
    %2332 = vmatprep.subr.mxu0 0.0
    %2333 = vmatpush1.msra.mxu0 0.0
    %2334 = vmatprep.subr.mxu0 0.0
    %2335 = vmatpush1.msra.mxu0 0.0
    %2336 = vmatprep.mubr.f32.mxu0 0.0
    %2337 = vmatmul.mubr.f32.gmra.mrb[0].mxu0 0.0
    %v2338 = vpop.f32.mrb[0].mxu0
    %v2339 = vadd.f32 0.0, %v2338
    %v2340 = vpop.f32.mrb[0].mxu0
    %v2341 = vadd.f32 0.0, %v2340
    %2342 = vdwg.mxu0
    %v2343 = vadd.f32 %v2126, %v2268
    %v2344 = vadd.f32 %v2128, %v2270
    %v2345 = vadd.f32 %v2197, %v2339
    %v2346 = vadd.f32 %v2199, %v2341
    %v2347 = vsub.f32 0.0, %v2343
    %v2348 = vmul.f32 %v2347, 1.442695
    %v2349 = vpow.pop %v2348
    %v2350 = vadd.f32 %v2349, 1.0
    %v2351 = vrcp.pop %v2350
    %v2352 = vmul.f32 1.0, %v2351
    %v2353 = vsub.f32 0.0, %v2344
    %v2354 = vmul.f32 %v2353, 1.442695
    %v2355 = vpow.pop %v2354
    %v2356 = vadd.f32 %v2355, 1.0
    %v2357 = vrcp.pop %v2356
    %v2358 = vmul.f32 1.0, %v2357
    %v2359 = vtanh.pop %v2345
    %v2360 = vsub.f32 0.0, %v2346
    %v2361 = vmul.f32 %v2360, 1.442695
    %v2362 = vpow.pop %v2361
    %v2363 = vadd.f32 %v2362, 1.0
    %v2364 = vrcp.pop %v2363
    %v2365 = vmul.f32 1.0, %v2364
    %v2366 = vmul.f32 %v2358, 0.0
    %v2367 = vmul.f32 %v2352, %v2359
    %v2368 = vadd.f32 %v2366, %v2367
    %v2369 = vtanh.pop %v2368
    %v2370 = vmul.f32 %v2365, %v2369
    %2371 = vmatprep.subr.mxu0 %v1910
    %2372 = vmatpush1.msra.mxu0 %v1909
    %2373 = vmatprep.subr.mxu0 %v1914
    %2374 = vmatpush1.msra.mxu0 %v1913
    %2375 = vmatprep.subr.mxu0 %v1918
    %2376 = vmatpush1.msra.mxu0 %v1917
    %2377 = vmatprep.subr.mxu0 %v1922
    %2378 = vmatpush1.msra.mxu0 %v1921
    %2379 = vmatprep.subr.mxu0 %v1926
    %2380 = vmatpush1.msra.mxu0 %v1925
    %2381 = vmatprep.subr.mxu0 %v1930
    %2382 = vmatpush1.msra.mxu0 %v1929
    %2383 = vmatprep.subr.mxu0 %v1934
    %2384 = vmatpush1.msra.mxu0 %v1933
    %2385 = vmatprep.subr.mxu0 %v1938
    %2386 = vmatpush1.msra.mxu0 %v1937
    %2387 = vmatprep.subr.mxu0 %v1942
    %2388 = vmatpush1.msra.mxu0 %v1941
    %2389 = vmatprep.subr.mxu0 %v1946
    %2390 = vmatpush1.msra.mxu0 %v1945
    %2391 = vmatprep.subr.mxu0 %v1950
    %2392 = vmatpush1.msra.mxu0 %v1949
    %2393 = vmatprep.subr.mxu0 %v1954
    %2394 = vmatpush1.msra.mxu0 %v1953
    %2395 = vmatprep.subr.mxu0 %v1958
    %2396 = vmatpush1.msra.mxu0 %v1957
    %2397 = vmatprep.subr.mxu0 %v1962
    %2398 = vmatpush1.msra.mxu0 %v1961
    %2399 = vmatprep.subr.mxu0 %v1966
    %2400 = vmatpush1.msra.mxu0 %v1965
    %2401 = vmatprep.subr.mxu0 %v1970
    %2402 = vmatpush1.msra.mxu0 %v1969
    %2403 = vmatprep.subr.mxu0 0.0
    %2404 = vmatpush1.msra.mxu0 0.0
    %2405 = vmatprep.subr.mxu0 0.0
    %2406 = vmatpush1.msra.mxu0 0.0
    %2407 = vmatprep.subr.mxu0 0.0
    %2408 = vmatpush1.msra.mxu0 0.0
    %2409 = vmatprep.subr.mxu0 0.0
    %2410 = vmatpush1.msra.mxu0 0.0
    %2411 = vmatprep.subr.mxu0 0.0
    %2412 = vmatpush1.msra.mxu0 0.0
    %2413 = vmatprep.subr.mxu0 0.0
    %2414 = vmatpush1.msra.mxu0 0.0
    %2415 = vmatprep.subr.mxu0 0.0
    %2416 = vmatpush1.msra.mxu0 0.0
    %2417 = vmatprep.subr.mxu0 0.0
    %2418 = vmatpush1.msra.mxu0 0.0
    %2419 = vmatprep.subr.mxu0 0.0
    %2420 = vmatpush1.msra.mxu0 0.0
    %2421 = vmatprep.subr.mxu0 0.0
    %2422 = vmatpush1.msra.mxu0 0.0
    %2423 = vmatprep.subr.mxu0 0.0
    %2424 = vmatpush1.msra.mxu0 0.0
    %2425 = vmatprep.subr.mxu0 0.0
    %2426 = vmatpush1.msra.mxu0 0.0
    %2427 = vmatprep.subr.mxu0 0.0
    %2428 = vmatpush1.msra.mxu0 0.0
    %2429 = vmatprep.subr.mxu0 0.0
    %2430 = vmatpush1.msra.mxu0 0.0
    %2431 = vmatprep.subr.mxu0 0.0
    %2432 = vmatpush1.msra.mxu0 0.0
    %2433 = vmatprep.subr.mxu0 0.0
    %2434 = vmatpush1.msra.mxu0 0.0
    %2435 = vmatprep.mubr.f32.mxu0 0.0
    %2436 = vmatmul.mubr.f32.gmra.mrb[0].mxu0 %v2370
    %v2437 = vpop.f32.mrb[0].mxu0
    %v2438 = vadd.f32 0.0, %v2437
    %v2439 = vpop.f32.mrb[0].mxu0
    %v2440 = vadd.f32 0.0, %v2439
    %2441 = vdwg.mxu0
    %2442 = vmatprep.subr.mxu0 %v1912
    %2443 = vmatpush1.msra.mxu0 %v1911
    %2444 = vmatprep.subr.mxu0 %v1916
    %2445 = vmatpush1.msra.mxu0 %v1915
    %2446 = vmatprep.subr.mxu0 %v1920
    %2447 = vmatpush1.msra.mxu0 %v1919
    %2448 = vmatprep.subr.mxu0 %v1924
    %2449 = vmatpush1.msra.mxu0 %v1923
    %2450 = vmatprep.subr.mxu0 %v1928
    %2451 = vmatpush1.msra.mxu0 %v1927
    %2452 = vmatprep.subr.mxu0 %v1932
    %2453 = vmatpush1.msra.mxu0 %v1931
    %2454 = vmatprep.subr.mxu0 %v1936
    %2455 = vmatpush1.msra.mxu0 %v1935
    %2456 = vmatprep.subr.mxu0 %v1940
    %2457 = vmatpush1.msra.mxu0 %v1939
    %2458 = vmatprep.subr.mxu0 %v1944
    %2459 = vmatpush1.msra.mxu0 %v1943
    %2460 = vmatprep.subr.mxu0 %v1948
    %2461 = vmatpush1.msra.mxu0 %v1947
    %2462 = vmatprep.subr.mxu0 %v1952
    %2463 = vmatpush1.msra.mxu0 %v1951
    %2464 = vmatprep.subr.mxu0 %v1956
    %2465 = vmatpush1.msra.mxu0 %v1955
    %2466 = vmatprep.subr.mxu0 %v1960
    %2467 = vmatpush1.msra.mxu0 %v1959
    %2468 = vmatprep.subr.mxu0 %v1964
    %2469 = vmatpush1.msra.mxu0 %v1963
    %2470 = vmatprep.subr.mxu0 %v1968
    %2471 = vmatpush1.msra.mxu0 %v1967
    %2472 = vmatprep.subr.mxu0 %v1972
    %2473 = vmatpush1.msra.mxu0 %v1971
    %2474 = vmatprep.subr.mxu0 0.0
    %2475 = vmatpush1.msra.mxu0 0.0
    %2476 = vmatprep.subr.mxu0 0.0
    %2477 = vmatpush1.msra.mxu0 0.0
    %2478 = vmatprep.subr.mxu0 0.0
    %2479 = vmatpush1.msra.mxu0 0.0
    %2480 = vmatprep.subr.mxu0 0.0
    %2481 = vmatpush1.msra.mxu0 0.0
    %2482 = vmatprep.subr.mxu0 0.0
    %2483 = vmatpush1.msra.mxu0 0.0
    %2484 = vmatprep.subr.mxu0 0.0
    %2485 = vmatpush1.msra.mxu0 0.0
    %2486 = vmatprep.subr.mxu0 0.0
    %2487 = vmatpush1.msra.mxu0 0.0
    %2488 = vmatprep.subr.mxu0 0.0
    %2489 = vmatpush1.msra.mxu0 0.0
    %2490 = vmatprep.subr.mxu0 0.0
    %2491 = vmatpush1.msra.mxu0 0.0
    %2492 = vmatprep.subr.mxu0 0.0
    %2493 = vmatpush1.msra.mxu0 0.0
    %2494 = vmatprep.subr.mxu0 0.0
    %2495 = vmatpush1.msra.mxu0 0.0
    %2496 = vmatprep.subr.mxu0 0.0
    %2497 = vmatpush1.msra.mxu0 0.0
    %2498 = vmatprep.subr.mxu0 0.0
    %2499 = vmatpush1.msra.mxu0 0.0
    %2500 = vmatprep.subr.mxu0 0.0
    %2501 = vmatpush1.msra.mxu0 0.0
    %2502 = vmatprep.subr.mxu0 0.0
    %2503 = vmatpush1.msra.mxu0 0.0
    %2504 = vmatprep.subr.mxu0 0.0
    %2505 = vmatpush1.msra.mxu0 0.0
    %2506 = vmatprep.mubr.f32.mxu0 0.0
    %2507 = vmatmul.mubr.f32.gmra.mrb[0].mxu0 %v2370
    %v2508 = vpop.f32.mrb[0].mxu0
    %v2509 = vadd.f32 0.0, %v2508
    %v2510 = vpop.f32.mrb[0].mxu0
    %v2511 = vadd.f32 0.0, %v2510
    %2512 = vdwg.mxu0
    %v2517 = vrot.slane %v2438, 6
    %v2518 = vrot.slane %v2440, 6
    %v2519 = vrot.slane %v2509, 6
    %v2520 = vrot.slane %v2511, 6
    %v2525 = vadd.f32 %v2126, %v2517
    %v2526 = vadd.f32 %v2128, %v2518
    %v2527 = vadd.f32 %v2197, %v2519
    %v2528 = vadd.f32 %v2199, %v2520
    %v2529 = vsub.f32 0.0, %v2525
    %v2530 = vmul.f32 %v2529, 1.442695
    %v2531 = vpow.pop %v2530
    %v2532 = vadd.f32 %v2531, 1.0
    %v2533 = vrcp.pop %v2532
    %v2534 = vmul.f32 1.0, %v2533
    %v2535 = vsub.f32 0.0, %v2526
    %v2536 = vmul.f32 %v2535, 1.442695
    %v2537 = vpow.pop %v2536
    %v2538 = vadd.f32 %v2537, 1.0
    %v2539 = vrcp.pop %v2538
    %v2540 = vmul.f32 1.0, %v2539
    %v2541 = vtanh.pop %v2527
    %v2542 = vsub.f32 0.0, %v2528
    %v2543 = vmul.f32 %v2542, 1.442695
    %v2544 = vpow.pop %v2543
    %v2545 = vadd.f32 %v2544, 1.0
    %v2546 = vrcp.pop %v2545
    %v2547 = vmul.f32 1.0, %v2546
    %v2549 = vrot.slane %v2368, 6
    %v2551 = vmul.f32 %v2540, %v2549
    %v2552 = vmul.f32 %v2534, %v2541
    %v2553 = vadd.f32 %v2551, %v2552
    %v2554 = vtanh.pop %v2553
    %v2555 = vmul.f32 %v2547, %v2554
    %v2557 = vrot.slane %v2555, 2
    %2559 = vmatprep.subr.mxu0 %v1910
    %2560 = vmatpush1.msra.mxu0 %v1909
    %2561 = vmatprep.subr.mxu0 %v1914
    %2562 = vmatpush1.msra.mxu0 %v1913
    %2563 = vmatprep.subr.mxu0 %v1918
    %2564 = vmatpush1.msra.mxu0 %v1917
    %2565 = vmatprep.subr.mxu0 %v1922
    %2566 = vmatpush1.msra.mxu0 %v1921
    %2567 = vmatprep.subr.mxu0 %v1926
    %2568 = vmatpush1.msra.mxu0 %v1925
    %2569 = vmatprep.subr.mxu0 %v1930
    %2570 = vmatpush1.msra.mxu0 %v1929
    %2571 = vmatprep.subr.mxu0 %v1934
    %2572 = vmatpush1.msra.mxu0 %v1933
    %2573 = vmatprep.subr.mxu0 %v1938
    %2574 = vmatpush1.msra.mxu0 %v1937
    %2575 = vmatprep.subr.mxu0 %v1942
    %2576 = vmatpush1.msra.mxu0 %v1941
    %2577 = vmatprep.subr.mxu0 %v1946
    %2578 = vmatpush1.msra.mxu0 %v1945
    %2579 = vmatprep.subr.mxu0 %v1950
    %2580 = vmatpush1.msra.mxu0 %v1949
    %2581 = vmatprep.subr.mxu0 %v1954
    %2582 = vmatpush1.msra.mxu0 %v1953
    %2583 = vmatprep.subr.mxu0 %v1958
    %2584 = vmatpush1.msra.mxu0 %v1957
    %2585 = vmatprep.subr.mxu0 %v1962
    %2586 = vmatpush1.msra.mxu0 %v1961
    %2587 = vmatprep.subr.mxu0 %v1966
    %2588 = vmatpush1.msra.mxu0 %v1965
    %2589 = vmatprep.subr.mxu0 %v1970
    %2590 = vmatpush1.msra.mxu0 %v1969
    %2591 = vmatprep.subr.mxu0 0.0
    %2592 = vmatpush1.msra.mxu0 0.0
    %2593 = vmatprep.subr.mxu0 0.0
    %2594 = vmatpush1.msra.mxu0 0.0
    %2595 = vmatprep.subr.mxu0 0.0
    %2596 = vmatpush1.msra.mxu0 0.0
    %2597 = vmatprep.subr.mxu0 0.0
    %2598 = vmatpush1.msra.mxu0 0.0
    %2599 = vmatprep.subr.mxu0 0.0
    %2600 = vmatpush1.msra.mxu0 0.0
    %2601 = vmatprep.subr.mxu0 0.0
    %2602 = vmatpush1.msra.mxu0 0.0
    %2603 = vmatprep.subr.mxu0 0.0
    %2604 = vmatpush1.msra.mxu0 0.0
    %2605 = vmatprep.subr.mxu0 0.0
    %2606 = vmatpush1.msra.mxu0 0.0
    %2607 = vmatprep.subr.mxu0 0.0
    %2608 = vmatpush1.msra.mxu0 0.0
    %2609 = vmatprep.subr.mxu0 0.0
    %2610 = vmatpush1.msra.mxu0 0.0
    %2611 = vmatprep.subr.mxu0 0.0
    %2612 = vmatpush1.msra.mxu0 0.0
    %2613 = vmatprep.subr.mxu0 0.0
    %2614 = vmatpush1.msra.mxu0 0.0
    %2615 = vmatprep.subr.mxu0 0.0
    %2616 = vmatpush1.msra.mxu0 0.0
    %2617 = vmatprep.subr.mxu0 0.0
    %2618 = vmatpush1.msra.mxu0 0.0
    %2619 = vmatprep.subr.mxu0 0.0
    %2620 = vmatpush1.msra.mxu0 0.0
    %2621 = vmatprep.subr.mxu0 0.0
    %2622 = vmatpush1.msra.mxu0 0.0
    %2623 = vmatprep.mubr.f32.mxu0 0.0
    %2624 = vmatmul.mubr.f32.gmra.mrb[0].mxu0 %v2557
    %v2625 = vpop.f32.mrb[0].mxu0
    %v2626 = vadd.f32 0.0, %v2625
    %v2627 = vpop.f32.mrb[0].mxu0
    %v2628 = vadd.f32 0.0, %v2627
    %2629 = vdwg.mxu0
    %2630 = vmatprep.subr.mxu0 %v1912
    %2631 = vmatpush1.msra.mxu0 %v1911
    %2632 = vmatprep.subr.mxu0 %v1916
    %2633 = vmatpush1.msra.mxu0 %v1915
    %2634 = vmatprep.subr.mxu0 %v1920
    %2635 = vmatpush1.msra.mxu0 %v1919
    %2636 = vmatprep.subr.mxu0 %v1924
    %2637 = vmatpush1.msra.mxu0 %v1923
    %2638 = vmatprep.subr.mxu0 %v1928
    %2639 = vmatpush1.msra.mxu0 %v1927
    %2640 = vmatprep.subr.mxu0 %v1932
    %2641 = vmatpush1.msra.mxu0 %v1931
    %2642 = vmatprep.subr.mxu0 %v1936
    %2643 = vmatpush1.msra.mxu0 %v1935
    %2644 = vmatprep.subr.mxu0 %v1940
    %2645 = vmatpush1.msra.mxu0 %v1939
    %2646 = vmatprep.subr.mxu0 %v1944
    %2647 = vmatpush1.msra.mxu0 %v1943
    %2648 = vmatprep.subr.mxu0 %v1948
    %2649 = vmatpush1.msra.mxu0 %v1947
    %2650 = vmatprep.subr.mxu0 %v1952
    %2651 = vmatpush1.msra.mxu0 %v1951
    %2652 = vmatprep.subr.mxu0 %v1956
    %2653 = vmatpush1.msra.mxu0 %v1955
    %2654 = vmatprep.subr.mxu0 %v1960
    %2655 = vmatpush1.msra.mxu0 %v1959
    %2656 = vmatprep.subr.mxu0 %v1964
    %2657 = vmatpush1.msra.mxu0 %v1963
    %2658 = vmatprep.subr.mxu0 %v1968
    %2659 = vmatpush1.msra.mxu0 %v1967
    %2660 = vmatprep.subr.mxu0 %v1972
    %2661 = vmatpush1.msra.mxu0 %v1971
    %2662 = vmatprep.subr.mxu0 0.0
    %2663 = vmatpush1.msra.mxu0 0.0
    %2664 = vmatprep.subr.mxu0 0.0
    %2665 = vmatpush1.msra.mxu0 0.0
    %2666 = vmatprep.subr.mxu0 0.0
    %2667 = vmatpush1.msra.mxu0 0.0
    %2668 = vmatprep.subr.mxu0 0.0
    %2669 = vmatpush1.msra.mxu0 0.0
    %2670 = vmatprep.subr.mxu0 0.0
    %2671 = vmatpush1.msra.mxu0 0.0
    %2672 = vmatprep.subr.mxu0 0.0
    %2673 = vmatpush1.msra.mxu0 0.0
    %2674 = vmatprep.subr.mxu0 0.0
    %2675 = vmatpush1.msra.mxu0 0.0
    %2676 = vmatprep.subr.mxu0 0.0
    %2677 = vmatpush1.msra.mxu0 0.0
    %2678 = vmatprep.subr.mxu0 0.0
    %2679 = vmatpush1.msra.mxu0 0.0
    %2680 = vmatprep.subr.mxu0 0.0
    %2681 = vmatpush1.msra.mxu0 0.0
    %2682 = vmatprep.subr.mxu0 0.0
    %2683 = vmatpush1.msra.mxu0 0.0
    %2684 = vmatprep.subr.mxu0 0.0
    %2685 = vmatpush1.msra.mxu0 0.0
    %2686 = vmatprep.subr.mxu0 0.0
    %2687 = vmatpush1.msra.mxu0 0.0
    %2688 = vmatprep.subr.mxu0 0.0
    %2689 = vmatpush1.msra.mxu0 0.0
    %2690 = vmatprep.subr.mxu0 0.0
    %2691 = vmatpush1.msra.mxu0 0.0
    %2692 = vmatprep.subr.mxu0 0.0
    %2693 = vmatpush1.msra.mxu0 0.0
    %2694 = vmatprep.mubr.f32.mxu0 0.0
    %2695 = vmatmul.mubr.f32.gmra.mrb[0].mxu0 %v2557
    %v2696 = vpop.f32.mrb[0].mxu0
    %v2697 = vadd.f32 0.0, %v2696
    %v2698 = vpop.f32.mrb[0].mxu0
    %v2699 = vadd.f32 0.0, %v2698
    %2700 = vdwg.mxu0
    %v2705 = vrot.slane %v2626, 4
    %v2706 = vrot.slane %v2628, 4
    %v2707 = vrot.slane %v2697, 4
    %v2708 = vrot.slane %v2699, 4
    %v2713 = vadd.f32 %v2126, %v2705
    %v2714 = vadd.f32 %v2128, %v2706
    %v2715 = vadd.f32 %v2197, %v2707
    %v2716 = vadd.f32 %v2199, %v2708
    %v2717 = vsub.f32 0.0, %v2713
    %v2718 = vmul.f32 %v2717, 1.442695
    %v2719 = vpow.pop %v2718
    %v2720 = vadd.f32 %v2719, 1.0
    %v2721 = vrcp.pop %v2720
    %v2722 = vmul.f32 1.0, %v2721
    %v2723 = vsub.f32 0.0, %v2714
    %v2724 = vmul.f32 %v2723, 1.442695
    %v2725 = vpow.pop %v2724
    %v2726 = vadd.f32 %v2725, 1.0
    %v2727 = vrcp.pop %v2726
    %v2728 = vmul.f32 1.0, %v2727
    %v2729 = vtanh.pop %v2715
    %v2730 = vsub.f32 0.0, %v2716
    %v2731 = vmul.f32 %v2730, 1.442695
    %v2732 = vpow.pop %v2731
    %v2733 = vadd.f32 %v2732, 1.0
    %v2734 = vrcp.pop %v2733
    %v2735 = vmul.f32 1.0, %v2734
    %v2737 = vrot.slane %v2553, 6
    %v2739 = vmul.f32 %v2728, %v2737
    %v2740 = vmul.f32 %v2722, %v2729
    %v2741 = vadd.f32 %v2739, %v2740
    %v2742 = vtanh.pop %v2741
    %v2743 = vmul.f32 %v2735, %v2742
    %v2745 = vrot.slane %v2743, 4
    %v2747 = vld [vmem:[#allocation26] sm:$0xff]
    %v2748 = vld [vmem:[#allocation26 + $0x8] sm:$0xff]
    %v2749 = vld [vmem:[#allocation26 + $0x10] sm:$0xff]
    %v2750 = vld [vmem:[#allocation26 + $0x18] sm:$0xff]
    %v2751 = vld [vmem:[#allocation26 + $0x20] sm:$0xff]
    %v2752 = vld [vmem:[#allocation26 + $0x28] sm:$0xff]
    %v2753 = vld [vmem:[#allocation26 + $0x30] sm:$0xff]
    %v2754 = vld [vmem:[#allocation26 + $0x38] sm:$0xff]
    %v2755 = vld [vmem:[#allocation26 + $0x40] sm:$0xff]
    %v2756 = vld [vmem:[#allocation26 + $0x48] sm:$0xff]
    %v2757 = vld [vmem:[#allocation26 + $0x50] sm:$0xff]
    %v2758 = vld [vmem:[#allocation26 + $0x58] sm:$0xff]
    %v2759 = vld [vmem:[#allocation26 + $0x60] sm:$0xff]
    %v2760 = vld [vmem:[#allocation26 + $0x68] sm:$0xff]
    %v2761 = vld [vmem:[#allocation26 + $0x70] sm:$0xff]
    %v2762 = vld [vmem:[#allocation26 + $0x78] sm:$0xff]
    %v2763 = vld [vmem:[#allocation26 + $0x80] sm:$0xff]
    %v2764 = vld [vmem:[#allocation26 + $0x88] sm:$0xff]
    %v2765 = vld [vmem:[#allocation26 + $0x90] sm:$0xff]
    %v2766 = vld [vmem:[#allocation26 + $0x98] sm:$0xff]
    %v2767 = vld [vmem:[#allocation26 + $0xa0] sm:$0xff]
    %v2768 = vld [vmem:[#allocation26 + $0xa8] sm:$0xff]
    %v2769 = vld [vmem:[#allocation26 + $0xb0] sm:$0xff]
    %v2770 = vld [vmem:[#allocation26 + $0xb8] sm:$0xff]
    %v2771 = vld [vmem:[#allocation26 + $0xc0] sm:$0xff]
    %v2772 = vld [vmem:[#allocation26 + $0xc8] sm:$0xff]
    %v2773 = vld [vmem:[#allocation26 + $0xd0] sm:$0xff]
    %v2774 = vld [vmem:[#allocation26 + $0xd8] sm:$0xff]
    %v2775 = vld [vmem:[#allocation26 + $0xe0] sm:$0xff]
    %v2776 = vld [vmem:[#allocation26 + $0xe8] sm:$0xff]
    %v2777 = vld [vmem:[#allocation26 + $0xf0] sm:$0xff]
    %v2778 = vld [vmem:[#allocation26 + $0xf8] sm:$0xff]
    %v2779 = vld [vmem:[#allocation26 + $0x100] sm:$0xff]
    %v2780 = vld [vmem:[#allocation26 + $0x108] sm:$0xff]
    %v2781 = vld [vmem:[#allocation26 + $0x110] sm:$0xff]
    %v2782 = vld [vmem:[#allocation26 + $0x118] sm:$0xff]
    %v2783 = vld [vmem:[#allocation26 + $0x120] sm:$0xff]
    %v2784 = vld [vmem:[#allocation26 + $0x128] sm:$0xff]
    %v2785 = vld [vmem:[#allocation26 + $0x130] sm:$0xff]
    %v2786 = vld [vmem:[#allocation26 + $0x138] sm:$0xff]
    %v2787 = vld [vmem:[#allocation26 + $0x140] sm:$0xff]
    %v2788 = vld [vmem:[#allocation26 + $0x148] sm:$0xff]
    %v2789 = vld [vmem:[#allocation26 + $0x150] sm:$0xff]
    %v2790 = vld [vmem:[#allocation26 + $0x158] sm:$0xff]
    %v2791 = vld [vmem:[#allocation26 + $0x160] sm:$0xff]
    %v2792 = vld [vmem:[#allocation26 + $0x168] sm:$0xff]
    %v2793 = vld [vmem:[#allocation26 + $0x170] sm:$0xff]
    %v2794 = vld [vmem:[#allocation26 + $0x178] sm:$0xff]
    %v2795 = vld [vmem:[#allocation26 + $0x180] sm:$0xff]
    %v2796 = vld [vmem:[#allocation26 + $0x188] sm:$0xff]
    %v2797 = vld [vmem:[#allocation26 + $0x190] sm:$0xff]
    %v2798 = vld [vmem:[#allocation26 + $0x198] sm:$0xff]
    %v2799 = vld [vmem:[#allocation26 + $0x1a0] sm:$0xff]
    %v2800 = vld [vmem:[#allocation26 + $0x1a8] sm:$0xff]
    %v2801 = vld [vmem:[#allocation26 + $0x1b0] sm:$0xff]
    %v2802 = vld [vmem:[#allocation26 + $0x1b8] sm:$0xff]
    %v2803 = vld [vmem:[#allocation26 + $0x1c0] sm:$0xff]
    %v2804 = vld [vmem:[#allocation26 + $0x1c8] sm:$0xff]
    %v2805 = vld [vmem:[#allocation26 + $0x1d0] sm:$0xff]
    %v2806 = vld [vmem:[#allocation26 + $0x1d8] sm:$0xff]
    %v2807 = vld [vmem:[#allocation26 + $0x1e0] sm:$0xff]
    %v2808 = vld [vmem:[#allocation26 + $0x1e8] sm:$0xff]
    %v2809 = vld [vmem:[#allocation26 + $0x1f0] sm:$0xff]
    %v2810 = vld [vmem:[#allocation26 + $0x1f8] sm:$0xff]
    %v2811 = vld [vmem:[#allocation26 + $0x200] sm:$0xff]
    %v2812 = vld [vmem:[#allocation26 + $0x208] sm:$0xff]
    %v2813 = vld [vmem:[#allocation26 + $0x210] sm:$0xff]
    %v2814 = vld [vmem:[#allocation26 + $0x218] sm:$0xff]
    %v2815 = vld [vmem:[#allocation26 + $0x220] sm:$0xff]
    %v2816 = vld [vmem:[#allocation26 + $0x228] sm:$0xff]
    %v2817 = vld [vmem:[#allocation26 + $0x230] sm:$0xff]
    %v2818 = vld [vmem:[#allocation26 + $0x238] sm:$0xff]
    %v2819 = vld [vmem:[#allocation26 + $0x240] sm:$0xff]
    %v2820 = vld [vmem:[#allocation26 + $0x248] sm:$0xff]
    %v2821 = vld [vmem:[#allocation26 + $0x250] sm:$0xff]
    %v2822 = vld [vmem:[#allocation26 + $0x258] sm:$0xff]
    %v2823 = vld [vmem:[#allocation26 + $0x260] sm:$0xff]
    %v2824 = vld [vmem:[#allocation26 + $0x268] sm:$0xff]
    %v2825 = vld [vmem:[#allocation26 + $0x270] sm:$0xff]
    %v2826 = vld [vmem:[#allocation26 + $0x278] sm:$0xff]
    %v2827 = vld [vmem:[#allocation26 + $0x280] sm:$0xff]
    %v2828 = vld [vmem:[#allocation26 + $0x288] sm:$0xff]
    %v2829 = vld [vmem:[#allocation26 + $0x290] sm:$0xff]
    %v2830 = vld [vmem:[#allocation26 + $0x298] sm:$0xff]
    %v2831 = vld [vmem:[#allocation26 + $0x2a0] sm:$0xff]
    %v2832 = vld [vmem:[#allocation26 + $0x2a8] sm:$0xff]
    %v2833 = vld [vmem:[#allocation26 + $0x2b0] sm:$0xff]
    %v2834 = vld [vmem:[#allocation26 + $0x2b8] sm:$0xff]
    %v2835 = vld [vmem:[#allocation26 + $0x2c0] sm:$0xff]
    %v2836 = vld [vmem:[#allocation26 + $0x2c8] sm:$0xff]
    %v2837 = vld [vmem:[#allocation26 + $0x2d0] sm:$0xff]
    %v2838 = vld [vmem:[#allocation26 + $0x2d8] sm:$0xff]
    %v2839 = vld [vmem:[#allocation26 + $0x2e0] sm:$0xff]
    %v2840 = vld [vmem:[#allocation26 + $0x2e8] sm:$0xff]
    %v2841 = vld [vmem:[#allocation26 + $0x2f0] sm:$0xff]
    %v2842 = vld [vmem:[#allocation26 + $0x2f8] sm:$0xff]
    %v2843 = vld [vmem:[#allocation26 + $0x300] sm:$0xff]
    %v2844 = vld [vmem:[#allocation26 + $0x308] sm:$0xff]
    %v2845 = vld [vmem:[#allocation26 + $0x310] sm:$0xff]
    %v2846 = vld [vmem:[#allocation26 + $0x318] sm:$0xff]
    %v2847 = vld [vmem:[#allocation26 + $0x320] sm:$0xff]
    %v2848 = vld [vmem:[#allocation26 + $0x328] sm:$0xff]
    %v2849 = vld [vmem:[#allocation26 + $0x330] sm:$0xff]
    %v2850 = vld [vmem:[#allocation26 + $0x338] sm:$0xff]
    %v2851 = vld [vmem:[#allocation26 + $0x340] sm:$0xff]
    %v2852 = vld [vmem:[#allocation26 + $0x348] sm:$0xff]
    %v2853 = vld [vmem:[#allocation26 + $0x350] sm:$0xff]
    %v2854 = vld [vmem:[#allocation26 + $0x358] sm:$0xff]
    %v2855 = vld [vmem:[#allocation26 + $0x360] sm:$0xff]
    %v2856 = vld [vmem:[#allocation26 + $0x368] sm:$0xff]
    %v2857 = vld [vmem:[#allocation26 + $0x370] sm:$0xff]
    %v2858 = vld [vmem:[#allocation26 + $0x378] sm:$0xff]
    %v2859 = vld [vmem:[#allocation26 + $0x380] sm:$0xff]
    %v2860 = vld [vmem:[#allocation26 + $0x388] sm:$0xff]
    %v2861 = vld [vmem:[#allocation26 + $0x390] sm:$0xff]
    %v2862 = vld [vmem:[#allocation26 + $0x398] sm:$0xff]
    %v2863 = vld [vmem:[#allocation26 + $0x3a0] sm:$0xff]
    %v2864 = vld [vmem:[#allocation26 + $0x3a8] sm:$0xff]
    %v2865 = vld [vmem:[#allocation26 + $0x3b0] sm:$0xff]
    %v2866 = vld [vmem:[#allocation26 + $0x3b8] sm:$0xff]
    %v2867 = vld [vmem:[#allocation26 + $0x3c0] sm:$0xff]
    %v2868 = vld [vmem:[#allocation26 + $0x3c8] sm:$0xff]
    %v2869 = vld [vmem:[#allocation26 + $0x3d0] sm:$0xff]
    %v2870 = vld [vmem:[#allocation26 + $0x3d8] sm:$0xff]
    %v2871 = vld [vmem:[#allocation26 + $0x3e0] sm:$0xff]
    %v2872 = vld [vmem:[#allocation26 + $0x3e8] sm:$0xff]
    %v2873 = vld [vmem:[#allocation26 + $0x3f0] sm:$0xff]
    %v2874 = vld [vmem:[#allocation26 + $0x3f8] sm:$0xff]
    %v2875 = vld [vmem:[#allocation26 + $0x400] sm:$0xff]
    %v2876 = vld [vmem:[#allocation26 + $0x408] sm:$0xff]
    %v2877 = vld [vmem:[#allocation26 + $0x410] sm:$0xff]
    %v2878 = vld [vmem:[#allocation26 + $0x418] sm:$0xff]
    %v2879 = vld [vmem:[#allocation26 + $0x420] sm:$0xff]
    %v2880 = vld [vmem:[#allocation26 + $0x428] sm:$0xff]
    %v2881 = vld [vmem:[#allocation26 + $0x430] sm:$0xff]
    %v2882 = vld [vmem:[#allocation26 + $0x438] sm:$0xff]
    %v2883 = vld [vmem:[#allocation26 + $0x440] sm:$0xff]
    %v2884 = vld [vmem:[#allocation26 + $0x448] sm:$0xff]
    %v2885 = vld [vmem:[#allocation26 + $0x450] sm:$0xff]
    %v2886 = vld [vmem:[#allocation26 + $0x458] sm:$0xff]
    %v2887 = vld [vmem:[#allocation26 + $0x460] sm:$0xff]
    %v2888 = vld [vmem:[#allocation26 + $0x468] sm:$0xff]
    %v2889 = vld [vmem:[#allocation26 + $0x470] sm:$0xff]
    %v2890 = vld [vmem:[#allocation26 + $0x478] sm:$0xff]
    %v2891 = vld [vmem:[%s53] sm:$0x7]
    %v2893 = vlaneseq
    %v2894 = vshrl.u32 %v2893, 7
    %v2895 = vsub.s32 0, %v2894
    %v2896 = vrot.slane %v2891, %v2895
    %v2897 = vlaneseq
    %v2898 = vshrl.u32 %v2897, 7
    %v2899 = vsub.s32 1, %v2898
    %v2900 = vrot.slane %v2891, %v2899
    %v2901 = vlaneseq
    %v2902 = vshrl.u32 %v2901, 7
    %v2903 = vsub.s32 2, %v2902
    %v2904 = vrot.slane %v2891, %v2903
    %2908 = vmatprep.subr.mxu0 %v2748
    %2909 = vmatpush1.msra.mxu0 %v2747
    %2910 = vmatprep.subr.mxu0 %v2751
    %2911 = vmatpush1.msra.mxu0 %v2750
    %2912 = vmatprep.subr.mxu0 %v2754
    %2913 = vmatpush1.msra.mxu0 %v2753
    %2914 = vmatprep.subr.mxu0 %v2757
    %2915 = vmatpush1.msra.mxu0 %v2756
    %2916 = vmatprep.subr.mxu0 %v2760
    %2917 = vmatpush1.msra.mxu0 %v2759
    %2918 = vmatprep.subr.mxu0 %v2763
    %2919 = vmatpush1.msra.mxu0 %v2762
    %2920 = vmatprep.subr.mxu0 %v2766
    %2921 = vmatpush1.msra.mxu0 %v2765
    %2922 = vmatprep.subr.mxu0 %v2769
    %2923 = vmatpush1.msra.mxu0 %v2768
    %2924 = vmatprep.subr.mxu0 %v2772
    %2925 = vmatpush1.msra.mxu0 %v2771
    %2926 = vmatprep.subr.mxu0 %v2775
    %2927 = vmatpush1.msra.mxu0 %v2774
    %2928 = vmatprep.subr.mxu0 %v2778
    %2929 = vmatpush1.msra.mxu0 %v2777
    %2930 = vmatprep.subr.mxu0 %v2781
    %2931 = vmatpush1.msra.mxu0 %v2780
    %2932 = vmatprep.subr.mxu0 %v2784
    %2933 = vmatpush1.msra.mxu0 %v2783
    %2934 = vmatprep.subr.mxu0 %v2787
    %2935 = vmatpush1.msra.mxu0 %v2786
    %2936 = vmatprep.subr.mxu0 %v2790
    %2937 = vmatpush1.msra.mxu0 %v2789
    %2938 = vmatprep.subr.mxu0 %v2793
    %2939 = vmatpush1.msra.mxu0 %v2792
    %2940 = vmatprep.subr.mxu0 %v2796
    %2941 = vmatpush1.msra.mxu0 %v2795
    %2942 = vmatprep.subr.mxu0 %v2799
    %2943 = vmatpush1.msra.mxu0 %v2798
    %2944 = vmatprep.subr.mxu0 %v2802
    %2945 = vmatpush1.msra.mxu0 %v2801
    %2946 = vmatprep.subr.mxu0 %v2805
    %2947 = vmatpush1.msra.mxu0 %v2804
    %2948 = vmatprep.subr.mxu0 %v2808
    %2949 = vmatpush1.msra.mxu0 %v2807
    %2950 = vmatprep.subr.mxu0 %v2811
    %2951 = vmatpush1.msra.mxu0 %v2810
    %2952 = vmatprep.subr.mxu0 %v2814
    %2953 = vmatpush1.msra.mxu0 %v2813
    %2954 = vmatprep.subr.mxu0 %v2817
    %2955 = vmatpush1.msra.mxu0 %v2816
    %2956 = vmatprep.subr.mxu0 %v2820
    %2957 = vmatpush1.msra.mxu0 %v2819
    %2958 = vmatprep.subr.mxu0 %v2823
    %2959 = vmatpush1.msra.mxu0 %v2822
    %2960 = vmatprep.subr.mxu0 %v2826
    %2961 = vmatpush1.msra.mxu0 %v2825
    %2962 = vmatprep.subr.mxu0 %v2829
    %2963 = vmatpush1.msra.mxu0 %v2828
    %2964 = vmatprep.subr.mxu0 %v2832
    %2965 = vmatpush1.msra.mxu0 %v2831
    %2966 = vmatprep.subr.mxu0 %v2835
    %2967 = vmatpush1.msra.mxu0 %v2834
    %2968 = vmatprep.subr.mxu0 %v2838
    %2969 = vmatpush1.msra.mxu0 %v2837
    %2970 = vmatprep.subr.mxu0 %v2841
    %2971 = vmatpush1.msra.mxu0 %v2840
    %2972 = vmatprep.mubr.f32.mxu0 %v2557
    %2973 = vmatmul.mubr.f32.gmra.mrb[0].mxu0 %v2370
    %v2974 = vpop.f32.mrb[0].mxu0
    %v2975 = vadd.f32 %v2896, %v2974
    %v2976 = vpop.f32.mrb[0].mxu0
    %v2977 = vadd.f32 %v2900, %v2976
    %2978 = vdwg.mxu0
    %2979 = vmatprep.subr.mxu0 %v2844
    %2980 = vmatpush1.msra.mxu0 %v2843
    %2981 = vmatprep.subr.mxu0 %v2847
    %2982 = vmatpush1.msra.mxu0 %v2846
    %2983 = vmatprep.subr.mxu0 %v2850
    %2984 = vmatpush1.msra.mxu0 %v2849
    %2985 = vmatprep.subr.mxu0 %v2853
    %2986 = vmatpush1.msra.mxu0 %v2852
    %2987 = vmatprep.subr.mxu0 %v2856
    %2988 = vmatpush1.msra.mxu0 %v2855
    %2989 = vmatprep.subr.mxu0 %v2859
    %2990 = vmatpush1.msra.mxu0 %v2858
    %2991 = vmatprep.subr.mxu0 %v2862
    %2992 = vmatpush1.msra.mxu0 %v2861
    %2993 = vmatprep.subr.mxu0 %v2865
    %2994 = vmatpush1.msra.mxu0 %v2864
    %2995 = vmatprep.subr.mxu0 %v2868
    %2996 = vmatpush1.msra.mxu0 %v2867
    %2997 = vmatprep.subr.mxu0 %v2871
    %2998 = vmatpush1.msra.mxu0 %v2870
    %2999 = vmatprep.subr.mxu0 %v2874
    %3000 = vmatpush1.msra.mxu0 %v2873
    %3001 = vmatprep.subr.mxu0 %v2877
    %3002 = vmatpush1.msra.mxu0 %v2876
    %3003 = vmatprep.subr.mxu0 %v2880
    %3004 = vmatpush1.msra.mxu0 %v2879
    %3005 = vmatprep.subr.mxu0 %v2883
    %3006 = vmatpush1.msra.mxu0 %v2882
    %3007 = vmatprep.subr.mxu0 %v2886
    %3008 = vmatpush1.msra.mxu0 %v2885
    %3009 = vmatprep.subr.mxu0 %v2889
    %3010 = vmatpush1.msra.mxu0 %v2888
    %3011 = vmatprep.subr.mxu0 0.0
    %3012 = vmatpush1.msra.mxu0 0.0
    %3013 = vmatprep.subr.mxu0 0.0
    %3014 = vmatpush1.msra.mxu0 0.0
    %3015 = vmatprep.subr.mxu0 0.0
    %3016 = vmatpush1.msra.mxu0 0.0
    %3017 = vmatprep.subr.mxu0 0.0
    %3018 = vmatpush1.msra.mxu0 0.0
    %3019 = vmatprep.subr.mxu0 0.0
    %3020 = vmatpush1.msra.mxu0 0.0
    %3021 = vmatprep.subr.mxu0 0.0
    %3022 = vmatpush1.msra.mxu0 0.0
    %3023 = vmatprep.subr.mxu0 0.0
    %3024 = vmatpush1.msra.mxu0 0.0
    %3025 = vmatprep.subr.mxu0 0.0
    %3026 = vmatpush1.msra.mxu0 0.0
    %3027 = vmatprep.subr.mxu0 0.0
    %3028 = vmatpush1.msra.mxu0 0.0
    %3029 = vmatprep.subr.mxu0 0.0
    %3030 = vmatpush1.msra.mxu0 0.0
    %3031 = vmatprep.subr.mxu0 0.0
    %3032 = vmatpush1.msra.mxu0 0.0
    %3033 = vmatprep.subr.mxu0 0.0
    %3034 = vmatpush1.msra.mxu0 0.0
    %3035 = vmatprep.subr.mxu0 0.0
    %3036 = vmatpush1.msra.mxu0 0.0
    %3037 = vmatprep.subr.mxu0 0.0
    %3038 = vmatpush1.msra.mxu0 0.0
    %3039 = vmatprep.subr.mxu0 0.0
    %3040 = vmatpush1.msra.mxu0 0.0
    %3041 = vmatprep.subr.mxu0 0.0
    %3042 = vmatpush1.msra.mxu0 0.0
    %3043 = vmatprep.mubr.f32.mxu0 0.0
    %3044 = vmatmul.mubr.f32.gmra.mrb[0].mxu0 %v2745
    %v3045 = vpop.f32.mrb[0].mxu0
    %v3046 = vadd.f32 %v2975, %v3045
    %v3047 = vpop.f32.mrb[0].mxu0
    %v3048 = vadd.f32 %v2977, %v3047
    %3049 = vdwg.mxu0
    %3050 = vmatprep.subr.mxu0 0.0
    %3051 = vmatpush1.msra.mxu0 %v2749
    %3052 = vmatprep.subr.mxu0 0.0
    %3053 = vmatpush1.msra.mxu0 %v2752
    %3054 = vmatprep.subr.mxu0 0.0
    %3055 = vmatpush1.msra.mxu0 %v2755
    %3056 = vmatprep.subr.mxu0 0.0
    %3057 = vmatpush1.msra.mxu0 %v2758
    %3058 = vmatprep.subr.mxu0 0.0
    %3059 = vmatpush1.msra.mxu0 %v2761
    %3060 = vmatprep.subr.mxu0 0.0
    %3061 = vmatpush1.msra.mxu0 %v2764
    %3062 = vmatprep.subr.mxu0 0.0
    %3063 = vmatpush1.msra.mxu0 %v2767
    %3064 = vmatprep.subr.mxu0 0.0
    %3065 = vmatpush1.msra.mxu0 %v2770
    %3066 = vmatprep.subr.mxu0 0.0
    %3067 = vmatpush1.msra.mxu0 %v2773
    %3068 = vmatprep.subr.mxu0 0.0
    %3069 = vmatpush1.msra.mxu0 %v2776
    %3070 = vmatprep.subr.mxu0 0.0
    %3071 = vmatpush1.msra.mxu0 %v2779
    %3072 = vmatprep.subr.mxu0 0.0
    %3073 = vmatpush1.msra.mxu0 %v2782
    %3074 = vmatprep.subr.mxu0 0.0
    %3075 = vmatpush1.msra.mxu0 %v2785
    %3076 = vmatprep.subr.mxu0 0.0
    %3077 = vmatpush1.msra.mxu0 %v2788
    %3078 = vmatprep.subr.mxu0 0.0
    %3079 = vmatpush1.msra.mxu0 %v2791
    %3080 = vmatprep.subr.mxu0 0.0
    %3081 = vmatpush1.msra.mxu0 %v2794
    %3082 = vmatprep.subr.mxu0 0.0
    %3083 = vmatpush1.msra.mxu0 %v2797
    %3084 = vmatprep.subr.mxu0 0.0
    %3085 = vmatpush1.msra.mxu0 %v2800
    %3086 = vmatprep.subr.mxu0 0.0
    %3087 = vmatpush1.msra.mxu0 %v2803
    %3088 = vmatprep.subr.mxu0 0.0
    %3089 = vmatpush1.msra.mxu0 %v2806
    %3090 = vmatprep.subr.mxu0 0.0
    %3091 = vmatpush1.msra.mxu0 %v2809
    %3092 = vmatprep.subr.mxu0 0.0
    %3093 = vmatpush1.msra.mxu0 %v2812
    %3094 = vmatprep.subr.mxu0 0.0
    %3095 = vmatpush1.msra.mxu0 %v2815
    %3096 = vmatprep.subr.mxu0 0.0
    %3097 = vmatpush1.msra.mxu0 %v2818
    %3098 = vmatprep.subr.mxu0 0.0
    %3099 = vmatpush1.msra.mxu0 %v2821
    %3100 = vmatprep.subr.mxu0 0.0
    %3101 = vmatpush1.msra.mxu0 %v2824
    %3102 = vmatprep.subr.mxu0 0.0
    %3103 = vmatpush1.msra.mxu0 %v2827
    %3104 = vmatprep.subr.mxu0 0.0
    %3105 = vmatpush1.msra.mxu0 %v2830
    %3106 = vmatprep.subr.mxu0 0.0
    %3107 = vmatpush1.msra.mxu0 %v2833
    %3108 = vmatprep.subr.mxu0 0.0
    %3109 = vmatpush1.msra.mxu0 %v2836
    %3110 = vmatprep.subr.mxu0 0.0
    %3111 = vmatpush1.msra.mxu0 %v2839
    %3112 = vmatprep.subr.mxu0 0.0
    %3113 = vmatpush1.msra.mxu0 %v2842
    %3114 = vmatprep.mubr.f32.mxu0 %v2557
    %3115 = vmatmul.mubr.f32.gmra.mrb[0].mxu0 %v2370
    %v3116 = vpop.f32.mrb[0].mxu0
    %v3117 = vadd.f32 %v2904, %v3116
    %v3118 = vpop.f32.mrb[0].mxu0
    %3119 = vdwg.mxu0
    %3120 = vmatprep.subr.mxu0 0.0
    %3121 = vmatpush1.msra.mxu0 %v2845
    %3122 = vmatprep.subr.mxu0 0.0
    %3123 = vmatpush1.msra.mxu0 %v2848
    %3124 = vmatprep.subr.mxu0 0.0
    %3125 = vmatpush1.msra.mxu0 %v2851
    %3126 = vmatprep.subr.mxu0 0.0
    %3127 = vmatpush1.msra.mxu0 %v2854
    %3128 = vmatprep.subr.mxu0 0.0
    %3129 = vmatpush1.msra.mxu0 %v2857
    %3130 = vmatprep.subr.mxu0 0.0
    %3131 = vmatpush1.msra.mxu0 %v2860
    %3132 = vmatprep.subr.mxu0 0.0
    %3133 = vmatpush1.msra.mxu0 %v2863
    %3134 = vmatprep.subr.mxu0 0.0
    %3135 = vmatpush1.msra.mxu0 %v2866
    %3136 = vmatprep.subr.mxu0 0.0
    %3137 = vmatpush1.msra.mxu0 %v2869
    %3138 = vmatprep.subr.mxu0 0.0
    %3139 = vmatpush1.msra.mxu0 %v2872
    %3140 = vmatprep.subr.mxu0 0.0
    %3141 = vmatpush1.msra.mxu0 %v2875
    %3142 = vmatprep.subr.mxu0 0.0
    %3143 = vmatpush1.msra.mxu0 %v2878
    %3144 = vmatprep.subr.mxu0 0.0
    %3145 = vmatpush1.msra.mxu0 %v2881
    %3146 = vmatprep.subr.mxu0 0.0
    %3147 = vmatpush1.msra.mxu0 %v2884
    %3148 = vmatprep.subr.mxu0 0.0
    %3149 = vmatpush1.msra.mxu0 %v2887
    %3150 = vmatprep.subr.mxu0 0.0
    %3151 = vmatpush1.msra.mxu0 %v2890
    %3152 = vmatprep.subr.mxu0 0.0
    %3153 = vmatpush1.msra.mxu0 0.0
    %3154 = vmatprep.subr.mxu0 0.0
    %3155 = vmatpush1.msra.mxu0 0.0
    %3156 = vmatprep.subr.mxu0 0.0
    %3157 = vmatpush1.msra.mxu0 0.0
    %3158 = vmatprep.subr.mxu0 0.0
    %3159 = vmatpush1.msra.mxu0 0.0
    %3160 = vmatprep.subr.mxu0 0.0
    %3161 = vmatpush1.msra.mxu0 0.0
    %3162 = vmatprep.subr.mxu0 0.0
    %3163 = vmatpush1.msra.mxu0 0.0
    %3164 = vmatprep.subr.mxu0 0.0
    %3165 = vmatpush1.msra.mxu0 0.0
    %3166 = vmatprep.subr.mxu0 0.0
    %3167 = vmatpush1.msra.mxu0 0.0
    %3168 = vmatprep.subr.mxu0 0.0
    %3169 = vmatpush1.msra.mxu0 0.0
    %3170 = vmatprep.subr.mxu0 0.0
    %3171 = vmatpush1.msra.mxu0 0.0
    %3172 = vmatprep.subr.mxu0 0.0
    %3173 = vmatpush1.msra.mxu0 0.0
    %3174 = vmatprep.subr.mxu0 0.0
    %3175 = vmatpush1.msra.mxu0 0.0
    %3176 = vmatprep.subr.mxu0 0.0
    %3177 = vmatpush1.msra.mxu0 0.0
    %3178 = vmatprep.subr.mxu0 0.0
    %3179 = vmatpush1.msra.mxu0 0.0
    %3180 = vmatprep.subr.mxu0 0.0
    %3181 = vmatpush1.msra.mxu0 0.0
    %3182 = vmatprep.subr.mxu0 0.0
    %3183 = vmatpush1.msra.mxu0 0.0
    %3184 = vmatprep.mubr.f32.mxu0 0.0
    %3185 = vmatmul.mubr.f32.gmra.mrb[0].mxu0 %v2745
    %v3186 = vpop.f32.mrb[0].mxu0
    %v3187 = vadd.f32 %v3117, %v3186
    %v3188 = vpop.f32.mrb[0].mxu0
    %3189 = vdwg.mxu0
    %v3190 = vmax.f32 %v3046, 0.0
    %v3191 = vmax.f32 %v3048, 0.0
    %v3192 = vmax.f32 %v3187, 0.0
    %v3193 = vld [vmem:[#allocation28] sm:$0xff]
    %v3194 = vld [vmem:[#allocation28 + $0x8] sm:$0xff]
    %v3195 = vld [vmem:[#allocation28 + $0x10] sm:$0xff]
    %v3196 = vld [vmem:[#allocation28 + $0x18] sm:$0xff]
    %v3197 = vld [vmem:[#allocation28 + $0x20] sm:$0xff]
    %v3198 = vld [vmem:[#allocation28 + $0x28] sm:$0xff]
    %v3199 = vld [vmem:[#allocation28 + $0x30] sm:$0xff]
    %v3200 = vld [vmem:[#allocation28 + $0x38] sm:$0xff]
    %v3201 = vld [vmem:[#allocation28 + $0x40] sm:$0xff]
    %v3202 = vld [vmem:[#allocation28 + $0x48] sm:$0xff]
    %v3203 = vld [vmem:[#allocation28 + $0x50] sm:$0xff]
    %v3204 = vld [vmem:[#allocation28 + $0x58] sm:$0xff]
    %v3205 = vld [vmem:[#allocation28 + $0x60] sm:$0xff]
    %v3206 = vld [vmem:[#allocation28 + $0x68] sm:$0xff]
    %v3207 = vld [vmem:[#allocation28 + $0x70] sm:$0xff]
    %v3208 = vld [vmem:[#allocation28 + $0x78] sm:$0xff]
    %v3209 = vld [vmem:[#allocation28 + $0x80] sm:$0xff]
    %v3210 = vld [vmem:[#allocation28 + $0x88] sm:$0xff]
    %v3211 = vld [vmem:[#allocation28 + $0x90] sm:$0xff]
    %v3212 = vld [vmem:[#allocation28 + $0x98] sm:$0xff]
    %v3213 = vld [vmem:[#allocation28 + $0xa0] sm:$0xff]
    %v3214 = vld [vmem:[#allocation28 + $0xa8] sm:$0xff]
    %v3215 = vld [vmem:[#allocation28 + $0xb0] sm:$0xff]
    %v3216 = vld [vmem:[#allocation28 + $0xb8] sm:$0xff]
    %v3217 = vld [vmem:[#allocation28 + $0xc0] sm:$0xff]
    %v3218 = vld [vmem:[#allocation28 + $0xc8] sm:$0xff]
    %v3219 = vld [vmem:[#allocation28 + $0xd0] sm:$0xff]
    %v3220 = vld [vmem:[#allocation28 + $0xd8] sm:$0xff]
    %v3221 = vld [vmem:[#allocation28 + $0xe0] sm:$0xff]
    %v3222 = vld [vmem:[#allocation28 + $0xe8] sm:$0xff]
    %v3223 = vld [vmem:[#allocation28 + $0xf0] sm:$0xff]
    %v3224 = vld [vmem:[#allocation28 + $0xf8] sm:$0xff]
    %v3225 = vld [vmem:[#allocation28 + $0x100] sm:$0xff]
    %v3226 = vld [vmem:[#allocation28 + $0x108] sm:$0xff]
    %v3227 = vld [vmem:[#allocation28 + $0x110] sm:$0xff]
    %v3228 = vld [vmem:[#allocation28 + $0x118] sm:$0xff]
    %v3229 = vld [vmem:[#allocation28 + $0x120] sm:$0xff]
    %v3230 = vld [vmem:[#allocation28 + $0x128] sm:$0xff]
    %v3231 = vld [vmem:[#allocation28 + $0x130] sm:$0xff]
    %v3232 = vld [vmem:[#allocation28 + $0x138] sm:$0xff]
    %v3233 = vld [vmem:[#allocation28 + $0x140] sm:$0xff]
    %v3234 = vld [vmem:[#allocation28 + $0x148] sm:$0xff]
    %v3235 = vld [vmem:[#allocation28 + $0x150] sm:$0xff]
    %v3236 = vld [vmem:[#allocation28 + $0x158] sm:$0xff]
    %v3237 = vld [vmem:[#allocation28 + $0x160] sm:$0xff]
    %v3238 = vld [vmem:[#allocation28 + $0x168] sm:$0xff]
    %v3239 = vld [vmem:[#allocation28 + $0x170] sm:$0xff]
    %v3240 = vld [vmem:[#allocation28 + $0x178] sm:$0xff]
    %v3241 = vld [vmem:[#allocation28 + $0x180] sm:$0xff]
    %v3242 = vld [vmem:[#allocation28 + $0x188] sm:$0xff]
    %v3243 = vld [vmem:[#allocation28 + $0x190] sm:$0xff]
    %v3244 = vld [vmem:[#allocation28 + $0x198] sm:$0xff]
    %v3245 = vld [vmem:[#allocation28 + $0x1a0] sm:$0xff]
    %v3246 = vld [vmem:[#allocation28 + $0x1a8] sm:$0xff]
    %v3247 = vld [vmem:[#allocation28 + $0x1b0] sm:$0xff]
    %v3248 = vld [vmem:[#allocation28 + $0x1b8] sm:$0xff]
    %v3249 = vld [vmem:[#allocation28 + $0x1c0] sm:$0xff]
    %v3250 = vld [vmem:[#allocation28 + $0x1c8] sm:$0xff]
    %v3251 = vld [vmem:[#allocation28 + $0x1d0] sm:$0xff]
    %v3252 = vld [vmem:[#allocation28 + $0x1d8] sm:$0xff]
    %v3253 = vld [vmem:[#allocation28 + $0x1e0] sm:$0xff]
    %v3254 = vld [vmem:[#allocation28 + $0x1e8] sm:$0xff]
    %v3255 = vld [vmem:[#allocation28 + $0x1f0] sm:$0xff]
    %v3256 = vld [vmem:[#allocation28 + $0x1f8] sm:$0xff]
    %v3257 = vld [vmem:[#allocation28 + $0x200] sm:$0xff]
    %v3258 = vld [vmem:[#allocation28 + $0x208] sm:$0xff]
    %v3259 = vld [vmem:[#allocation28 + $0x210] sm:$0xff]
    %v3260 = vld [vmem:[#allocation28 + $0x218] sm:$0xff]
    %v3261 = vld [vmem:[#allocation28 + $0x220] sm:$0xff]
    %v3262 = vld [vmem:[#allocation28 + $0x228] sm:$0xff]
    %v3263 = vld [vmem:[#allocation28 + $0x230] sm:$0xff]
    %v3264 = vld [vmem:[#allocation28 + $0x238] sm:$0xff]
    %v3265 = vld [vmem:[#allocation28 + $0x240] sm:$0xff]
    %v3266 = vld [vmem:[#allocation28 + $0x248] sm:$0xff]
    %v3267 = vld [vmem:[#allocation28 + $0x250] sm:$0xff]
    %v3268 = vld [vmem:[#allocation28 + $0x258] sm:$0xff]
    %v3269 = vld [vmem:[#allocation28 + $0x260] sm:$0xff]
    %v3270 = vld [vmem:[#allocation28 + $0x268] sm:$0xff]
    %v3271 = vld [vmem:[#allocation28 + $0x270] sm:$0xff]
    %v3272 = vld [vmem:[#allocation28 + $0x278] sm:$0xff]
    %v3273 = vld [vmem:[#allocation28 + $0x280] sm:$0xff]
    %v3274 = vld [vmem:[#allocation28 + $0x288] sm:$0xff]
    %v3275 = vld [vmem:[#allocation28 + $0x290] sm:$0xff]
    %v3276 = vld [vmem:[#allocation28 + $0x298] sm:$0xff]
    %v3277 = vld [vmem:[#allocation28 + $0x2a0] sm:$0xff]
    %v3278 = vld [vmem:[#allocation28 + $0x2a8] sm:$0xff]
    %v3279 = vld [vmem:[#allocation28 + $0x2b0] sm:$0xff]
    %v3280 = vld [vmem:[#allocation28 + $0x2b8] sm:$0xff]
    %v3281 = vld [vmem:[#allocation28 + $0x2c0] sm:$0xff]
    %v3282 = vld [vmem:[#allocation28 + $0x2c8] sm:$0xff]
    %v3283 = vld [vmem:[#allocation28 + $0x2d0] sm:$0xff]
    %v3284 = vld [vmem:[#allocation28 + $0x2d8] sm:$0xff]
    %v3285 = vld [vmem:[#allocation28 + $0x2e0] sm:$0xff]
    %v3286 = vld [vmem:[#allocation28 + $0x2e8] sm:$0xff]
    %v3287 = vld [vmem:[#allocation28 + $0x2f0] sm:$0xff]
    %v3288 = vld [vmem:[#allocation28 + $0x2f8] sm:$0xff]
    %v3289 = vld [vmem:[#allocation28 + $0x300] sm:$0xff]
    %v3290 = vld [vmem:[#allocation28 + $0x308] sm:$0xff]
    %v3291 = vld [vmem:[#allocation28 + $0x310] sm:$0xff]
    %v3292 = vld [vmem:[#allocation28 + $0x318] sm:$0xff]
    %v3293 = vld [vmem:[#allocation28 + $0x320] sm:$0xff]
    %v3294 = vld [vmem:[#allocation28 + $0x328] sm:$0xff]
    %v3295 = vld [vmem:[#allocation28 + $0x330] sm:$0xff]
    %v3296 = vld [vmem:[#allocation28 + $0x338] sm:$0xff]
    %v3297 = vld [vmem:[#allocation28 + $0x340] sm:$0xff]
    %v3298 = vld [vmem:[#allocation28 + $0x348] sm:$0xff]
    %v3299 = vld [vmem:[#allocation28 + $0x350] sm:$0xff]
    %v3300 = vld [vmem:[#allocation28 + $0x358] sm:$0xff]
    %v3301 = vld [vmem:[#allocation28 + $0x360] sm:$0xff]
    %v3302 = vld [vmem:[#allocation28 + $0x368] sm:$0xff]
    %v3303 = vld [vmem:[#allocation28 + $0x370] sm:$0xff]
    %v3304 = vld [vmem:[#allocation28 + $0x378] sm:$0xff]
    %v3305 = vld [vmem:[#allocation28 + $0x380] sm:$0xff]
    %v3306 = vld [vmem:[#allocation28 + $0x388] sm:$0xff]
    %v3307 = vld [vmem:[#allocation28 + $0x390] sm:$0xff]
    %v3308 = vld [vmem:[#allocation28 + $0x398] sm:$0xff]
    %v3309 = vld [vmem:[#allocation28 + $0x3a0] sm:$0xff]
    %v3310 = vld [vmem:[#allocation28 + $0x3a8] sm:$0xff]
    %v3311 = vld [vmem:[#allocation28 + $0x3b0] sm:$0xff]
    %v3312 = vld [vmem:[#allocation28 + $0x3b8] sm:$0xff]
    %v3313 = vld [vmem:[#allocation28 + $0x3c0] sm:$0xff]
    %v3314 = vld [vmem:[#allocation28 + $0x3c8] sm:$0xff]
    %v3315 = vld [vmem:[#allocation28 + $0x3d0] sm:$0xff]
    %v3316 = vld [vmem:[#allocation28 + $0x3d8] sm:$0xff]
    %v3317 = vld [vmem:[#allocation28 + $0x3e0] sm:$0xff]
    %v3318 = vld [vmem:[#allocation28 + $0x3e8] sm:$0xff]
    %v3319 = vld [vmem:[#allocation28 + $0x3f0] sm:$0xff]
    %v3320 = vld [vmem:[#allocation28 + $0x3f8] sm:$0xff]
    %v3321 = vld [vmem:[#allocation28 + $0x400] sm:$0xff]
    %v3322 = vld [vmem:[#allocation28 + $0x408] sm:$0xff]
    %v3323 = vld [vmem:[#allocation28 + $0x410] sm:$0xff]
    %v3324 = vld [vmem:[#allocation28 + $0x418] sm:$0xff]
    %v3325 = vld [vmem:[#allocation28 + $0x420] sm:$0xff]
    %v3326 = vld [vmem:[#allocation28 + $0x428] sm:$0xff]
    %v3327 = vld [vmem:[#allocation28 + $0x430] sm:$0xff]
    %v3328 = vld [vmem:[#allocation28 + $0x438] sm:$0xff]
    %v3329 = vld [vmem:[#allocation28 + $0x440] sm:$0xff]
    %v3330 = vld [vmem:[#allocation28 + $0x448] sm:$0xff]
    %v3331 = vld [vmem:[#allocation28 + $0x450] sm:$0xff]
    %v3332 = vld [vmem:[#allocation28 + $0x458] sm:$0xff]
    %v3333 = vld [vmem:[#allocation28 + $0x460] sm:$0xff]
    %v3334 = vld [vmem:[#allocation28 + $0x468] sm:$0xff]
    %v3335 = vld [vmem:[#allocation28 + $0x470] sm:$0xff]
    %v3336 = vld [vmem:[#allocation28 + $0x478] sm:$0xff]
    %v3337 = vld [vmem:[%s57] sm:$0x7]
    %v3339 = vlaneseq
    %v3340 = vshrl.u32 %v3339, 7
    %v3341 = vsub.s32 0, %v3340
    %v3342 = vrot.slane %v3337, %v3341
    %v3343 = vlaneseq
    %v3344 = vshrl.u32 %v3343, 7
    %v3345 = vsub.s32 1, %v3344
    %v3346 = vrot.slane %v3337, %v3345
    %v3347 = vlaneseq
    %v3348 = vshrl.u32 %v3347, 7
    %v3349 = vsub.s32 2, %v3348
    %v3350 = vrot.slane %v3337, %v3349
    %3354 = vmatprep.subr.mxu0 %v3194
    %3355 = vmatpush1.msra.mxu0 %v3193
    %3356 = vmatprep.subr.mxu0 %v3197
    %3357 = vmatpush1.msra.mxu0 %v3196
    %3358 = vmatprep.subr.mxu0 %v3200
    %3359 = vmatpush1.msra.mxu0 %v3199
    %3360 = vmatprep.subr.mxu0 %v3203
    %3361 = vmatpush1.msra.mxu0 %v3202
    %3362 = vmatprep.subr.mxu0 %v3206
    %3363 = vmatpush1.msra.mxu0 %v3205
    %3364 = vmatprep.subr.mxu0 %v3209
    %3365 = vmatpush1.msra.mxu0 %v3208
    %3366 = vmatprep.subr.mxu0 %v3212
    %3367 = vmatpush1.msra.mxu0 %v3211
    %3368 = vmatprep.subr.mxu0 %v3215
    %3369 = vmatpush1.msra.mxu0 %v3214
    %3370 = vmatprep.subr.mxu0 %v3218
    %3371 = vmatpush1.msra.mxu0 %v3217
    %3372 = vmatprep.subr.mxu0 %v3221
    %3373 = vmatpush1.msra.mxu0 %v3220
    %3374 = vmatprep.subr.mxu0 %v3224
    %3375 = vmatpush1.msra.mxu0 %v3223
    %3376 = vmatprep.subr.mxu0 %v3227
    %3377 = vmatpush1.msra.mxu0 %v3226
    %3378 = vmatprep.subr.mxu0 %v3230
    %3379 = vmatpush1.msra.mxu0 %v3229
    %3380 = vmatprep.subr.mxu0 %v3233
    %3381 = vmatpush1.msra.mxu0 %v3232
    %3382 = vmatprep.subr.mxu0 %v3236
    %3383 = vmatpush1.msra.mxu0 %v3235
    %3384 = vmatprep.subr.mxu0 %v3239
    %3385 = vmatpush1.msra.mxu0 %v3238
    %3386 = vmatprep.subr.mxu0 %v3242
    %3387 = vmatpush1.msra.mxu0 %v3241
    %3388 = vmatprep.subr.mxu0 %v3245
    %3389 = vmatpush1.msra.mxu0 %v3244
    %3390 = vmatprep.subr.mxu0 %v3248
    %3391 = vmatpush1.msra.mxu0 %v3247
    %3392 = vmatprep.subr.mxu0 %v3251
    %3393 = vmatpush1.msra.mxu0 %v3250
    %3394 = vmatprep.subr.mxu0 %v3254
    %3395 = vmatpush1.msra.mxu0 %v3253
    %3396 = vmatprep.subr.mxu0 %v3257
    %3397 = vmatpush1.msra.mxu0 %v3256
    %3398 = vmatprep.subr.mxu0 %v3260
    %3399 = vmatpush1.msra.mxu0 %v3259
    %3400 = vmatprep.subr.mxu0 %v3263
    %3401 = vmatpush1.msra.mxu0 %v3262
    %3402 = vmatprep.subr.mxu0 %v3266
    %3403 = vmatpush1.msra.mxu0 %v3265
    %3404 = vmatprep.subr.mxu0 %v3269
    %3405 = vmatpush1.msra.mxu0 %v3268
    %3406 = vmatprep.subr.mxu0 %v3272
    %3407 = vmatpush1.msra.mxu0 %v3271
    %3408 = vmatprep.subr.mxu0 %v3275
    %3409 = vmatpush1.msra.mxu0 %v3274
    %3410 = vmatprep.subr.mxu0 %v3278
    %3411 = vmatpush1.msra.mxu0 %v3277
    %3412 = vmatprep.subr.mxu0 %v3281
    %3413 = vmatpush1.msra.mxu0 %v3280
    %3414 = vmatprep.subr.mxu0 %v3284
    %3415 = vmatpush1.msra.mxu0 %v3283
    %3416 = vmatprep.subr.mxu0 %v3287
    %3417 = vmatpush1.msra.mxu0 %v3286
    %3418 = vmatprep.mubr.f32.mxu0 %v3191
    %3419 = vmatmul.mubr.f32.gmra.mrb[0].mxu0 %v3190
    %v3420 = vpop.f32.mrb[0].mxu0
    %v3421 = vadd.f32 %v3342, %v3420
    %v3422 = vpop.f32.mrb[0].mxu0
    %v3423 = vadd.f32 %v3346, %v3422
    %3424 = vdwg.mxu0
    %3425 = vmatprep.subr.mxu0 %v3290
    %3426 = vmatpush1.msra.mxu0 %v3289
    %3427 = vmatprep.subr.mxu0 %v3293
    %3428 = vmatpush1.msra.mxu0 %v3292
    %3429 = vmatprep.subr.mxu0 %v3296
    %3430 = vmatpush1.msra.mxu0 %v3295
    %3431 = vmatprep.subr.mxu0 %v3299
    %3432 = vmatpush1.msra.mxu0 %v3298
    %3433 = vmatprep.subr.mxu0 %v3302
    %3434 = vmatpush1.msra.mxu0 %v3301
    %3435 = vmatprep.subr.mxu0 %v3305
    %3436 = vmatpush1.msra.mxu0 %v3304
    %3437 = vmatprep.subr.mxu0 %v3308
    %3438 = vmatpush1.msra.mxu0 %v3307
    %3439 = vmatprep.subr.mxu0 %v3311
    %3440 = vmatpush1.msra.mxu0 %v3310
    %3441 = vmatprep.subr.mxu0 %v3314
    %3442 = vmatpush1.msra.mxu0 %v3313
    %3443 = vmatprep.subr.mxu0 %v3317
    %3444 = vmatpush1.msra.mxu0 %v3316
    %3445 = vmatprep.subr.mxu0 %v3320
    %3446 = vmatpush1.msra.mxu0 %v3319
    %3447 = vmatprep.subr.mxu0 %v3323
    %3448 = vmatpush1.msra.mxu0 %v3322
    %3449 = vmatprep.subr.mxu0 %v3326
    %3450 = vmatpush1.msra.mxu0 %v3325
    %3451 = vmatprep.subr.mxu0 %v3329
    %3452 = vmatpush1.msra.mxu0 %v3328
    %3453 = vmatprep.subr.mxu0 %v3332
    %3454 = vmatpush1.msra.mxu0 %v3331
    %3455 = vmatprep.subr.mxu0 %v3335
    %3456 = vmatpush1.msra.mxu0 %v3334
    %3457 = vmatprep.subr.mxu0 0.0
    %3458 = vmatpush1.msra.mxu0 0.0
    %3459 = vmatprep.subr.mxu0 0.0
    %3460 = vmatpush1.msra.mxu0 0.0
    %3461 = vmatprep.subr.mxu0 0.0
    %3462 = vmatpush1.msra.mxu0 0.0
    %3463 = vmatprep.subr.mxu0 0.0
    %3464 = vmatpush1.msra.mxu0 0.0
    %3465 = vmatprep.subr.mxu0 0.0
    %3466 = vmatpush1.msra.mxu0 0.0
    %3467 = vmatprep.subr.mxu0 0.0
    %3468 = vmatpush1.msra.mxu0 0.0
    %3469 = vmatprep.subr.mxu0 0.0
    %3470 = vmatpush1.msra.mxu0 0.0
    %3471 = vmatprep.subr.mxu0 0.0
    %3472 = vmatpush1.msra.mxu0 0.0
    %3473 = vmatprep.subr.mxu0 0.0
    %3474 = vmatpush1.msra.mxu0 0.0
    %3475 = vmatprep.subr.mxu0 0.0
    %3476 = vmatpush1.msra.mxu0 0.0
    %3477 = vmatprep.subr.mxu0 0.0
    %3478 = vmatpush1.msra.mxu0 0.0
    %3479 = vmatprep.subr.mxu0 0.0
    %3480 = vmatpush1.msra.mxu0 0.0
    %3481 = vmatprep.subr.mxu0 0.0
    %3482 = vmatpush1.msra.mxu0 0.0
    %3483 = vmatprep.subr.mxu0 0.0
    %3484 = vmatpush1.msra.mxu0 0.0
    %3485 = vmatprep.subr.mxu0 0.0
    %3486 = vmatpush1.msra.mxu0 0.0
    %3487 = vmatprep.subr.mxu0 0.0
    %3488 = vmatpush1.msra.mxu0 0.0
    %3489 = vmatprep.mubr.f32.mxu0 0.0
    %3490 = vmatmul.mubr.f32.gmra.mrb[0].mxu0 %v3192
    %v3491 = vpop.f32.mrb[0].mxu0
    %v3492 = vadd.f32 %v3421, %v3491
    %v3493 = vpop.f32.mrb[0].mxu0
    %v3494 = vadd.f32 %v3423, %v3493
    %3495 = vdwg.mxu0
    %3496 = vmatprep.subr.mxu0 0.0
    %3497 = vmatpush1.msra.mxu0 %v3195
    %3498 = vmatprep.subr.mxu0 0.0
    %3499 = vmatpush1.msra.mxu0 %v3198
    %3500 = vmatprep.subr.mxu0 0.0
    %3501 = vmatpush1.msra.mxu0 %v3201
    %3502 = vmatprep.subr.mxu0 0.0
    %3503 = vmatpush1.msra.mxu0 %v3204
    %3504 = vmatprep.subr.mxu0 0.0
    %3505 = vmatpush1.msra.mxu0 %v3207
    %3506 = vmatprep.subr.mxu0 0.0
    %3507 = vmatpush1.msra.mxu0 %v3210
    %3508 = vmatprep.subr.mxu0 0.0
    %3509 = vmatpush1.msra.mxu0 %v3213
    %3510 = vmatprep.subr.mxu0 0.0
    %3511 = vmatpush1.msra.mxu0 %v3216
    %3512 = vmatprep.subr.mxu0 0.0
    %3513 = vmatpush1.msra.mxu0 %v3219
    %3514 = vmatprep.subr.mxu0 0.0
    %3515 = vmatpush1.msra.mxu0 %v3222
    %3516 = vmatprep.subr.mxu0 0.0
    %3517 = vmatpush1.msra.mxu0 %v3225
    %3518 = vmatprep.subr.mxu0 0.0
    %3519 = vmatpush1.msra.mxu0 %v3228
    %3520 = vmatprep.subr.mxu0 0.0
    %3521 = vmatpush1.msra.mxu0 %v3231
    %3522 = vmatprep.subr.mxu0 0.0
    %3523 = vmatpush1.msra.mxu0 %v3234
    %3524 = vmatprep.subr.mxu0 0.0
    %3525 = vmatpush1.msra.mxu0 %v3237
    %3526 = vmatprep.subr.mxu0 0.0
    %3527 = vmatpush1.msra.mxu0 %v3240
    %3528 = vmatprep.subr.mxu0 0.0
    %3529 = vmatpush1.msra.mxu0 %v3243
    %3530 = vmatprep.subr.mxu0 0.0
    %3531 = vmatpush1.msra.mxu0 %v3246
    %3532 = vmatprep.subr.mxu0 0.0
    %3533 = vmatpush1.msra.mxu0 %v3249
    %3534 = vmatprep.subr.mxu0 0.0
    %3535 = vmatpush1.msra.mxu0 %v3252
    %3536 = vmatprep.subr.mxu0 0.0
    %3537 = vmatpush1.msra.mxu0 %v3255
    %3538 = vmatprep.subr.mxu0 0.0
    %3539 = vmatpush1.msra.mxu0 %v3258
    %3540 = vmatprep.subr.mxu0 0.0
    %3541 = vmatpush1.msra.mxu0 %v3261
    %3542 = vmatprep.subr.mxu0 0.0
    %3543 = vmatpush1.msra.mxu0 %v3264
    %3544 = vmatprep.subr.mxu0 0.0
    %3545 = vmatpush1.msra.mxu0 %v3267
    %3546 = vmatprep.subr.mxu0 0.0
    %3547 = vmatpush1.msra.mxu0 %v3270
    %3548 = vmatprep.subr.mxu0 0.0
    %3549 = vmatpush1.msra.mxu0 %v3273
    %3550 = vmatprep.subr.mxu0 0.0
    %3551 = vmatpush1.msra.mxu0 %v3276
    %3552 = vmatprep.subr.mxu0 0.0
    %3553 = vmatpush1.msra.mxu0 %v3279
    %3554 = vmatprep.subr.mxu0 0.0
    %3555 = vmatpush1.msra.mxu0 %v3282
    %3556 = vmatprep.subr.mxu0 0.0
    %3557 = vmatpush1.msra.mxu0 %v3285
    %3558 = vmatprep.subr.mxu0 0.0
    %3559 = vmatpush1.msra.mxu0 %v3288
    %3560 = vmatprep.mubr.f32.mxu0 %v3191
    %3561 = vmatmul.mubr.f32.gmra.mrb[0].mxu0 %v3190
    %v3562 = vpop.f32.mrb[0].mxu0
    %v3563 = vadd.f32 %v3350, %v3562
    %v3564 = vpop.f32.mrb[0].mxu0
    %3565 = vdwg.mxu0
    %3566 = vmatprep.subr.mxu0 0.0
    %3567 = vmatpush1.msra.mxu0 %v3291
    %3568 = vmatprep.subr.mxu0 0.0
    %3569 = vmatpush1.msra.mxu0 %v3294
    %3570 = vmatprep.subr.mxu0 0.0
    %3571 = vmatpush1.msra.mxu0 %v3297
    %3572 = vmatprep.subr.mxu0 0.0
    %3573 = vmatpush1.msra.mxu0 %v3300
    %3574 = vmatprep.subr.mxu0 0.0
    %3575 = vmatpush1.msra.mxu0 %v3303
    %3576 = vmatprep.subr.mxu0 0.0
    %3577 = vmatpush1.msra.mxu0 %v3306
    %3578 = vmatprep.subr.mxu0 0.0
    %3579 = vmatpush1.msra.mxu0 %v3309
    %3580 = vmatprep.subr.mxu0 0.0
    %3581 = vmatpush1.msra.mxu0 %v3312
    %3582 = vmatprep.subr.mxu0 0.0
    %3583 = vmatpush1.msra.mxu0 %v3315
    %3584 = vmatprep.subr.mxu0 0.0
    %3585 = vmatpush1.msra.mxu0 %v3318
    %3586 = vmatprep.subr.mxu0 0.0
    %3587 = vmatpush1.msra.mxu0 %v3321
    %3588 = vmatprep.subr.mxu0 0.0
    %3589 = vmatpush1.msra.mxu0 %v3324
    %3590 = vmatprep.subr.mxu0 0.0
    %3591 = vmatpush1.msra.mxu0 %v3327
    %3592 = vmatprep.subr.mxu0 0.0
    %3593 = vmatpush1.msra.mxu0 %v3330
    %3594 = vmatprep.subr.mxu0 0.0
    %3595 = vmatpush1.msra.mxu0 %v3333
    %3596 = vmatprep.subr.mxu0 0.0
    %3597 = vmatpush1.msra.mxu0 %v3336
    %3598 = vmatprep.subr.mxu0 0.0
    %3599 = vmatpush1.msra.mxu0 0.0
    %3600 = vmatprep.subr.mxu0 0.0
    %3601 = vmatpush1.msra.mxu0 0.0
    %3602 = vmatprep.subr.mxu0 0.0
    %3603 = vmatpush1.msra.mxu0 0.0
    %3604 = vmatprep.subr.mxu0 0.0
    %3605 = vmatpush1.msra.mxu0 0.0
    %3606 = vmatprep.subr.mxu0 0.0
    %3607 = vmatpush1.msra.mxu0 0.0
    %3608 = vmatprep.subr.mxu0 0.0
    %3609 = vmatpush1.msra.mxu0 0.0
    %3610 = vmatprep.subr.mxu0 0.0
    %3611 = vmatpush1.msra.mxu0 0.0
    %3612 = vmatprep.subr.mxu0 0.0
    %3613 = vmatpush1.msra.mxu0 0.0
    %3614 = vmatprep.subr.mxu0 0.0
    %3615 = vmatpush1.msra.mxu0 0.0
    %3616 = vmatprep.subr.mxu0 0.0
    %3617 = vmatpush1.msra.mxu0 0.0
    %3618 = vmatprep.subr.mxu0 0.0
    %3619 = vmatpush1.msra.mxu0 0.0
    %3620 = vmatprep.subr.mxu0 0.0
    %3621 = vmatpush1.msra.mxu0 0.0
    %3622 = vmatprep.subr.mxu0 0.0
    %3623 = vmatpush1.msra.mxu0 0.0
    %3624 = vmatprep.subr.mxu0 0.0
    %3625 = vmatpush1.msra.mxu0 0.0
    %3626 = vmatprep.subr.mxu0 0.0
    %3627 = vmatpush1.msra.mxu0 0.0
    %3628 = vmatprep.subr.mxu0 0.0
    %3629 = vmatpush1.msra.mxu0 0.0
    %3630 = vmatprep.mubr.f32.mxu0 0.0
    %3631 = vmatmul.mubr.f32.gmra.mrb[0].mxu0 %v3192
    %v3632 = vpop.f32.mrb[0].mxu0
    %v3633 = vadd.f32 %v3563, %v3632
    %v3634 = vpop.f32.mrb[0].mxu0
    %3635 = vdwg.mxu0
    %v3636 = vmax.f32 %v3492, 0.0
    %v3637 = vmax.f32 %v3494, 0.0
    %v3638 = vmax.f32 %v3633, 0.0
    %v3642 = vcombine.low %v3636, %v3637
    %v3644 = vunpack.c.l.s4 1983009808
    %v3645 = vunpack.c.0.s8 %v3644
    %v3646 = vlaneseq
    %v3647 = vshrl.u32 %v3646, 7
    %v3648 = vsub.s32 %v3645, %v3647
    %v3649 = vrot.slane %v3642, %v3648
    %v3651 = vunpack.c.l.s4 1983009808
    %v3652 = vunpack.c.0.s8 %v3651
    %v3653 = vlaneseq
    %v3654 = vshrl.u32 %v3653, 7
    %v3655 = vsub.s32 %v3652, %v3654
    %v3656 = vrot.slane %v3638, %v3655
    %v3657 = vcombine.low %v3649, %v3656
    %3659 = vst [vmem:[%s59] sm:$0x3f] %v3657
    // Predicated region
    $region186: #{forward.1} parent=1 // pred_check
      _
    $region187: #{forward.1} parent=1 // pred_check_branch
      %3661 = sbr.rel (0) target = $region189
    $region188: #{forward.1} parent=1 // pred_region
      _
    $region189: #{forward.1} parent=1 // pred_fallthru
      _
    // Predicated region
    $region190: #{forward.1} parent=1 // pred_check
      _
    $region191: #{forward.1} parent=1 // pred_check_branch
      %3663 = sbr.rel (0) target = $region193
    $region192: #{forward.1} parent=1 // pred_region
      _
    $region193: #{forward.1} parent=1 // pred_fallthru
      _
    %3664 = vsyncpa [#allocation4], 1
    %3665 = vsyncpa [#allocation6], 1
    %3666 = vsyncpa [#allocation9], 1
    %3667 = vsyncpa [#allocation12], 1
    %3668 = vsyncpa [#allocation15], 1
    %3669 = vsyncpa [#allocation18], 1
    %3670 = vsyncpa [#allocation21], 1
    %3671 = vsyncpa [#allocation24], 1
    %3672 = vsyncpa [#allocation27], 1

</llo_original>
